<compile_context>
chip_gen: v6e
topology: v6e:2x2x1
jax: 0.10.0
libtpu: 0.0.40
codegen_flags: <defaults>
</compile_context>

<pallas_src>
import math
import functools

import jax
import jax.numpy as jnp
from jax import lax
from jax.experimental import pallas as pl
from jax.experimental.pallas import tpu as pltpu


def _decoder_block_kernel(
    x_ref, enc_ref, tgt_mask_ref, src_mask_ref,
    sa_wq_ref, sa_wk_ref, sa_wv_ref, sa_wo_ref,
    ca_wq_ref, ca_wk_ref, ca_wv_ref, ca_wo_ref,
    w1_ref, b1_ref, w2_ref, b2_ref,
    ln1_a_ref, ln1_b_ref, ln2_a_ref, ln2_b_ref, ln3_a_ref, ln3_b_ref,
    o_ref,
    *, h, eps, bb, s_t, s_s):
    """One batch-block (bb batch elements, rows pre-flattened) per grid step.

    Block shapes seen by the kernel:
      x_ref            : (bb*s_t, D)     f32   (batch folded into GEMM M)
      enc_ref          : (bb*s_s, D)     f32
      tgt_mask_ref     : (bb, s_t, s_t)  int8
      src_mask_ref     : (bb, s_t, s_s)  int8
      attention weights: (D, D)          bf16  (W.T; Wq pre-scaled by 1/sqrt(d_k))
      w1_ref / w2_ref  : (D, d_ff) / (d_ff, D) bf16 (W.T)
      b1/b2, ln params : (1, d_ff) / (1, D) f32
      o_ref            : (bb*s_t, D)     f32
    """
    D = x_ref.shape[-1]
    d_k = D // h
    f32 = jnp.float32
    bf16 = jnp.bfloat16
    neg_inf = jnp.float32(-1e9)

    x = x_ref[...]                                   # (bb*s_t, D) f32
    enc = enc_ref[...]                               # (bb*s_s, D) f32

    # Hoisted int8 -> f32 mask casts: once per kernel call, not per head.
    tgt_mf = tgt_mask_ref[...].astype(f32)           # (bb, s_t, s_t)
    src_mf = src_mask_ref[...].astype(f32)           # (bb, s_t, s_s)

    def layer_norm(y, a_ref, b_ref):
        # Matches torch: alpha * (y - mean) / (std + eps) + bias, unbiased std.
        # Exact division here — approx reciprocal error would compound across
        # three norms and the residual stream.
        mean = jnp.mean(y, axis=-1, keepdims=True)
        c = y - mean
        var = jnp.sum(c * c, axis=-1, keepdims=True) * (1.0 / (D - 1))
        std = jnp.sqrt(var)
        return a_ref[...] * (c / (std + eps)) + b_ref[...]

    def mha(xq, xkv, mask_f, s_kv, wq_ref, wk_ref, wv_ref, wo_ref):
        # Full-width (M, D) x (D, D) projections on the MXU (bf16 operands,
        # f32 accumulation); Wq already carries the 1/sqrt(d_k) scale.
        xq_b = xq.astype(bf16)
        xkv_b = xkv.astype(bf16)
        q = jnp.dot(xq_b, wq_ref[...], preferred_element_type=f32)   # (bb*s_t, D)
        k = jnp.dot(xkv_b, wk_ref[...], preferred_element_type=f32)  # (bb*s_kv, D)
        v = jnp.dot(xkv_b, wv_ref[...], preferred_element_type=f32)

        # Per-(batch, head) attention on register values: no VMEM scratch,
        # no masked d_k-wide stores; head slabs are static slices of values.
        batch_outs = []
        for b in range(bb):
            qb = q[b * s_t:(b + 1) * s_t]            # (s_t, D) f32
            kb = k[b * s_kv:(b + 1) * s_kv]          # (s_kv, D) f32
            vb = v[b * s_kv:(b + 1) * s_kv]
            keep_b = mask_f[b] != 0.0                # hoisted out of head loop
            head_outs = []
            for hh in range(h):
                lo = hh * d_k
                qh = qb[:, lo:lo + d_k].astype(bf16)
                kh = kb[:, lo:lo + d_k].astype(bf16)
                vh = vb[:, lo:lo + d_k].astype(bf16)
                scores = lax.dot_general(            # Q @ K.T -> (s_t, s_kv)
                    qh, kh, (((1,), (1,)), ((), ())),
                    preferred_element_type=f32)
                # Exact masked_fill semantics (replace, not additive bias).
                scores = jnp.where(keep_b, scores, neg_inf)
                m = jnp.max(scores, axis=-1, keepdims=True)
                e = jnp.exp(scores - m)
                denom = jnp.sum(e, axis=-1, keepdims=True)
                p = e * pl.reciprocal(denom, approx=True)   # EUP reciprocal
                head_outs.append(jnp.dot(p.astype(bf16), vh,
                                         preferred_element_type=f32))
            batch_outs.append(jnp.concatenate(head_outs, axis=-1))   # (s_t, D)
        attn = jnp.concatenate(batch_outs, axis=0)                   # (bb*s_t, D)

        # ONE dense (M, D) x (D, D) output projection over concatenated heads.
        return jnp.dot(attn.astype(bf16), wo_ref[...],
                       preferred_element_type=f32)

    # Residual 1: self-attention (q = k = v = norm(x), tgt_mask).
    y = layer_norm(x, ln1_a_ref, ln1_b_ref)
    x = x + mha(y, y, tgt_mf, s_t, sa_wq_ref, sa_wk_ref, sa_wv_ref, sa_wo_ref)

    # Residual 2: cross-attention (q = norm(x), k = v = encoder output, src_mask).
    y = layer_norm(x, ln2_a_ref, ln2_b_ref)
    x = x + mha(y, enc, src_mf, s_s, ca_wq_ref, ca_wk_ref, ca_wv_ref, ca_wo_ref)

    # Residual 3: feed-forward (linear -> relu -> linear).
    y = layer_norm(x, ln3_a_ref, ln3_b_ref)
    f = jnp.dot(y.astype(bf16), w1_ref[...], preferred_element_type=f32) + b1_ref[...]
    f = jnp.maximum(f, 0.0)
    f = jnp.dot(f.astype(bf16), w2_ref[...], preferred_element_type=f32) + b2_ref[...]
    x = x + f

    o_ref[...] = x


def prepare_decoder_params(params, h):
    """One-time glue: W.T layout, bf16 casts, 1/sqrt(d_k) baked into Wq.

    Call once at parameter-load time so the transposes / casts are not
    re-executed as separate XLA ops (pure HBM traffic) on every forward call.
    """
    D = params["sa_wq"].shape[0]
    d_ff = params["ffn_w1"].shape[0]
    d_k = D // h
    scale = 1.0 / math.sqrt(d_k)
    f32, bf16 = jnp.float32, jnp.bfloat16
    prep = {
        "sa_wq": (params["sa_wq"].T * scale).astype(bf16),
        "sa_wk": params["sa_wk"].T.astype(bf16),
        "sa_wv": params["sa_wv"].T.astype(bf16),
        "sa_wo": params["sa_wo"].T.astype(bf16),
        "ca_wq": (params["ca_wq"].T * scale).astype(bf16),
        "ca_wk": params["ca_wk"].T.astype(bf16),
        "ca_wv": params["ca_wv"].T.astype(bf16),
        "ca_wo": params["ca_wo"].T.astype(bf16),
        "ffn_w1": params["ffn_w1"].T.astype(bf16),                 # (D, d_ff)
        "ffn_b1": params["ffn_b1"].reshape(1, d_ff).astype(f32),
        "ffn_w2": params["ffn_w2"].T.astype(bf16),                 # (d_ff, D)
        "ffn_b2": params["ffn_b2"].reshape(1, D).astype(f32),
        "ln1_a": params["ln1_a"].reshape(1, D).astype(f32),
        "ln1_b": params["ln1_b"].reshape(1, D).astype(f32),
        "ln2_a": params["ln2_a"].reshape(1, D).astype(f32),
        "ln2_b": params["ln2_b"].reshape(1, D).astype(f32),
        "ln3_a": params["ln3_a"].reshape(1, D).astype(f32),
        "ln3_b": params["ln3_b"].reshape(1, D).astype(f32),
    }
    return {k: jnp.asarray(v) for k, v in prep.items()}


def _pick_batch_block(batch, rows_per_elem, target_rows=256):
    """Largest divisor of `batch` whose folded row count stays <= target_rows."""
    best = 1
    for cand in range(1, batch + 1):
        if batch % cand == 0 and cand * rows_per_elem <= max(target_rows, rows_per_elem):
            best = cand
    return best


def decoder_block(x, encoder_output, src_mask, tgt_mask, prepared, h,
                  eps=1e-6, target_rows=256):
    """Pallas forward pass matching DecoderBlock.forward (dropout = identity).

    x               : (B, S_t, D) f32
    encoder_output  : (B, S_s, D) f32
    src_mask        : (B, 1, S_t, S_s) int (1 = attend, 0 = masked)
    tgt_mask        : (B, 1, S_t, S_t) int
    prepared        : output of prepare_decoder_params (cached weight glue)
    """
    B, S_t, D = x.shape
    _, S_s, _ = encoder_output.shape
    assert D % h == 0
    f32 = jnp.float32

    # Fold several batch elements into the GEMM M dimension per grid step so
    # the MXU sees wider passes and per-step grid overhead amortizes.
    bb = _pick_batch_block(B, max(S_t, S_s), target_rows)
    n_steps = B // bb

    # Per-call glue: flatten batch into rows (free XLA reshapes), ship masks as
    # int8 with the broadcast head dim squeezed out (4x less DMA than int32).
    x2 = x.reshape(B * S_t, D).astype(f32)
    enc2 = encoder_output.reshape(B * S_s, D).astype(f32)
    tgt_m = tgt_mask[:, 0].astype(jnp.int8)          # (B, S_t, S_t)
    src_m = src_mask[:, 0].astype(jnp.int8)          # (B, S_t, S_s)

    weight_names = ["sa_wq", "sa_wk", "sa_wv", "sa_wo",
                    "ca_wq", "ca_wk", "ca_wv", "ca_wo",
                    "ffn_w1", "ffn_b1", "ffn_w2", "ffn_b2",
                    "ln1_a", "ln1_b", "ln2_a", "ln2_b", "ln3_a", "ln3_b"]
    weights = [prepared[name] for name in weight_names]

    def _const_spec(shape):
        # Grid-invariant block -> DMA'd once, VMEM-resident across all steps.
        n = len(shape)
        return pl.BlockSpec(shape, lambda i, _n=n: (0,) * _n)

    in_specs = [
        pl.BlockSpec((bb * S_t, D), lambda i: (i, 0)),        # x rows
        pl.BlockSpec((bb * S_s, D), lambda i: (i, 0)),        # encoder rows
        pl.BlockSpec((bb, S_t, S_t), lambda i: (i, 0, 0)),    # tgt_mask (int8)
        pl.BlockSpec((bb, S_t, S_s), lambda i: (i, 0, 0)),    # src_mask (int8)
    ] + [_const_spec(w.shape) for w in weights]

    # Explicit scoped-VMEM budget (defaults are only 16/32 MiB on v5e/v6e):
    # resident weight slabs + double-buffered activation/mask blocks + headroom.
    def _nbytes(a):
        return int(a.size) * a.dtype.itemsize
    block_bytes = (2 * bb * S_t * D + bb * S_s * D) * 4 + bb * S_t * (S_t + S_s)
    est = 2 * (sum(_nbytes(w) for w in weights) + block_bytes) + (8 << 20)
    vmem_limit = int(min(128 << 20, max(32 << 20, est)))

    kernel = functools.partial(_decoder_block_kernel, h=h, eps=eps,
                               bb=bb, s_t=S_t, s_s=S_s)

    out2 = pl.pallas_call(
        kernel,
        out_shape=jax.ShapeDtypeStruct((B * S_t, D), f32),
        grid_spec=pltpu.PrefetchScalarGridSpec(
            num_scalar_prefetch=0,
            grid=(n_steps,),
            in_specs=in_specs,
            out_specs=pl.BlockSpec((bb * S_t, D), lambda i: (i, 0)),
        ),
        compiler_params=pltpu.CompilerParams(
            dimension_semantics=("parallel",),
            vmem_limit_bytes=vmem_limit),
    )(x2, enc2, tgt_m, src_m, *weights)

    return out2.reshape(B, S_t, D)


# ----------------------------- pure-JAX reference -----------------------------

def _mha_ref(q, k, v, mask, w_q, w_k, w_v, w_o, h):
    B, Sq, D = q.shape
    d_k = D // h
    Q = (q @ w_q.T).reshape(B, -1, h, d_k).transpose(0, 2, 1, 3)
    K = (k @ w_k.T).reshape(B, -1, h, d_k).transpose(0, 2, 1, 3)
    V = (v @ w_v.T).reshape(B, -1, h, d_k).transpose(0, 2, 1, 3)
    scores = jnp.einsum('bhqd,bhkd->bhqk', Q, K) / math.sqrt(d_k)
    scores = jnp.where(mask == 0, -1e9, scores)
    probs = jax.nn.softmax(scores, axis=-1)
    out = jnp.einsum('bhqk,bhkd->bhqd', probs, V)
    out = out.transpose(0, 2, 1, 3).reshape(B, -1, D)
    return out @ w_o.T


def _layer_norm_ref(x, alpha, bias, eps=1e-6):
    mean = jnp.mean(x, axis=-1, keepdims=True)
    std = jnp.std(x, axis=-1, keepdims=True, ddof=1)   # torch std is unbiased
    return alpha * (x - mean) / (std + eps) + bias


def decoder_block_ref(x, enc, src_mask, tgt_mask, p, h, eps=1e-6):
    y = _layer_norm_ref(x, p["ln1_a"], p["ln1_b"], eps)
    x = x + _mha_ref(y, y, y, tgt_mask,
                     p["sa_wq"], p["sa_wk"], p["sa_wv"], p["sa_wo"], h)
    y = _layer_norm_ref(x, p["ln2_a"], p["ln2_b"], eps)
    x = x + _mha_ref(y, enc, enc, src_mask,
                     p["ca_wq"], p["ca_wk"], p["ca_wv"], p["ca_wo"], h)
    y = _layer_norm_ref(x, p["ln3_a"], p["ln3_b"], eps)
    f = jnp.maximum(y @ p["ffn_w1"].T + p["ffn_b1"], 0.0)
    x = x + f @ p["ffn_w2"].T + p["ffn_b2"]
    return x


if __name__ == "__main__":
    B, S, D, H, D_FF = 2, 8, 32, 4, 64   # batch, seq, d_model, heads, d_ff (d_k=8)

    key = jax.random.PRNGKey(0)
    ks = iter(jax.random.split(key, 24))

    def lin(kk, out_f, in_f):
        b = 1.0 / math.sqrt(in_f)
        return jax.random.uniform(kk, (out_f, in_f), jnp.float32, -b, b)

    x = jax.random.normal(next(ks), (B, S, D), jnp.float32)
    enc = jax.random.normal(next(ks), (B, S, D), jnp.float32)

    params = {
        "sa_wq": lin(next(ks), D, D), "sa_wk": lin(next(ks), D, D),
        "sa_wv": lin(next(ks), D, D), "sa_wo": lin(next(ks), D, D),
        "ca_wq": lin(next(ks), D, D), "ca_wk": lin(next(ks), D, D),
        "ca_wv": lin(next(ks), D, D), "ca_wo": lin(next(ks), D, D),
        "ffn_w1": lin(next(ks), D_FF, D),
        "ffn_b1": jax.random.uniform(next(ks), (D_FF,), jnp.float32,
                                     -1.0 / math.sqrt(D), 1.0 / math.sqrt(D)),
        "ffn_w2": lin(next(ks), D, D_FF),
        "ffn_b2": jax.random.uniform(next(ks), (D,), jnp.float32,
                                     -1.0 / math.sqrt(D_FF), 1.0 / math.sqrt(D_FF)),
        "ln1_a": 1.0 + 0.1 * jax.random.normal(next(ks), (D,), jnp.float32),
        "ln1_b": 0.1 * jax.random.normal(next(ks), (D,), jnp.float32),
        "ln2_a": 1.0 + 0.1 * jax.random.normal(next(ks), (D,), jnp.float32),
        "ln2_b": 0.1 * jax.random.normal(next(ks), (D,), jnp.float32),
        "ln3_a": 1.0 + 0.1 * jax.random.normal(next(ks), (D,), jnp.float32),
        "ln3_b": 0.1 * jax.random.normal(next(ks), (D,), jnp.float32),
    }

    # Causal target mask; source mask with per-batch valid lengths [S, S-2].
    tgt_mask = jnp.broadcast_to(
        jnp.tril(jnp.ones((S, S), jnp.int32))[None, None], (B, 1, S, S))
    src_len = jnp.array([S, S - 2])
    src_mask = (jnp.arange(S)[None, None, None, :]
                < src_len[:, None, None, None]).astype(jnp.int32)
    src_mask = jnp.broadcast_to(src_mask, (B, 1, S, S))

    # Weight glue (transpose / bf16 cast / scale-bake) done once, not per call.
    prepared = prepare_decoder_params(params, H)

    out = decoder_block(x, enc, src_mask, tgt_mask, prepared, H)
    out = jax.block_until_ready(out)

    ref = decoder_block_ref(x, enc, src_mask, tgt_mask, params, H)
    # Loose tolerance: kernel runs all matmuls with bf16 MXU operands (f32
    # accumulation); the reference is pure f32.
    if not jnp.allclose(out, ref, rtol=5e-2, atol=5e-2):
        raise AssertionError("Pallas DecoderBlock output mismatch vs JAX reference")

    print("KERNEL_OK")
</pallas_src>

<mosaic_0001>
module attributes {stable_mosaic.version = 11 : i64} {
  func.func @_decoder_block_kernel(%arg0: i32, %arg1: memref<16x32xf32, #tpu.memory_space<vmem>>, %arg2: memref<16x32xf32, #tpu.memory_space<vmem>>, %arg3: memref<2x8x8xi8, #tpu.memory_space<vmem>>, %arg4: memref<2x8x8xi8, #tpu.memory_space<vmem>>, %arg5: memref<32x32xbf16, #tpu.memory_space<vmem>>, %arg6: memref<32x32xbf16, #tpu.memory_space<vmem>>, %arg7: memref<32x32xbf16, #tpu.memory_space<vmem>>, %arg8: memref<32x32xbf16, #tpu.memory_space<vmem>>, %arg9: memref<32x32xbf16, #tpu.memory_space<vmem>>, %arg10: memref<32x32xbf16, #tpu.memory_space<vmem>>, %arg11: memref<32x32xbf16, #tpu.memory_space<vmem>>, %arg12: memref<32x32xbf16, #tpu.memory_space<vmem>>, %arg13: memref<32x64xbf16, #tpu.memory_space<vmem>>, %arg14: memref<1x64xf32, #tpu.memory_space<vmem>>, %arg15: memref<64x32xbf16, #tpu.memory_space<vmem>>, %arg16: memref<1x32xf32, #tpu.memory_space<vmem>>, %arg17: memref<1x32xf32, #tpu.memory_space<vmem>>, %arg18: memref<1x32xf32, #tpu.memory_space<vmem>>, %arg19: memref<1x32xf32, #tpu.memory_space<vmem>>, %arg20: memref<1x32xf32, #tpu.memory_space<vmem>>, %arg21: memref<1x32xf32, #tpu.memory_space<vmem>>, %arg22: memref<1x32xf32, #tpu.memory_space<vmem>>, %arg23: memref<16x32xf32, #tpu.memory_space<vmem>>) attributes {dimension_semantics = [#tpu.dimension_semantics<parallel>], iteration_bounds = array<i64: 1>, scalar_prefetch = 0 : i64, scratch_operands = 0 : i64, tpu.core_type = #tpu.core_type<tc>, window_params = [{transform_indices = @transform_0, window_bounds = array<i64: 16, 32>}, {transform_indices = @transform_1, window_bounds = array<i64: 16, 32>}, {transform_indices = @transform_2, window_bounds = array<i64: 2, 8, 8>}, {transform_indices = @transform_3, window_bounds = array<i64: 2, 8, 8>}, {pipeline_mode = #tpu.pipeline_mode<synchronous>, transform_indices = @transform_4, window_bounds = array<i64: 32, 32>}, {pipeline_mode = #tpu.pipeline_mode<synchronous>, transform_indices = @transform_5, window_bounds = array<i64: 32, 32>}, {pipeline_mode = #tpu.pipeline_mode<synchronous>, transform_indices = @transform_6, window_bounds = array<i64: 32, 32>}, {pipeline_mode = #tpu.pipeline_mode<synchronous>, transform_indices = @transform_7, window_bounds = array<i64: 32, 32>}, {pipeline_mode = #tpu.pipeline_mode<synchronous>, transform_indices = @transform_8, window_bounds = array<i64: 32, 32>}, {pipeline_mode = #tpu.pipeline_mode<synchronous>, transform_indices = @transform_9, window_bounds = array<i64: 32, 32>}, {pipeline_mode = #tpu.pipeline_mode<synchronous>, transform_indices = @transform_10, window_bounds = array<i64: 32, 32>}, {pipeline_mode = #tpu.pipeline_mode<synchronous>, transform_indices = @transform_11, window_bounds = array<i64: 32, 32>}, {pipeline_mode = #tpu.pipeline_mode<synchronous>, transform_indices = @transform_12, window_bounds = array<i64: 32, 64>}, {pipeline_mode = #tpu.pipeline_mode<synchronous>, transform_indices = @transform_13, window_bounds = array<i64: 1, 64>}, {pipeline_mode = #tpu.pipeline_mode<synchronous>, transform_indices = @transform_14, window_bounds = array<i64: 64, 32>}, {pipeline_mode = #tpu.pipeline_mode<synchronous>, transform_indices = @transform_15, window_bounds = array<i64: 1, 32>}, {pipeline_mode = #tpu.pipeline_mode<synchronous>, transform_indices = @transform_16, window_bounds = array<i64: 1, 32>}, {pipeline_mode = #tpu.pipeline_mode<synchronous>, transform_indices = @transform_17, window_bounds = array<i64: 1, 32>}, {pipeline_mode = #tpu.pipeline_mode<synchronous>, transform_indices = @transform_18, window_bounds = array<i64: 1, 32>}, {pipeline_mode = #tpu.pipeline_mode<synchronous>, transform_indices = @transform_19, window_bounds = array<i64: 1, 32>}, {pipeline_mode = #tpu.pipeline_mode<synchronous>, transform_indices = @transform_20, window_bounds = array<i64: 1, 32>}, {pipeline_mode = #tpu.pipeline_mode<synchronous>, transform_indices = @transform_21, window_bounds = array<i64: 1, 32>}, {transform_indices = @transform_22, window_bounds = array<i64: 16, 32>}]} {
    %c0 = arith.constant 0 : index
    %c0_0 = arith.constant 0 : index
    %0 = vector.load %arg1[%c0, %c0_0] : memref<16x32xf32, #tpu.memory_space<vmem>>, vector<16x32xf32>
    %c0_1 = arith.constant 0 : index
    %c0_2 = arith.constant 0 : index
    %1 = vector.load %arg2[%c0_1, %c0_2] : memref<16x32xf32, #tpu.memory_space<vmem>>, vector<16x32xf32>
    %c0_3 = arith.constant 0 : index
    %c0_4 = arith.constant 0 : index
    %c0_5 = arith.constant 0 : index
    %2 = vector.load %arg3[%c0_3, %c0_4, %c0_5] : memref<2x8x8xi8, #tpu.memory_space<vmem>>, vector<2x8x8xi8>
    %3 = arith.sitofp %2 : vector<2x8x8xi8> to vector<2x8x8xf32>
    %c0_6 = arith.constant 0 : index
    %c0_7 = arith.constant 0 : index
    %c0_8 = arith.constant 0 : index
    %4 = vector.load %arg4[%c0_6, %c0_7, %c0_8] : memref<2x8x8xi8, #tpu.memory_space<vmem>>, vector<2x8x8xi8>
    %5 = arith.sitofp %4 : vector<2x8x8xi8> to vector<2x8x8xf32>
    %cst = arith.constant dense<0.000000e+00> : vector<16xf32>
    %6 = vector.multi_reduction <add>, %0, %cst [1] : vector<16x32xf32> to vector<16xf32>
    %7 = vector.shape_cast %6 : vector<16xf32> to vector<16x1xf32>
    %cst_9 = arith.constant 3.200000e+01 : f32
    %8 = vector.broadcast %cst_9 : f32 to vector<16x1xf32>
    %9 = arith.divf %7, %8 : vector<16x1xf32>
    %10 = vector.broadcast %9 : vector<16x1xf32> to vector<16x32xf32>
    %11 = arith.subf %0, %10 : vector<16x32xf32>
    %12 = arith.mulf %11, %11 : vector<16x32xf32>
    %cst_10 = arith.constant dense<0.000000e+00> : vector<16xf32>
    %13 = vector.multi_reduction <add>, %12, %cst_10 [1] : vector<16x32xf32> to vector<16xf32>
    %14 = vector.shape_cast %13 : vector<16xf32> to vector<16x1xf32>
    %cst_11 = arith.constant 0.0322580636 : f32
    %15 = vector.broadcast %cst_11 : f32 to vector<16x1xf32>
    %16 = arith.mulf %14, %15 : vector<16x1xf32>
    %17 = math.sqrt %16 : vector<16x1xf32>
    %c0_12 = arith.constant 0 : index
    %c0_13 = arith.constant 0 : index
    %18 = vector.load %arg17[%c0_12, %c0_13] : memref<1x32xf32, #tpu.memory_space<vmem>>, vector<1x32xf32>
    %cst_14 = arith.constant 9.99999997E-7 : f32
    %19 = vector.broadcast %cst_14 : f32 to vector<16x1xf32>
    %20 = arith.addf %17, %19 : vector<16x1xf32>
    %21 = vector.broadcast %20 : vector<16x1xf32> to vector<16x32xf32>
    %22 = arith.divf %11, %21 : vector<16x32xf32>
    %23 = vector.broadcast %18 : vector<1x32xf32> to vector<16x32xf32>
    %24 = arith.mulf %23, %22 : vector<16x32xf32>
    %c0_15 = arith.constant 0 : index
    %c0_16 = arith.constant 0 : index
    %25 = vector.load %arg18[%c0_15, %c0_16] : memref<1x32xf32, #tpu.memory_space<vmem>>, vector<1x32xf32>
    %26 = vector.broadcast %25 : vector<1x32xf32> to vector<16x32xf32>
    %27 = arith.addf %24, %26 : vector<16x32xf32>
    %28 = arith.truncf %27 : vector<16x32xf32> to vector<16x32xbf16>
    %29 = arith.truncf %27 : vector<16x32xf32> to vector<16x32xbf16>
    %c0_17 = arith.constant 0 : index
    %c0_18 = arith.constant 0 : index
    %30 = vector.load %arg5[%c0_17, %c0_18] : memref<32x32xbf16, #tpu.memory_space<vmem>>, vector<32x32xbf16>
    %cst_19 = arith.constant dense<0.000000e+00> : vector<16x32xf32>
    %31 = tpu.matmul %28, %30, %cst_19 {dimension_numbers = #tpu.dot_dimension_numbers<[1], [0], [0], [1], [0, 0, 1, 1], [], []>} : vector<16x32xbf16>, vector<32x32xbf16>, vector<16x32xf32> -> vector<16x32xf32>
    %c0_20 = arith.constant 0 : index
    %c0_21 = arith.constant 0 : index
    %32 = vector.load %arg6[%c0_20, %c0_21] : memref<32x32xbf16, #tpu.memory_space<vmem>>, vector<32x32xbf16>
    %cst_22 = arith.constant dense<0.000000e+00> : vector<16x32xf32>
    %33 = tpu.matmul %29, %32, %cst_22 {dimension_numbers = #tpu.dot_dimension_numbers<[1], [0], [0], [1], [0, 0, 1, 1], [], []>} : vector<16x32xbf16>, vector<32x32xbf16>, vector<16x32xf32> -> vector<16x32xf32>
    %c0_23 = arith.constant 0 : index
    %c0_24 = arith.constant 0 : index
    %34 = vector.load %arg7[%c0_23, %c0_24] : memref<32x32xbf16, #tpu.memory_space<vmem>>, vector<32x32xbf16>
    %cst_25 = arith.constant dense<0.000000e+00> : vector<16x32xf32>
    %35 = tpu.matmul %29, %34, %cst_25 {dimension_numbers = #tpu.dot_dimension_numbers<[1], [0], [0], [1], [0, 0, 1, 1], [], []>} : vector<16x32xbf16>, vector<32x32xbf16>, vector<16x32xf32> -> vector<16x32xf32>
    %36 = vector.extract_strided_slice %31 {offsets = [0, 0], sizes = [8, 32], strides = [1, 1]} : vector<16x32xf32> to vector<8x32xf32>
    %37 = vector.extract_strided_slice %33 {offsets = [0, 0], sizes = [8, 32], strides = [1, 1]} : vector<16x32xf32> to vector<8x32xf32>
    %38 = vector.extract_strided_slice %35 {offsets = [0, 0], sizes = [8, 32], strides = [1, 1]} : vector<16x32xf32> to vector<8x32xf32>
    %39 = vector.extract_strided_slice %3 {offsets = [0, 0, 0], sizes = [1, 8, 8], strides = [1, 1, 1]} : vector<2x8x8xf32> to vector<1x8x8xf32>
    %40 = vector.shape_cast %39 : vector<1x8x8xf32> to vector<8x8xf32>
    %cst_26 = arith.constant 0.000000e+00 : f32
    %41 = vector.broadcast %cst_26 : f32 to vector<8x8xf32>
    %42 = arith.cmpf one, %40, %41 : vector<8x8xf32>
    %43 = vector.extract_strided_slice %36 {offsets = [0, 0], sizes = [8, 8], strides = [1, 1]} : vector<8x32xf32> to vector<8x8xf32>
    %44 = arith.truncf %43 : vector<8x8xf32> to vector<8x8xbf16>
    %45 = vector.extract_strided_slice %37 {offsets = [0, 0], sizes = [8, 8], strides = [1, 1]} : vector<8x32xf32> to vector<8x8xf32>
    %46 = arith.truncf %45 : vector<8x8xf32> to vector<8x8xbf16>
    %47 = vector.extract_strided_slice %38 {offsets = [0, 0], sizes = [8, 8], strides = [1, 1]} : vector<8x32xf32> to vector<8x8xf32>
    %48 = arith.truncf %47 : vector<8x8xf32> to vector<8x8xbf16>
    %cst_27 = arith.constant dense<0.000000e+00> : vector<8x8xf32>
    %49 = tpu.matmul %44, %46, %cst_27 {dimension_numbers = #tpu.dot_dimension_numbers<[1], [1], [0], [0], [0, 0, 1, 0], [], []>} : vector<8x8xbf16>, vector<8x8xbf16>, vector<8x8xf32> -> vector<8x8xf32>
    %cst_28 = arith.constant -1.000000e+09 : f32
    %50 = vector.broadcast %cst_28 : f32 to vector<8x8xf32>
    %51 = arith.select %42, %49, %50 : vector<8x8xi1>, vector<8x8xf32>
    %cst_29 = arith.constant dense<0xFF800000> : vector<8xf32>
    %52 = vector.multi_reduction <maximumf>, %51, %cst_29 [1] : vector<8x8xf32> to vector<8xf32>
    %53 = vector.shape_cast %52 : vector<8xf32> to vector<8x1xf32>
    %54 = vector.broadcast %53 : vector<8x1xf32> to vector<8x8xf32>
    %55 = arith.subf %51, %54 : vector<8x8xf32>
    %56 = math.exp %55 : vector<8x8xf32>
    %cst_30 = arith.constant dense<0.000000e+00> : vector<8xf32>
    %57 = vector.multi_reduction <add>, %56, %cst_30 [1] : vector<8x8xf32> to vector<8xf32>
    %58 = vector.shape_cast %57 : vector<8xf32> to vector<8x1xf32>
    %59 = tpu.reciprocal %58 {approx = true} : vector<8x1xf32> -> vector<8x1xf32>
    %60 = vector.broadcast %59 : vector<8x1xf32> to vector<8x8xf32>
    %61 = arith.mulf %56, %60 : vector<8x8xf32>
    %62 = arith.truncf %61 : vector<8x8xf32> to vector<8x8xbf16>
    %cst_31 = arith.constant dense<0.000000e+00> : vector<8x8xf32>
    %63 = tpu.matmul %62, %48, %cst_31 {dimension_numbers = #tpu.dot_dimension_numbers<[1], [0], [0], [1], [0, 0, 1, 1], [], []>} : vector<8x8xbf16>, vector<8x8xbf16>, vector<8x8xf32> -> vector<8x8xf32>
    %64 = vector.extract_strided_slice %36 {offsets = [0, 8], sizes = [8, 8], strides = [1, 1]} : vector<8x32xf32> to vector<8x8xf32>
    %65 = arith.truncf %64 : vector<8x8xf32> to vector<8x8xbf16>
    %66 = vector.extract_strided_slice %37 {offsets = [0, 8], sizes = [8, 8], strides = [1, 1]} : vector<8x32xf32> to vector<8x8xf32>
    %67 = arith.truncf %66 : vector<8x8xf32> to vector<8x8xbf16>
    %68 = vector.extract_strided_slice %38 {offsets = [0, 8], sizes = [8, 8], strides = [1, 1]} : vector<8x32xf32> to vector<8x8xf32>
    %69 = arith.truncf %68 : vector<8x8xf32> to vector<8x8xbf16>
    %cst_32 = arith.constant dense<0.000000e+00> : vector<8x8xf32>
    %70 = tpu.matmul %65, %67, %cst_32 {dimension_numbers = #tpu.dot_dimension_numbers<[1], [1], [0], [0], [0, 0, 1, 0], [], []>} : vector<8x8xbf16>, vector<8x8xbf16>, vector<8x8xf32> -> vector<8x8xf32>
    %cst_33 = arith.constant -1.000000e+09 : f32
    %71 = vector.broadcast %cst_33 : f32 to vector<8x8xf32>
    %72 = arith.select %42, %70, %71 : vector<8x8xi1>, vector<8x8xf32>
    %cst_34 = arith.constant dense<0xFF800000> : vector<8xf32>
    %73 = vector.multi_reduction <maximumf>, %72, %cst_34 [1] : vector<8x8xf32> to vector<8xf32>
    %74 = vector.shape_cast %73 : vector<8xf32> to vector<8x1xf32>
    %75 = vector.broadcast %74 : vector<8x1xf32> to vector<8x8xf32>
    %76 = arith.subf %72, %75 : vector<8x8xf32>
    %77 = math.exp %76 : vector<8x8xf32>
    %cst_35 = arith.constant dense<0.000000e+00> : vector<8xf32>
    %78 = vector.multi_reduction <add>, %77, %cst_35 [1] : vector<8x8xf32> to vector<8xf32>
    %79 = vector.shape_cast %78 : vector<8xf32> to vector<8x1xf32>
    %80 = tpu.reciprocal %79 {approx = true} : vector<8x1xf32> -> vector<8x1xf32>
    %81 = vector.broadcast %80 : vector<8x1xf32> to vector<8x8xf32>
    %82 = arith.mulf %77, %81 : vector<8x8xf32>
    %83 = arith.truncf %82 : vector<8x8xf32> to vector<8x8xbf16>
    %cst_36 = arith.constant dense<0.000000e+00> : vector<8x8xf32>
    %84 = tpu.matmul %83, %69, %cst_36 {dimension_numbers = #tpu.dot_dimension_numbers<[1], [0], [0], [1], [0, 0, 1, 1], [], []>} : vector<8x8xbf16>, vector<8x8xbf16>, vector<8x8xf32> -> vector<8x8xf32>
    %85 = vector.extract_strided_slice %36 {offsets = [0, 16], sizes = [8, 8], strides = [1, 1]} : vector<8x32xf32> to vector<8x8xf32>
    %86 = arith.truncf %85 : vector<8x8xf32> to vector<8x8xbf16>
    %87 = vector.extract_strided_slice %37 {offsets = [0, 16], sizes = [8, 8], strides = [1, 1]} : vector<8x32xf32> to vector<8x8xf32>
    %88 = arith.truncf %87 : vector<8x8xf32> to vector<8x8xbf16>
    %89 = vector.extract_strided_slice %38 {offsets = [0, 16], sizes = [8, 8], strides = [1, 1]} : vector<8x32xf32> to vector<8x8xf32>
    %90 = arith.truncf %89 : vector<8x8xf32> to vector<8x8xbf16>
    %cst_37 = arith.constant dense<0.000000e+00> : vector<8x8xf32>
    %91 = tpu.matmul %86, %88, %cst_37 {dimension_numbers = #tpu.dot_dimension_numbers<[1], [1], [0], [0], [0, 0, 1, 0], [], []>} : vector<8x8xbf16>, vector<8x8xbf16>, vector<8x8xf32> -> vector<8x8xf32>
    %cst_38 = arith.constant -1.000000e+09 : f32
    %92 = vector.broadcast %cst_38 : f32 to vector<8x8xf32>
    %93 = arith.select %42, %91, %92 : vector<8x8xi1>, vector<8x8xf32>
    %cst_39 = arith.constant dense<0xFF800000> : vector<8xf32>
    %94 = vector.multi_reduction <maximumf>, %93, %cst_39 [1] : vector<8x8xf32> to vector<8xf32>
    %95 = vector.shape_cast %94 : vector<8xf32> to vector<8x1xf32>
    %96 = vector.broadcast %95 : vector<8x1xf32> to vector<8x8xf32>
    %97 = arith.subf %93, %96 : vector<8x8xf32>
    %98 = math.exp %97 : vector<8x8xf32>
    %cst_40 = arith.constant dense<0.000000e+00> : vector<8xf32>
    %99 = vector.multi_reduction <add>, %98, %cst_40 [1] : vector<8x8xf32> to vector<8xf32>
    %100 = vector.shape_cast %99 : vector<8xf32> to vector<8x1xf32>
    %101 = tpu.reciprocal %100 {approx = true} : vector<8x1xf32> -> vector<8x1xf32>
    %102 = vector.broadcast %101 : vector<8x1xf32> to vector<8x8xf32>
    %103 = arith.mulf %98, %102 : vector<8x8xf32>
    %104 = arith.truncf %103 : vector<8x8xf32> to vector<8x8xbf16>
    %cst_41 = arith.constant dense<0.000000e+00> : vector<8x8xf32>
    %105 = tpu.matmul %104, %90, %cst_41 {dimension_numbers = #tpu.dot_dimension_numbers<[1], [0], [0], [1], [0, 0, 1, 1], [], []>} : vector<8x8xbf16>, vector<8x8xbf16>, vector<8x8xf32> -> vector<8x8xf32>
    %106 = vector.extract_strided_slice %36 {offsets = [0, 24], sizes = [8, 8], strides = [1, 1]} : vector<8x32xf32> to vector<8x8xf32>
    %107 = arith.truncf %106 : vector<8x8xf32> to vector<8x8xbf16>
    %108 = vector.extract_strided_slice %37 {offsets = [0, 24], sizes = [8, 8], strides = [1, 1]} : vector<8x32xf32> to vector<8x8xf32>
    %109 = arith.truncf %108 : vector<8x8xf32> to vector<8x8xbf16>
    %110 = vector.extract_strided_slice %38 {offsets = [0, 24], sizes = [8, 8], strides = [1, 1]} : vector<8x32xf32> to vector<8x8xf32>
    %111 = arith.truncf %110 : vector<8x8xf32> to vector<8x8xbf16>
    %cst_42 = arith.constant dense<0.000000e+00> : vector<8x8xf32>
    %112 = tpu.matmul %107, %109, %cst_42 {dimension_numbers = #tpu.dot_dimension_numbers<[1], [1], [0], [0], [0, 0, 1, 0], [], []>} : vector<8x8xbf16>, vector<8x8xbf16>, vector<8x8xf32> -> vector<8x8xf32>
    %cst_43 = arith.constant -1.000000e+09 : f32
    %113 = vector.broadcast %cst_43 : f32 to vector<8x8xf32>
    %114 = arith.select %42, %112, %113 : vector<8x8xi1>, vector<8x8xf32>
    %cst_44 = arith.constant dense<0xFF800000> : vector<8xf32>
    %115 = vector.multi_reduction <maximumf>, %114, %cst_44 [1] : vector<8x8xf32> to vector<8xf32>
    %116 = vector.shape_cast %115 : vector<8xf32> to vector<8x1xf32>
    %117 = vector.broadcast %116 : vector<8x1xf32> to vector<8x8xf32>
    %118 = arith.subf %114, %117 : vector<8x8xf32>
    %119 = math.exp %118 : vector<8x8xf32>
    %cst_45 = arith.constant dense<0.000000e+00> : vector<8xf32>
    %120 = vector.multi_reduction <add>, %119, %cst_45 [1] : vector<8x8xf32> to vector<8xf32>
    %121 = vector.shape_cast %120 : vector<8xf32> to vector<8x1xf32>
    %122 = tpu.reciprocal %121 {approx = true} : vector<8x1xf32> -> vector<8x1xf32>
    %123 = vector.broadcast %122 : vector<8x1xf32> to vector<8x8xf32>
    %124 = arith.mulf %119, %123 : vector<8x8xf32>
    %125 = arith.truncf %124 : vector<8x8xf32> to vector<8x8xbf16>
    %cst_46 = arith.constant dense<0.000000e+00> : vector<8x8xf32>
    %126 = tpu.matmul %125, %111, %cst_46 {dimension_numbers = #tpu.dot_dimension_numbers<[1], [0], [0], [1], [0, 0, 1, 1], [], []>} : vector<8x8xbf16>, vector<8x8xbf16>, vector<8x8xf32> -> vector<8x8xf32>
    %127 = tpu.concatenate %63, %84, %105, %126 in 1 : vector<8x8xf32>, vector<8x8xf32>, vector<8x8xf32>, vector<8x8xf32> -> vector<8x32xf32>
    %128 = vector.extract_strided_slice %31 {offsets = [8, 0], sizes = [8, 32], strides = [1, 1]} : vector<16x32xf32> to vector<8x32xf32>
    %129 = vector.extract_strided_slice %33 {offsets = [8, 0], sizes = [8, 32], strides = [1, 1]} : vector<16x32xf32> to vector<8x32xf32>
    %130 = vector.extract_strided_slice %35 {offsets = [8, 0], sizes = [8, 32], strides = [1, 1]} : vector<16x32xf32> to vector<8x32xf32>
    %131 = vector.extract_strided_slice %3 {offsets = [1, 0, 0], sizes = [1, 8, 8], strides = [1, 1, 1]} : vector<2x8x8xf32> to vector<1x8x8xf32>
    %132 = vector.shape_cast %131 : vector<1x8x8xf32> to vector<8x8xf32>
    %cst_47 = arith.constant 0.000000e+00 : f32
    %133 = vector.broadcast %cst_47 : f32 to vector<8x8xf32>
    %134 = arith.cmpf one, %132, %133 : vector<8x8xf32>
    %135 = vector.extract_strided_slice %128 {offsets = [0, 0], sizes = [8, 8], strides = [1, 1]} : vector<8x32xf32> to vector<8x8xf32>
    %136 = arith.truncf %135 : vector<8x8xf32> to vector<8x8xbf16>
    %137 = vector.extract_strided_slice %129 {offsets = [0, 0], sizes = [8, 8], strides = [1, 1]} : vector<8x32xf32> to vector<8x8xf32>
    %138 = arith.truncf %137 : vector<8x8xf32> to vector<8x8xbf16>
    %139 = vector.extract_strided_slice %130 {offsets = [0, 0], sizes = [8, 8], strides = [1, 1]} : vector<8x32xf32> to vector<8x8xf32>
    %140 = arith.truncf %139 : vector<8x8xf32> to vector<8x8xbf16>
    %cst_48 = arith.constant dense<0.000000e+00> : vector<8x8xf32>
    %141 = tpu.matmul %136, %138, %cst_48 {dimension_numbers = #tpu.dot_dimension_numbers<[1], [1], [0], [0], [0, 0, 1, 0], [], []>} : vector<8x8xbf16>, vector<8x8xbf16>, vector<8x8xf32> -> vector<8x8xf32>
    %cst_49 = arith.constant -1.000000e+09 : f32
    %142 = vector.broadcast %cst_49 : f32 to vector<8x8xf32>
    %143 = arith.select %134, %141, %142 : vector<8x8xi1>, vector<8x8xf32>
    %cst_50 = arith.constant dense<0xFF800000> : vector<8xf32>
    %144 = vector.multi_reduction <maximumf>, %143, %cst_50 [1] : vector<8x8xf32> to vector<8xf32>
    %145 = vector.shape_cast %144 : vector<8xf32> to vector<8x1xf32>
    %146 = vector.broadcast %145 : vector<8x1xf32> to vector<8x8xf32>
    %147 = arith.subf %143, %146 : vector<8x8xf32>
    %148 = math.exp %147 : vector<8x8xf32>
    %cst_51 = arith.constant dense<0.000000e+00> : vector<8xf32>
    %149 = vector.multi_reduction <add>, %148, %cst_51 [1] : vector<8x8xf32> to vector<8xf32>
    %150 = vector.shape_cast %149 : vector<8xf32> to vector<8x1xf32>
    %151 = tpu.reciprocal %150 {approx = true} : vector<8x1xf32> -> vector<8x1xf32>
    %152 = vector.broadcast %151 : vector<8x1xf32> to vector<8x8xf32>
    %153 = arith.mulf %148, %152 : vector<8x8xf32>
    %154 = arith.truncf %153 : vector<8x8xf32> to vector<8x8xbf16>
    %cst_52 = arith.constant dense<0.000000e+00> : vector<8x8xf32>
    %155 = tpu.matmul %154, %140, %cst_52 {dimension_numbers = #tpu.dot_dimension_numbers<[1], [0], [0], [1], [0, 0, 1, 1], [], []>} : vector<8x8xbf16>, vector<8x8xbf16>, vector<8x8xf32> -> vector<8x8xf32>
    %156 = vector.extract_strided_slice %128 {offsets = [0, 8], sizes = [8, 8], strides = [1, 1]} : vector<8x32xf32> to vector<8x8xf32>
    %157 = arith.truncf %156 : vector<8x8xf32> to vector<8x8xbf16>
    %158 = vector.extract_strided_slice %129 {offsets = [0, 8], sizes = [8, 8], strides = [1, 1]} : vector<8x32xf32> to vector<8x8xf32>
    %159 = arith.truncf %158 : vector<8x8xf32> to vector<8x8xbf16>
    %160 = vector.extract_strided_slice %130 {offsets = [0, 8], sizes = [8, 8], strides = [1, 1]} : vector<8x32xf32> to vector<8x8xf32>
    %161 = arith.truncf %160 : vector<8x8xf32> to vector<8x8xbf16>
    %cst_53 = arith.constant dense<0.000000e+00> : vector<8x8xf32>
    %162 = tpu.matmul %157, %159, %cst_53 {dimension_numbers = #tpu.dot_dimension_numbers<[1], [1], [0], [0], [0, 0, 1, 0], [], []>} : vector<8x8xbf16>, vector<8x8xbf16>, vector<8x8xf32> -> vector<8x8xf32>
    %cst_54 = arith.constant -1.000000e+09 : f32
    %163 = vector.broadcast %cst_54 : f32 to vector<8x8xf32>
    %164 = arith.select %134, %162, %163 : vector<8x8xi1>, vector<8x8xf32>
    %cst_55 = arith.constant dense<0xFF800000> : vector<8xf32>
    %165 = vector.multi_reduction <maximumf>, %164, %cst_55 [1] : vector<8x8xf32> to vector<8xf32>
    %166 = vector.shape_cast %165 : vector<8xf32> to vector<8x1xf32>
    %167 = vector.broadcast %166 : vector<8x1xf32> to vector<8x8xf32>
    %168 = arith.subf %164, %167 : vector<8x8xf32>
    %169 = math.exp %168 : vector<8x8xf32>
    %cst_56 = arith.constant dense<0.000000e+00> : vector<8xf32>
    %170 = vector.multi_reduction <add>, %169, %cst_56 [1] : vector<8x8xf32> to vector<8xf32>
    %171 = vector.shape_cast %170 : vector<8xf32> to vector<8x1xf32>
    %172 = tpu.reciprocal %171 {approx = true} : vector<8x1xf32> -> vector<8x1xf32>
    %173 = vector.broadcast %172 : vector<8x1xf32> to vector<8x8xf32>
    %174 = arith.mulf %169, %173 : vector<8x8xf32>
    %175 = arith.truncf %174 : vector<8x8xf32> to vector<8x8xbf16>
    %cst_57 = arith.constant dense<0.000000e+00> : vector<8x8xf32>
    %176 = tpu.matmul %175, %161, %cst_57 {dimension_numbers = #tpu.dot_dimension_numbers<[1], [0], [0], [1], [0, 0, 1, 1], [], []>} : vector<8x8xbf16>, vector<8x8xbf16>, vector<8x8xf32> -> vector<8x8xf32>
    %177 = vector.extract_strided_slice %128 {offsets = [0, 16], sizes = [8, 8], strides = [1, 1]} : vector<8x32xf32> to vector<8x8xf32>
    %178 = arith.truncf %177 : vector<8x8xf32> to vector<8x8xbf16>
    %179 = vector.extract_strided_slice %129 {offsets = [0, 16], sizes = [8, 8], strides = [1, 1]} : vector<8x32xf32> to vector<8x8xf32>
    %180 = arith.truncf %179 : vector<8x8xf32> to vector<8x8xbf16>
    %181 = vector.extract_strided_slice %130 {offsets = [0, 16], sizes = [8, 8], strides = [1, 1]} : vector<8x32xf32> to vector<8x8xf32>
    %182 = arith.truncf %181 : vector<8x8xf32> to vector<8x8xbf16>
    %cst_58 = arith.constant dense<0.000000e+00> : vector<8x8xf32>
    %183 = tpu.matmul %178, %180, %cst_58 {dimension_numbers = #tpu.dot_dimension_numbers<[1], [1], [0], [0], [0, 0, 1, 0], [], []>} : vector<8x8xbf16>, vector<8x8xbf16>, vector<8x8xf32> -> vector<8x8xf32>
    %cst_59 = arith.constant -1.000000e+09 : f32
    %184 = vector.broadcast %cst_59 : f32 to vector<8x8xf32>
    %185 = arith.select %134, %183, %184 : vector<8x8xi1>, vector<8x8xf32>
    %cst_60 = arith.constant dense<0xFF800000> : vector<8xf32>
    %186 = vector.multi_reduction <maximumf>, %185, %cst_60 [1] : vector<8x8xf32> to vector<8xf32>
    %187 = vector.shape_cast %186 : vector<8xf32> to vector<8x1xf32>
    %188 = vector.broadcast %187 : vector<8x1xf32> to vector<8x8xf32>
    %189 = arith.subf %185, %188 : vector<8x8xf32>
    %190 = math.exp %189 : vector<8x8xf32>
    %cst_61 = arith.constant dense<0.000000e+00> : vector<8xf32>
    %191 = vector.multi_reduction <add>, %190, %cst_61 [1] : vector<8x8xf32> to vector<8xf32>
    %192 = vector.shape_cast %191 : vector<8xf32> to vector<8x1xf32>
    %193 = tpu.reciprocal %192 {approx = true} : vector<8x1xf32> -> vector<8x1xf32>
    %194 = vector.broadcast %193 : vector<8x1xf32> to vector<8x8xf32>
    %195 = arith.mulf %190, %194 : vector<8x8xf32>
    %196 = arith.truncf %195 : vector<8x8xf32> to vector<8x8xbf16>
    %cst_62 = arith.constant dense<0.000000e+00> : vector<8x8xf32>
    %197 = tpu.matmul %196, %182, %cst_62 {dimension_numbers = #tpu.dot_dimension_numbers<[1], [0], [0], [1], [0, 0, 1, 1], [], []>} : vector<8x8xbf16>, vector<8x8xbf16>, vector<8x8xf32> -> vector<8x8xf32>
    %198 = vector.extract_strided_slice %128 {offsets = [0, 24], sizes = [8, 8], strides = [1, 1]} : vector<8x32xf32> to vector<8x8xf32>
    %199 = arith.truncf %198 : vector<8x8xf32> to vector<8x8xbf16>
    %200 = vector.extract_strided_slice %129 {offsets = [0, 24], sizes = [8, 8], strides = [1, 1]} : vector<8x32xf32> to vector<8x8xf32>
    %201 = arith.truncf %200 : vector<8x8xf32> to vector<8x8xbf16>
    %202 = vector.extract_strided_slice %130 {offsets = [0, 24], sizes = [8, 8], strides = [1, 1]} : vector<8x32xf32> to vector<8x8xf32>
    %203 = arith.truncf %202 : vector<8x8xf32> to vector<8x8xbf16>
    %cst_63 = arith.constant dense<0.000000e+00> : vector<8x8xf32>
    %204 = tpu.matmul %199, %201, %cst_63 {dimension_numbers = #tpu.dot_dimension_numbers<[1], [1], [0], [0], [0, 0, 1, 0], [], []>} : vector<8x8xbf16>, vector<8x8xbf16>, vector<8x8xf32> -> vector<8x8xf32>
    %cst_64 = arith.constant -1.000000e+09 : f32
    %205 = vector.broadcast %cst_64 : f32 to vector<8x8xf32>
    %206 = arith.select %134, %204, %205 : vector<8x8xi1>, vector<8x8xf32>
    %cst_65 = arith.constant dense<0xFF800000> : vector<8xf32>
    %207 = vector.multi_reduction <maximumf>, %206, %cst_65 [1] : vector<8x8xf32> to vector<8xf32>
    %208 = vector.shape_cast %207 : vector<8xf32> to vector<8x1xf32>
    %209 = vector.broadcast %208 : vector<8x1xf32> to vector<8x8xf32>
    %210 = arith.subf %206, %209 : vector<8x8xf32>
    %211 = math.exp %210 : vector<8x8xf32>
    %cst_66 = arith.constant dense<0.000000e+00> : vector<8xf32>
    %212 = vector.multi_reduction <add>, %211, %cst_66 [1] : vector<8x8xf32> to vector<8xf32>
    %213 = vector.shape_cast %212 : vector<8xf32> to vector<8x1xf32>
    %214 = tpu.reciprocal %213 {approx = true} : vector<8x1xf32> -> vector<8x1xf32>
    %215 = vector.broadcast %214 : vector<8x1xf32> to vector<8x8xf32>
    %216 = arith.mulf %211, %215 : vector<8x8xf32>
    %217 = arith.truncf %216 : vector<8x8xf32> to vector<8x8xbf16>
    %cst_67 = arith.constant dense<0.000000e+00> : vector<8x8xf32>
    %218 = tpu.matmul %217, %203, %cst_67 {dimension_numbers = #tpu.dot_dimension_numbers<[1], [0], [0], [1], [0, 0, 1, 1], [], []>} : vector<8x8xbf16>, vector<8x8xbf16>, vector<8x8xf32> -> vector<8x8xf32>
    %219 = tpu.concatenate %155, %176, %197, %218 in 1 : vector<8x8xf32>, vector<8x8xf32>, vector<8x8xf32>, vector<8x8xf32> -> vector<8x32xf32>
    %220 = tpu.concatenate %127, %219 in 0 : vector<8x32xf32>, vector<8x32xf32> -> vector<16x32xf32>
    %221 = arith.truncf %220 : vector<16x32xf32> to vector<16x32xbf16>
    %c0_68 = arith.constant 0 : index
    %c0_69 = arith.constant 0 : index
    %222 = vector.load %arg8[%c0_68, %c0_69] : memref<32x32xbf16, #tpu.memory_space<vmem>>, vector<32x32xbf16>
    %cst_70 = arith.constant dense<0.000000e+00> : vector<16x32xf32>
    %223 = tpu.matmul %221, %222, %cst_70 {dimension_numbers = #tpu.dot_dimension_numbers<[1], [0], [0], [1], [0, 0, 1, 1], [], []>} : vector<16x32xbf16>, vector<32x32xbf16>, vector<16x32xf32> -> vector<16x32xf32>
    %224 = arith.addf %0, %223 : vector<16x32xf32>
    %cst_71 = arith.constant dense<0.000000e+00> : vector<16xf32>
    %225 = vector.multi_reduction <add>, %224, %cst_71 [1] : vector<16x32xf32> to vector<16xf32>
    %226 = vector.shape_cast %225 : vector<16xf32> to vector<16x1xf32>
    %cst_72 = arith.constant 3.200000e+01 : f32
    %227 = vector.broadcast %cst_72 : f32 to vector<16x1xf32>
    %228 = arith.divf %226, %227 : vector<16x1xf32>
    %229 = vector.broadcast %228 : vector<16x1xf32> to vector<16x32xf32>
    %230 = arith.subf %224, %229 : vector<16x32xf32>
    %231 = arith.mulf %230, %230 : vector<16x32xf32>
    %cst_73 = arith.constant dense<0.000000e+00> : vector<16xf32>
    %232 = vector.multi_reduction <add>, %231, %cst_73 [1] : vector<16x32xf32> to vector<16xf32>
    %233 = vector.shape_cast %232 : vector<16xf32> to vector<16x1xf32>
    %cst_74 = arith.constant 0.0322580636 : f32
    %234 = vector.broadcast %cst_74 : f32 to vector<16x1xf32>
    %235 = arith.mulf %233, %234 : vector<16x1xf32>
    %236 = math.sqrt %235 : vector<16x1xf32>
    %c0_75 = arith.constant 0 : index
    %c0_76 = arith.constant 0 : index
    %237 = vector.load %arg19[%c0_75, %c0_76] : memref<1x32xf32, #tpu.memory_space<vmem>>, vector<1x32xf32>
    %cst_77 = arith.constant 9.99999997E-7 : f32
    %238 = vector.broadcast %cst_77 : f32 to vector<16x1xf32>
    %239 = arith.addf %236, %238 : vector<16x1xf32>
    %240 = vector.broadcast %239 : vector<16x1xf32> to vector<16x32xf32>
    %241 = arith.divf %230, %240 : vector<16x32xf32>
    %242 = vector.broadcast %237 : vector<1x32xf32> to vector<16x32xf32>
    %243 = arith.mulf %242, %241 : vector<16x32xf32>
    %c0_78 = arith.constant 0 : index
    %c0_79 = arith.constant 0 : index
    %244 = vector.load %arg20[%c0_78, %c0_79] : memref<1x32xf32, #tpu.memory_space<vmem>>, vector<1x32xf32>
    %245 = vector.broadcast %244 : vector<1x32xf32> to vector<16x32xf32>
    %246 = arith.addf %243, %245 : vector<16x32xf32>
    %247 = arith.truncf %246 : vector<16x32xf32> to vector<16x32xbf16>
    %248 = arith.truncf %1 : vector<16x32xf32> to vector<16x32xbf16>
    %c0_80 = arith.constant 0 : index
    %c0_81 = arith.constant 0 : index
    %249 = vector.load %arg9[%c0_80, %c0_81] : memref<32x32xbf16, #tpu.memory_space<vmem>>, vector<32x32xbf16>
    %cst_82 = arith.constant dense<0.000000e+00> : vector<16x32xf32>
    %250 = tpu.matmul %247, %249, %cst_82 {dimension_numbers = #tpu.dot_dimension_numbers<[1], [0], [0], [1], [0, 0, 1, 1], [], []>} : vector<16x32xbf16>, vector<32x32xbf16>, vector<16x32xf32> -> vector<16x32xf32>
    %c0_83 = arith.constant 0 : index
    %c0_84 = arith.constant 0 : index
    %251 = vector.load %arg10[%c0_83, %c0_84] : memref<32x32xbf16, #tpu.memory_space<vmem>>, vector<32x32xbf16>
    %cst_85 = arith.constant dense<0.000000e+00> : vector<16x32xf32>
    %252 = tpu.matmul %248, %251, %cst_85 {dimension_numbers = #tpu.dot_dimension_numbers<[1], [0], [0], [1], [0, 0, 1, 1], [], []>} : vector<16x32xbf16>, vector<32x32xbf16>, vector<16x32xf32> -> vector<16x32xf32>
    %c0_86 = arith.constant 0 : index
    %c0_87 = arith.constant 0 : index
    %253 = vector.load %arg11[%c0_86, %c0_87] : memref<32x32xbf16, #tpu.memory_space<vmem>>, vector<32x32xbf16>
    %cst_88 = arith.constant dense<0.000000e+00> : vector<16x32xf32>
    %254 = tpu.matmul %248, %253, %cst_88 {dimension_numbers = #tpu.dot_dimension_numbers<[1], [0], [0], [1], [0, 0, 1, 1], [], []>} : vector<16x32xbf16>, vector<32x32xbf16>, vector<16x32xf32> -> vector<16x32xf32>
    %255 = vector.extract_strided_slice %250 {offsets = [0, 0], sizes = [8, 32], strides = [1, 1]} : vector<16x32xf32> to vector<8x32xf32>
    %256 = vector.extract_strided_slice %252 {offsets = [0, 0], sizes = [8, 32], strides = [1, 1]} : vector<16x32xf32> to vector<8x32xf32>
    %257 = vector.extract_strided_slice %254 {offsets = [0, 0], sizes = [8, 32], strides = [1, 1]} : vector<16x32xf32> to vector<8x32xf32>
    %258 = vector.extract_strided_slice %5 {offsets = [0, 0, 0], sizes = [1, 8, 8], strides = [1, 1, 1]} : vector<2x8x8xf32> to vector<1x8x8xf32>
    %259 = vector.shape_cast %258 : vector<1x8x8xf32> to vector<8x8xf32>
    %cst_89 = arith.constant 0.000000e+00 : f32
    %260 = vector.broadcast %cst_89 : f32 to vector<8x8xf32>
    %261 = arith.cmpf one, %259, %260 : vector<8x8xf32>
    %262 = vector.extract_strided_slice %255 {offsets = [0, 0], sizes = [8, 8], strides = [1, 1]} : vector<8x32xf32> to vector<8x8xf32>
    %263 = arith.truncf %262 : vector<8x8xf32> to vector<8x8xbf16>
    %264 = vector.extract_strided_slice %256 {offsets = [0, 0], sizes = [8, 8], strides = [1, 1]} : vector<8x32xf32> to vector<8x8xf32>
    %265 = arith.truncf %264 : vector<8x8xf32> to vector<8x8xbf16>
    %266 = vector.extract_strided_slice %257 {offsets = [0, 0], sizes = [8, 8], strides = [1, 1]} : vector<8x32xf32> to vector<8x8xf32>
    %267 = arith.truncf %266 : vector<8x8xf32> to vector<8x8xbf16>
    %cst_90 = arith.constant dense<0.000000e+00> : vector<8x8xf32>
    %268 = tpu.matmul %263, %265, %cst_90 {dimension_numbers = #tpu.dot_dimension_numbers<[1], [1], [0], [0], [0, 0, 1, 0], [], []>} : vector<8x8xbf16>, vector<8x8xbf16>, vector<8x8xf32> -> vector<8x8xf32>
    %cst_91 = arith.constant -1.000000e+09 : f32
    %269 = vector.broadcast %cst_91 : f32 to vector<8x8xf32>
    %270 = arith.select %261, %268, %269 : vector<8x8xi1>, vector<8x8xf32>
    %cst_92 = arith.constant dense<0xFF800000> : vector<8xf32>
    %271 = vector.multi_reduction <maximumf>, %270, %cst_92 [1] : vector<8x8xf32> to vector<8xf32>
    %272 = vector.shape_cast %271 : vector<8xf32> to vector<8x1xf32>
    %273 = vector.broadcast %272 : vector<8x1xf32> to vector<8x8xf32>
    %274 = arith.subf %270, %273 : vector<8x8xf32>
    %275 = math.exp %274 : vector<8x8xf32>
    %cst_93 = arith.constant dense<0.000000e+00> : vector<8xf32>
    %276 = vector.multi_reduction <add>, %275, %cst_93 [1] : vector<8x8xf32> to vector<8xf32>
    %277 = vector.shape_cast %276 : vector<8xf32> to vector<8x1xf32>
    %278 = tpu.reciprocal %277 {approx = true} : vector<8x1xf32> -> vector<8x1xf32>
    %279 = vector.broadcast %278 : vector<8x1xf32> to vector<8x8xf32>
    %280 = arith.mulf %275, %279 : vector<8x8xf32>
    %281 = arith.truncf %280 : vector<8x8xf32> to vector<8x8xbf16>
    %cst_94 = arith.constant dense<0.000000e+00> : vector<8x8xf32>
    %282 = tpu.matmul %281, %267, %cst_94 {dimension_numbers = #tpu.dot_dimension_numbers<[1], [0], [0], [1], [0, 0, 1, 1], [], []>} : vector<8x8xbf16>, vector<8x8xbf16>, vector<8x8xf32> -> vector<8x8xf32>
    %283 = vector.extract_strided_slice %255 {offsets = [0, 8], sizes = [8, 8], strides = [1, 1]} : vector<8x32xf32> to vector<8x8xf32>
    %284 = arith.truncf %283 : vector<8x8xf32> to vector<8x8xbf16>
    %285 = vector.extract_strided_slice %256 {offsets = [0, 8], sizes = [8, 8], strides = [1, 1]} : vector<8x32xf32> to vector<8x8xf32>
    %286 = arith.truncf %285 : vector<8x8xf32> to vector<8x8xbf16>
    %287 = vector.extract_strided_slice %257 {offsets = [0, 8], sizes = [8, 8], strides = [1, 1]} : vector<8x32xf32> to vector<8x8xf32>
    %288 = arith.truncf %287 : vector<8x8xf32> to vector<8x8xbf16>
    %cst_95 = arith.constant dense<0.000000e+00> : vector<8x8xf32>
    %289 = tpu.matmul %284, %286, %cst_95 {dimension_numbers = #tpu.dot_dimension_numbers<[1], [1], [0], [0], [0, 0, 1, 0], [], []>} : vector<8x8xbf16>, vector<8x8xbf16>, vector<8x8xf32> -> vector<8x8xf32>
    %cst_96 = arith.constant -1.000000e+09 : f32
    %290 = vector.broadcast %cst_96 : f32 to vector<8x8xf32>
    %291 = arith.select %261, %289, %290 : vector<8x8xi1>, vector<8x8xf32>
    %cst_97 = arith.constant dense<0xFF800000> : vector<8xf32>
    %292 = vector.multi_reduction <maximumf>, %291, %cst_97 [1] : vector<8x8xf32> to vector<8xf32>
    %293 = vector.shape_cast %292 : vector<8xf32> to vector<8x1xf32>
    %294 = vector.broadcast %293 : vector<8x1xf32> to vector<8x8xf32>
    %295 = arith.subf %291, %294 : vector<8x8xf32>
    %296 = math.exp %295 : vector<8x8xf32>
    %cst_98 = arith.constant dense<0.000000e+00> : vector<8xf32>
    %297 = vector.multi_reduction <add>, %296, %cst_98 [1] : vector<8x8xf32> to vector<8xf32>
    %298 = vector.shape_cast %297 : vector<8xf32> to vector<8x1xf32>
    %299 = tpu.reciprocal %298 {approx = true} : vector<8x1xf32> -> vector<8x1xf32>
    %300 = vector.broadcast %299 : vector<8x1xf32> to vector<8x8xf32>
    %301 = arith.mulf %296, %300 : vector<8x8xf32>
    %302 = arith.truncf %301 : vector<8x8xf32> to vector<8x8xbf16>
    %cst_99 = arith.constant dense<0.000000e+00> : vector<8x8xf32>
    %303 = tpu.matmul %302, %288, %cst_99 {dimension_numbers = #tpu.dot_dimension_numbers<[1], [0], [0], [1], [0, 0, 1, 1], [], []>} : vector<8x8xbf16>, vector<8x8xbf16>, vector<8x8xf32> -> vector<8x8xf32>
    %304 = vector.extract_strided_slice %255 {offsets = [0, 16], sizes = [8, 8], strides = [1, 1]} : vector<8x32xf32> to vector<8x8xf32>
    %305 = arith.truncf %304 : vector<8x8xf32> to vector<8x8xbf16>
    %306 = vector.extract_strided_slice %256 {offsets = [0, 16], sizes = [8, 8], strides = [1, 1]} : vector<8x32xf32> to vector<8x8xf32>
    %307 = arith.truncf %306 : vector<8x8xf32> to vector<8x8xbf16>
    %308 = vector.extract_strided_slice %257 {offsets = [0, 16], sizes = [8, 8], strides = [1, 1]} : vector<8x32xf32> to vector<8x8xf32>
    %309 = arith.truncf %308 : vector<8x8xf32> to vector<8x8xbf16>
    %cst_100 = arith.constant dense<0.000000e+00> : vector<8x8xf32>
    %310 = tpu.matmul %305, %307, %cst_100 {dimension_numbers = #tpu.dot_dimension_numbers<[1], [1], [0], [0], [0, 0, 1, 0], [], []>} : vector<8x8xbf16>, vector<8x8xbf16>, vector<8x8xf32> -> vector<8x8xf32>
    %cst_101 = arith.constant -1.000000e+09 : f32
    %311 = vector.broadcast %cst_101 : f32 to vector<8x8xf32>
    %312 = arith.select %261, %310, %311 : vector<8x8xi1>, vector<8x8xf32>
    %cst_102 = arith.constant dense<0xFF800000> : vector<8xf32>
    %313 = vector.multi_reduction <maximumf>, %312, %cst_102 [1] : vector<8x8xf32> to vector<8xf32>
    %314 = vector.shape_cast %313 : vector<8xf32> to vector<8x1xf32>
    %315 = vector.broadcast %314 : vector<8x1xf32> to vector<8x8xf32>
    %316 = arith.subf %312, %315 : vector<8x8xf32>
    %317 = math.exp %316 : vector<8x8xf32>
    %cst_103 = arith.constant dense<0.000000e+00> : vector<8xf32>
    %318 = vector.multi_reduction <add>, %317, %cst_103 [1] : vector<8x8xf32> to vector<8xf32>
    %319 = vector.shape_cast %318 : vector<8xf32> to vector<8x1xf32>
    %320 = tpu.reciprocal %319 {approx = true} : vector<8x1xf32> -> vector<8x1xf32>
    %321 = vector.broadcast %320 : vector<8x1xf32> to vector<8x8xf32>
    %322 = arith.mulf %317, %321 : vector<8x8xf32>
    %323 = arith.truncf %322 : vector<8x8xf32> to vector<8x8xbf16>
    %cst_104 = arith.constant dense<0.000000e+00> : vector<8x8xf32>
    %324 = tpu.matmul %323, %309, %cst_104 {dimension_numbers = #tpu.dot_dimension_numbers<[1], [0], [0], [1], [0, 0, 1, 1], [], []>} : vector<8x8xbf16>, vector<8x8xbf16>, vector<8x8xf32> -> vector<8x8xf32>
    %325 = vector.extract_strided_slice %255 {offsets = [0, 24], sizes = [8, 8], strides = [1, 1]} : vector<8x32xf32> to vector<8x8xf32>
    %326 = arith.truncf %325 : vector<8x8xf32> to vector<8x8xbf16>
    %327 = vector.extract_strided_slice %256 {offsets = [0, 24], sizes = [8, 8], strides = [1, 1]} : vector<8x32xf32> to vector<8x8xf32>
    %328 = arith.truncf %327 : vector<8x8xf32> to vector<8x8xbf16>
    %329 = vector.extract_strided_slice %257 {offsets = [0, 24], sizes = [8, 8], strides = [1, 1]} : vector<8x32xf32> to vector<8x8xf32>
    %330 = arith.truncf %329 : vector<8x8xf32> to vector<8x8xbf16>
    %cst_105 = arith.constant dense<0.000000e+00> : vector<8x8xf32>
    %331 = tpu.matmul %326, %328, %cst_105 {dimension_numbers = #tpu.dot_dimension_numbers<[1], [1], [0], [0], [0, 0, 1, 0], [], []>} : vector<8x8xbf16>, vector<8x8xbf16>, vector<8x8xf32> -> vector<8x8xf32>
    %cst_106 = arith.constant -1.000000e+09 : f32
    %332 = vector.broadcast %cst_106 : f32 to vector<8x8xf32>
    %333 = arith.select %261, %331, %332 : vector<8x8xi1>, vector<8x8xf32>
    %cst_107 = arith.constant dense<0xFF800000> : vector<8xf32>
    %334 = vector.multi_reduction <maximumf>, %333, %cst_107 [1] : vector<8x8xf32> to vector<8xf32>
    %335 = vector.shape_cast %334 : vector<8xf32> to vector<8x1xf32>
    %336 = vector.broadcast %335 : vector<8x1xf32> to vector<8x8xf32>
    %337 = arith.subf %333, %336 : vector<8x8xf32>
    %338 = math.exp %337 : vector<8x8xf32>
    %cst_108 = arith.constant dense<0.000000e+00> : vector<8xf32>
    %339 = vector.multi_reduction <add>, %338, %cst_108 [1] : vector<8x8xf32> to vector<8xf32>
    %340 = vector.shape_cast %339 : vector<8xf32> to vector<8x1xf32>
    %341 = tpu.reciprocal %340 {approx = true} : vector<8x1xf32> -> vector<8x1xf32>
    %342 = vector.broadcast %341 : vector<8x1xf32> to vector<8x8xf32>
    %343 = arith.mulf %338, %342 : vector<8x8xf32>
    %344 = arith.truncf %343 : vector<8x8xf32> to vector<8x8xbf16>
    %cst_109 = arith.constant dense<0.000000e+00> : vector<8x8xf32>
    %345 = tpu.matmul %344, %330, %cst_109 {dimension_numbers = #tpu.dot_dimension_numbers<[1], [0], [0], [1], [0, 0, 1, 1], [], []>} : vector<8x8xbf16>, vector<8x8xbf16>, vector<8x8xf32> -> vector<8x8xf32>
    %346 = tpu.concatenate %282, %303, %324, %345 in 1 : vector<8x8xf32>, vector<8x8xf32>, vector<8x8xf32>, vector<8x8xf32> -> vector<8x32xf32>
    %347 = vector.extract_strided_slice %250 {offsets = [8, 0], sizes = [8, 32], strides = [1, 1]} : vector<16x32xf32> to vector<8x32xf32>
    %348 = vector.extract_strided_slice %252 {offsets = [8, 0], sizes = [8, 32], strides = [1, 1]} : vector<16x32xf32> to vector<8x32xf32>
    %349 = vector.extract_strided_slice %254 {offsets = [8, 0], sizes = [8, 32], strides = [1, 1]} : vector<16x32xf32> to vector<8x32xf32>
    %350 = vector.extract_strided_slice %5 {offsets = [1, 0, 0], sizes = [1, 8, 8], strides = [1, 1, 1]} : vector<2x8x8xf32> to vector<1x8x8xf32>
    %351 = vector.shape_cast %350 : vector<1x8x8xf32> to vector<8x8xf32>
    %cst_110 = arith.constant 0.000000e+00 : f32
    %352 = vector.broadcast %cst_110 : f32 to vector<8x8xf32>
    %353 = arith.cmpf one, %351, %352 : vector<8x8xf32>
    %354 = vector.extract_strided_slice %347 {offsets = [0, 0], sizes = [8, 8], strides = [1, 1]} : vector<8x32xf32> to vector<8x8xf32>
    %355 = arith.truncf %354 : vector<8x8xf32> to vector<8x8xbf16>
    %356 = vector.extract_strided_slice %348 {offsets = [0, 0], sizes = [8, 8], strides = [1, 1]} : vector<8x32xf32> to vector<8x8xf32>
    %357 = arith.truncf %356 : vector<8x8xf32> to vector<8x8xbf16>
    %358 = vector.extract_strided_slice %349 {offsets = [0, 0], sizes = [8, 8], strides = [1, 1]} : vector<8x32xf32> to vector<8x8xf32>
    %359 = arith.truncf %358 : vector<8x8xf32> to vector<8x8xbf16>
    %cst_111 = arith.constant dense<0.000000e+00> : vector<8x8xf32>
    %360 = tpu.matmul %355, %357, %cst_111 {dimension_numbers = #tpu.dot_dimension_numbers<[1], [1], [0], [0], [0, 0, 1, 0], [], []>} : vector<8x8xbf16>, vector<8x8xbf16>, vector<8x8xf32> -> vector<8x8xf32>
    %cst_112 = arith.constant -1.000000e+09 : f32
    %361 = vector.broadcast %cst_112 : f32 to vector<8x8xf32>
    %362 = arith.select %353, %360, %361 : vector<8x8xi1>, vector<8x8xf32>
    %cst_113 = arith.constant dense<0xFF800000> : vector<8xf32>
    %363 = vector.multi_reduction <maximumf>, %362, %cst_113 [1] : vector<8x8xf32> to vector<8xf32>
    %364 = vector.shape_cast %363 : vector<8xf32> to vector<8x1xf32>
    %365 = vector.broadcast %364 : vector<8x1xf32> to vector<8x8xf32>
    %366 = arith.subf %362, %365 : vector<8x8xf32>
    %367 = math.exp %366 : vector<8x8xf32>
    %cst_114 = arith.constant dense<0.000000e+00> : vector<8xf32>
    %368 = vector.multi_reduction <add>, %367, %cst_114 [1] : vector<8x8xf32> to vector<8xf32>
    %369 = vector.shape_cast %368 : vector<8xf32> to vector<8x1xf32>
    %370 = tpu.reciprocal %369 {approx = true} : vector<8x1xf32> -> vector<8x1xf32>
    %371 = vector.broadcast %370 : vector<8x1xf32> to vector<8x8xf32>
    %372 = arith.mulf %367, %371 : vector<8x8xf32>
    %373 = arith.truncf %372 : vector<8x8xf32> to vector<8x8xbf16>
    %cst_115 = arith.constant dense<0.000000e+00> : vector<8x8xf32>
    %374 = tpu.matmul %373, %359, %cst_115 {dimension_numbers = #tpu.dot_dimension_numbers<[1], [0], [0], [1], [0, 0, 1, 1], [], []>} : vector<8x8xbf16>, vector<8x8xbf16>, vector<8x8xf32> -> vector<8x8xf32>
    %375 = vector.extract_strided_slice %347 {offsets = [0, 8], sizes = [8, 8], strides = [1, 1]} : vector<8x32xf32> to vector<8x8xf32>
    %376 = arith.truncf %375 : vector<8x8xf32> to vector<8x8xbf16>
    %377 = vector.extract_strided_slice %348 {offsets = [0, 8], sizes = [8, 8], strides = [1, 1]} : vector<8x32xf32> to vector<8x8xf32>
    %378 = arith.truncf %377 : vector<8x8xf32> to vector<8x8xbf16>
    %379 = vector.extract_strided_slice %349 {offsets = [0, 8], sizes = [8, 8], strides = [1, 1]} : vector<8x32xf32> to vector<8x8xf32>
    %380 = arith.truncf %379 : vector<8x8xf32> to vector<8x8xbf16>
    %cst_116 = arith.constant dense<0.000000e+00> : vector<8x8xf32>
    %381 = tpu.matmul %376, %378, %cst_116 {dimension_numbers = #tpu.dot_dimension_numbers<[1], [1], [0], [0], [0, 0, 1, 0], [], []>} : vector<8x8xbf16>, vector<8x8xbf16>, vector<8x8xf32> -> vector<8x8xf32>
    %cst_117 = arith.constant -1.000000e+09 : f32
    %382 = vector.broadcast %cst_117 : f32 to vector<8x8xf32>
    %383 = arith.select %353, %381, %382 : vector<8x8xi1>, vector<8x8xf32>
    %cst_118 = arith.constant dense<0xFF800000> : vector<8xf32>
    %384 = vector.multi_reduction <maximumf>, %383, %cst_118 [1] : vector<8x8xf32> to vector<8xf32>
    %385 = vector.shape_cast %384 : vector<8xf32> to vector<8x1xf32>
    %386 = vector.broadcast %385 : vector<8x1xf32> to vector<8x8xf32>
    %387 = arith.subf %383, %386 : vector<8x8xf32>
    %388 = math.exp %387 : vector<8x8xf32>
    %cst_119 = arith.constant dense<0.000000e+00> : vector<8xf32>
    %389 = vector.multi_reduction <add>, %388, %cst_119 [1] : vector<8x8xf32> to vector<8xf32>
    %390 = vector.shape_cast %389 : vector<8xf32> to vector<8x1xf32>
    %391 = tpu.reciprocal %390 {approx = true} : vector<8x1xf32> -> vector<8x1xf32>
    %392 = vector.broadcast %391 : vector<8x1xf32> to vector<8x8xf32>
    %393 = arith.mulf %388, %392 : vector<8x8xf32>
    %394 = arith.truncf %393 : vector<8x8xf32> to vector<8x8xbf16>
    %cst_120 = arith.constant dense<0.000000e+00> : vector<8x8xf32>
    %395 = tpu.matmul %394, %380, %cst_120 {dimension_numbers = #tpu.dot_dimension_numbers<[1], [0], [0], [1], [0, 0, 1, 1], [], []>} : vector<8x8xbf16>, vector<8x8xbf16>, vector<8x8xf32> -> vector<8x8xf32>
    %396 = vector.extract_strided_slice %347 {offsets = [0, 16], sizes = [8, 8], strides = [1, 1]} : vector<8x32xf32> to vector<8x8xf32>
    %397 = arith.truncf %396 : vector<8x8xf32> to vector<8x8xbf16>
    %398 = vector.extract_strided_slice %348 {offsets = [0, 16], sizes = [8, 8], strides = [1, 1]} : vector<8x32xf32> to vector<8x8xf32>
    %399 = arith.truncf %398 : vector<8x8xf32> to vector<8x8xbf16>
    %400 = vector.extract_strided_slice %349 {offsets = [0, 16], sizes = [8, 8], strides = [1, 1]} : vector<8x32xf32> to vector<8x8xf32>
    %401 = arith.truncf %400 : vector<8x8xf32> to vector<8x8xbf16>
    %cst_121 = arith.constant dense<0.000000e+00> : vector<8x8xf32>
    %402 = tpu.matmul %397, %399, %cst_121 {dimension_numbers = #tpu.dot_dimension_numbers<[1], [1], [0], [0], [0, 0, 1, 0], [], []>} : vector<8x8xbf16>, vector<8x8xbf16>, vector<8x8xf32> -> vector<8x8xf32>
    %cst_122 = arith.constant -1.000000e+09 : f32
    %403 = vector.broadcast %cst_122 : f32 to vector<8x8xf32>
    %404 = arith.select %353, %402, %403 : vector<8x8xi1>, vector<8x8xf32>
    %cst_123 = arith.constant dense<0xFF800000> : vector<8xf32>
    %405 = vector.multi_reduction <maximumf>, %404, %cst_123 [1] : vector<8x8xf32> to vector<8xf32>
    %406 = vector.shape_cast %405 : vector<8xf32> to vector<8x1xf32>
    %407 = vector.broadcast %406 : vector<8x1xf32> to vector<8x8xf32>
    %408 = arith.subf %404, %407 : vector<8x8xf32>
    %409 = math.exp %408 : vector<8x8xf32>
    %cst_124 = arith.constant dense<0.000000e+00> : vector<8xf32>
    %410 = vector.multi_reduction <add>, %409, %cst_124 [1] : vector<8x8xf32> to vector<8xf32>
    %411 = vector.shape_cast %410 : vector<8xf32> to vector<8x1xf32>
    %412 = tpu.reciprocal %411 {approx = true} : vector<8x1xf32> -> vector<8x1xf32>
    %413 = vector.broadcast %412 : vector<8x1xf32> to vector<8x8xf32>
    %414 = arith.mulf %409, %413 : vector<8x8xf32>
    %415 = arith.truncf %414 : vector<8x8xf32> to vector<8x8xbf16>
    %cst_125 = arith.constant dense<0.000000e+00> : vector<8x8xf32>
    %416 = tpu.matmul %415, %401, %cst_125 {dimension_numbers = #tpu.dot_dimension_numbers<[1], [0], [0], [1], [0, 0, 1, 1], [], []>} : vector<8x8xbf16>, vector<8x8xbf16>, vector<8x8xf32> -> vector<8x8xf32>
    %417 = vector.extract_strided_slice %347 {offsets = [0, 24], sizes = [8, 8], strides = [1, 1]} : vector<8x32xf32> to vector<8x8xf32>
    %418 = arith.truncf %417 : vector<8x8xf32> to vector<8x8xbf16>
    %419 = vector.extract_strided_slice %348 {offsets = [0, 24], sizes = [8, 8], strides = [1, 1]} : vector<8x32xf32> to vector<8x8xf32>
    %420 = arith.truncf %419 : vector<8x8xf32> to vector<8x8xbf16>
    %421 = vector.extract_strided_slice %349 {offsets = [0, 24], sizes = [8, 8], strides = [1, 1]} : vector<8x32xf32> to vector<8x8xf32>
    %422 = arith.truncf %421 : vector<8x8xf32> to vector<8x8xbf16>
    %cst_126 = arith.constant dense<0.000000e+00> : vector<8x8xf32>
    %423 = tpu.matmul %418, %420, %cst_126 {dimension_numbers = #tpu.dot_dimension_numbers<[1], [1], [0], [0], [0, 0, 1, 0], [], []>} : vector<8x8xbf16>, vector<8x8xbf16>, vector<8x8xf32> -> vector<8x8xf32>
    %cst_127 = arith.constant -1.000000e+09 : f32
    %424 = vector.broadcast %cst_127 : f32 to vector<8x8xf32>
    %425 = arith.select %353, %423, %424 : vector<8x8xi1>, vector<8x8xf32>
    %cst_128 = arith.constant dense<0xFF800000> : vector<8xf32>
    %426 = vector.multi_reduction <maximumf>, %425, %cst_128 [1] : vector<8x8xf32> to vector<8xf32>
    %427 = vector.shape_cast %426 : vector<8xf32> to vector<8x1xf32>
    %428 = vector.broadcast %427 : vector<8x1xf32> to vector<8x8xf32>
    %429 = arith.subf %425, %428 : vector<8x8xf32>
    %430 = math.exp %429 : vector<8x8xf32>
    %cst_129 = arith.constant dense<0.000000e+00> : vector<8xf32>
    %431 = vector.multi_reduction <add>, %430, %cst_129 [1] : vector<8x8xf32> to vector<8xf32>
    %432 = vector.shape_cast %431 : vector<8xf32> to vector<8x1xf32>
    %433 = tpu.reciprocal %432 {approx = true} : vector<8x1xf32> -> vector<8x1xf32>
    %434 = vector.broadcast %433 : vector<8x1xf32> to vector<8x8xf32>
    %435 = arith.mulf %430, %434 : vector<8x8xf32>
    %436 = arith.truncf %435 : vector<8x8xf32> to vector<8x8xbf16>
    %cst_130 = arith.constant dense<0.000000e+00> : vector<8x8xf32>
    %437 = tpu.matmul %436, %422, %cst_130 {dimension_numbers = #tpu.dot_dimension_numbers<[1], [0], [0], [1], [0, 0, 1, 1], [], []>} : vector<8x8xbf16>, vector<8x8xbf16>, vector<8x8xf32> -> vector<8x8xf32>
    %438 = tpu.concatenate %374, %395, %416, %437 in 1 : vector<8x8xf32>, vector<8x8xf32>, vector<8x8xf32>, vector<8x8xf32> -> vector<8x32xf32>
    %439 = tpu.concatenate %346, %438 in 0 : vector<8x32xf32>, vector<8x32xf32> -> vector<16x32xf32>
    %440 = arith.truncf %439 : vector<16x32xf32> to vector<16x32xbf16>
    %c0_131 = arith.constant 0 : index
    %c0_132 = arith.constant 0 : index
    %441 = vector.load %arg12[%c0_131, %c0_132] : memref<32x32xbf16, #tpu.memory_space<vmem>>, vector<32x32xbf16>
    %cst_133 = arith.constant dense<0.000000e+00> : vector<16x32xf32>
    %442 = tpu.matmul %440, %441, %cst_133 {dimension_numbers = #tpu.dot_dimension_numbers<[1], [0], [0], [1], [0, 0, 1, 1], [], []>} : vector<16x32xbf16>, vector<32x32xbf16>, vector<16x32xf32> -> vector<16x32xf32>
    %443 = arith.addf %224, %442 : vector<16x32xf32>
    %cst_134 = arith.constant dense<0.000000e+00> : vector<16xf32>
    %444 = vector.multi_reduction <add>, %443, %cst_134 [1] : vector<16x32xf32> to vector<16xf32>
    %445 = vector.shape_cast %444 : vector<16xf32> to vector<16x1xf32>
    %cst_135 = arith.constant 3.200000e+01 : f32
    %446 = vector.broadcast %cst_135 : f32 to vector<16x1xf32>
    %447 = arith.divf %445, %446 : vector<16x1xf32>
    %448 = vector.broadcast %447 : vector<16x1xf32> to vector<16x32xf32>
    %449 = arith.subf %443, %448 : vector<16x32xf32>
    %450 = arith.mulf %449, %449 : vector<16x32xf32>
    %cst_136 = arith.constant dense<0.000000e+00> : vector<16xf32>
    %451 = vector.multi_reduction <add>, %450, %cst_136 [1] : vector<16x32xf32> to vector<16xf32>
    %452 = vector.shape_cast %451 : vector<16xf32> to vector<16x1xf32>
    %cst_137 = arith.constant 0.0322580636 : f32
    %453 = vector.broadcast %cst_137 : f32 to vector<16x1xf32>
    %454 = arith.mulf %452, %453 : vector<16x1xf32>
    %455 = math.sqrt %454 : vector<16x1xf32>
    %c0_138 = arith.constant 0 : index
    %c0_139 = arith.constant 0 : index
    %456 = vector.load %arg21[%c0_138, %c0_139] : memref<1x32xf32, #tpu.memory_space<vmem>>, vector<1x32xf32>
    %cst_140 = arith.constant 9.99999997E-7 : f32
    %457 = vector.broadcast %cst_140 : f32 to vector<16x1xf32>
    %458 = arith.addf %455, %457 : vector<16x1xf32>
    %459 = vector.broadcast %458 : vector<16x1xf32> to vector<16x32xf32>
    %460 = arith.divf %449, %459 : vector<16x32xf32>
    %461 = vector.broadcast %456 : vector<1x32xf32> to vector<16x32xf32>
    %462 = arith.mulf %461, %460 : vector<16x32xf32>
    %c0_141 = arith.constant 0 : index
    %c0_142 = arith.constant 0 : index
    %463 = vector.load %arg22[%c0_141, %c0_142] : memref<1x32xf32, #tpu.memory_space<vmem>>, vector<1x32xf32>
    %464 = vector.broadcast %463 : vector<1x32xf32> to vector<16x32xf32>
    %465 = arith.addf %462, %464 : vector<16x32xf32>
    %466 = arith.truncf %465 : vector<16x32xf32> to vector<16x32xbf16>
    %c0_143 = arith.constant 0 : index
    %c0_144 = arith.constant 0 : index
    %467 = vector.load %arg13[%c0_143, %c0_144] : memref<32x64xbf16, #tpu.memory_space<vmem>>, vector<32x64xbf16>
    %cst_145 = arith.constant dense<0.000000e+00> : vector<16x64xf32>
    %468 = tpu.matmul %466, %467, %cst_145 {dimension_numbers = #tpu.dot_dimension_numbers<[1], [0], [0], [1], [0, 0, 1, 1], [], []>} : vector<16x32xbf16>, vector<32x64xbf16>, vector<16x64xf32> -> vector<16x64xf32>
    %c0_146 = arith.constant 0 : index
    %c0_147 = arith.constant 0 : index
    %469 = vector.load %arg14[%c0_146, %c0_147] : memref<1x64xf32, #tpu.memory_space<vmem>>, vector<1x64xf32>
    %470 = vector.broadcast %469 : vector<1x64xf32> to vector<16x64xf32>
    %471 = arith.addf %468, %470 : vector<16x64xf32>
    %cst_148 = arith.constant 0.000000e+00 : f32
    %472 = vector.broadcast %cst_148 : f32 to vector<16x64xf32>
    %473 = arith.maximumf %471, %472 : vector<16x64xf32>
    %474 = arith.truncf %473 : vector<16x64xf32> to vector<16x64xbf16>
    %c0_149 = arith.constant 0 : index
    %c0_150 = arith.constant 0 : index
    %475 = vector.load %arg15[%c0_149, %c0_150] : memref<64x32xbf16, #tpu.memory_space<vmem>>, vector<64x32xbf16>
    %cst_151 = arith.constant dense<0.000000e+00> : vector<16x32xf32>
    %476 = tpu.matmul %474, %475, %cst_151 {dimension_numbers = #tpu.dot_dimension_numbers<[1], [0], [0], [1], [0, 0, 1, 1], [], []>} : vector<16x64xbf16>, vector<64x32xbf16>, vector<16x32xf32> -> vector<16x32xf32>
    %c0_152 = arith.constant 0 : index
    %c0_153 = arith.constant 0 : index
    %477 = vector.load %arg16[%c0_152, %c0_153] : memref<1x32xf32, #tpu.memory_space<vmem>>, vector<1x32xf32>
    %478 = vector.broadcast %477 : vector<1x32xf32> to vector<16x32xf32>
    %479 = arith.addf %476, %478 : vector<16x32xf32>
    %480 = arith.addf %443, %479 : vector<16x32xf32>
    %c0_154 = arith.constant 0 : index
    %c0_155 = arith.constant 0 : index
    %481 = vector.load %arg23[%c0_154, %c0_155] : memref<16x32xf32, #tpu.memory_space<vmem>>, vector<16x32xf32>
    tpu.vector_store %arg23[%c0_154, %c0_155], %480 {strides = array<i32>} : memref<16x32xf32, #tpu.memory_space<vmem>>, vector<16x32xf32>,
    return
  }
  func.func @transform_0(%arg0: i32) -> (i32, i32) {
    %c0_i32 = arith.constant 0 : i32
    %c0_i32_0 = arith.constant 0 : i32
    return %arg0, %c0_i32 : i32, i32
  }
  func.func @transform_1(%arg0: i32) -> (i32, i32) {
    %c0_i32 = arith.constant 0 : i32
    %c0_i32_0 = arith.constant 0 : i32
    return %arg0, %c0_i32 : i32, i32
  }
  func.func @transform_2(%arg0: i32) -> (i32, i32, i32) {
    %c0_i32 = arith.constant 0 : i32
    %c0_i32_0 = arith.constant 0 : i32
    %c0_i32_1 = arith.constant 0 : i32
    return %arg0, %c0_i32, %c0_i32_0 : i32, i32, i32
  }
  func.func @transform_3(%arg0: i32) -> (i32, i32, i32) {
    %c0_i32 = arith.constant 0 : i32
    %c0_i32_0 = arith.constant 0 : i32
    %c0_i32_1 = arith.constant 0 : i32
    return %arg0, %c0_i32, %c0_i32_0 : i32, i32, i32
  }
  func.func @transform_4(%arg0: i32) -> (i32, i32) {
    %c0_i32 = arith.constant 0 : i32
    %c0_i32_0 = arith.constant 0 : i32
    %c0_i32_1 = arith.constant 0 : i32
    return %c0_i32, %c0_i32_0 : i32, i32
  }
  func.func @transform_5(%arg0: i32) -> (i32, i32) {
    %c0_i32 = arith.constant 0 : i32
    %c0_i32_0 = arith.constant 0 : i32
    %c0_i32_1 = arith.constant 0 : i32
    return %c0_i32, %c0_i32_0 : i32, i32
  }
  func.func @transform_6(%arg0: i32) -> (i32, i32) {
    %c0_i32 = arith.constant 0 : i32
    %c0_i32_0 = arith.constant 0 : i32
    %c0_i32_1 = arith.constant 0 : i32
    return %c0_i32, %c0_i32_0 : i32, i32
  }
  func.func @transform_7(%arg0: i32) -> (i32, i32) {
    %c0_i32 = arith.constant 0 : i32
    %c0_i32_0 = arith.constant 0 : i32
    %c0_i32_1 = arith.constant 0 : i32
    return %c0_i32, %c0_i32_0 : i32, i32
  }
  func.func @transform_8(%arg0: i32) -> (i32, i32) {
    %c0_i32 = arith.constant 0 : i32
    %c0_i32_0 = arith.constant 0 : i32
    %c0_i32_1 = arith.constant 0 : i32
    return %c0_i32, %c0_i32_0 : i32, i32
  }
  func.func @transform_9(%arg0: i32) -> (i32, i32) {
    %c0_i32 = arith.constant 0 : i32
    %c0_i32_0 = arith.constant 0 : i32
    %c0_i32_1 = arith.constant 0 : i32
    return %c0_i32, %c0_i32_0 : i32, i32
  }
  func.func @transform_10(%arg0: i32) -> (i32, i32) {
    %c0_i32 = arith.constant 0 : i32
    %c0_i32_0 = arith.constant 0 : i32
    %c0_i32_1 = arith.constant 0 : i32
    return %c0_i32, %c0_i32_0 : i32, i32
  }
  func.func @transform_11(%arg0: i32) -> (i32, i32) {
    %c0_i32 = arith.constant 0 : i32
    %c0_i32_0 = arith.constant 0 : i32
    %c0_i32_1 = arith.constant 0 : i32
    return %c0_i32, %c0_i32_0 : i32, i32
  }
  func.func @transform_12(%arg0: i32) -> (i32, i32) {
    %c0_i32 = arith.constant 0 : i32
    %c0_i32_0 = arith.constant 0 : i32
    %c0_i32_1 = arith.constant 0 : i32
    return %c0_i32, %c0_i32_0 : i32, i32
  }
  func.func @transform_13(%arg0: i32) -> (i32, i32) {
    %c0_i32 = arith.constant 0 : i32
    %c0_i32_0 = arith.constant 0 : i32
    %c0_i32_1 = arith.constant 0 : i32
    return %c0_i32, %c0_i32_0 : i32, i32
  }
  func.func @transform_14(%arg0: i32) -> (i32, i32) {
    %c0_i32 = arith.constant 0 : i32
    %c0_i32_0 = arith.constant 0 : i32
    %c0_i32_1 = arith.constant 0 : i32
    return %c0_i32, %c0_i32_0 : i32, i32
  }
  func.func @transform_15(%arg0: i32) -> (i32, i32) {
    %c0_i32 = arith.constant 0 : i32
    %c0_i32_0 = arith.constant 0 : i32
    %c0_i32_1 = arith.constant 0 : i32
    return %c0_i32, %c0_i32_0 : i32, i32
  }
  func.func @transform_16(%arg0: i32) -> (i32, i32) {
    %c0_i32 = arith.constant 0 : i32
    %c0_i32_0 = arith.constant 0 : i32
    %c0_i32_1 = arith.constant 0 : i32
    return %c0_i32, %c0_i32_0 : i32, i32
  }
  func.func @transform_17(%arg0: i32) -> (i32, i32) {
    %c0_i32 = arith.constant 0 : i32
    %c0_i32_0 = arith.constant 0 : i32
    %c0_i32_1 = arith.constant 0 : i32
    return %c0_i32, %c0_i32_0 : i32, i32
  }
  func.func @transform_18(%arg0: i32) -> (i32, i32) {
    %c0_i32 = arith.constant 0 : i32
    %c0_i32_0 = arith.constant 0 : i32
    %c0_i32_1 = arith.constant 0 : i32
    return %c0_i32, %c0_i32_0 : i32, i32
  }
  func.func @transform_19(%arg0: i32) -> (i32, i32) {
    %c0_i32 = arith.constant 0 : i32
    %c0_i32_0 = arith.constant 0 : i32
    %c0_i32_1 = arith.constant 0 : i32
    return %c0_i32, %c0_i32_0 : i32, i32
  }
  func.func @transform_20(%arg0: i32) -> (i32, i32) {
    %c0_i32 = arith.constant 0 : i32
    %c0_i32_0 = arith.constant 0 : i32
    %c0_i32_1 = arith.constant 0 : i32
    return %c0_i32, %c0_i32_0 : i32, i32
  }
  func.func @transform_21(%arg0: i32) -> (i32, i32) {
    %c0_i32 = arith.constant 0 : i32
    %c0_i32_0 = arith.constant 0 : i32
    %c0_i32_1 = arith.constant 0 : i32
    return %c0_i32, %c0_i32_0 : i32, i32
  }
  func.func @transform_22(%arg0: i32) -> (i32, i32) {
    %c0_i32 = arith.constant 0 : i32
    %c0_i32_0 = arith.constant 0 : i32
    return %arg0, %c0_i32 : i32, i32
  }
}

</mosaic_0001>

<llo_original>
// kernel: tpu_custom_call.1
$region0: #{tpu_custom_call.1}
  #allocation0 [shape = 'u32[]', space=smem, size = 0x4, offset = 0x4, fixed_abs, tag = 'smem constant byte address 0x4 - core index']
  #allocation1 [shape = 'u32[144,128]{1,0:T(1,128)}', space=vmem, size = 0x12000, scoped, tag = 'internal scratch']
  %s0 = inlined_call_operand.vmem [shape: f32[16,32], index: 0, kind: input, shape index: {}]
  %s1 = inlined_call_operand.vmem [shape: f32[16,32], index: 1, kind: input, shape index: {}]
  %s2 = inlined_call_operand.hbm [shape: s8[2,8,8], index: 2, kind: input, shape index: {}]
  %s3 = inlined_call_operand.vmem [shape: s8[2,8,8], index: 3, kind: input, shape index: {}]
  %s4 = inlined_call_operand.vmem [shape: bf16[32,32], index: 4, kind: input, shape index: {}]
  %s5 = inlined_call_operand.hbm [shape: bf16[32,32], index: 5, kind: input, shape index: {}]
  %s6 = inlined_call_operand.hbm [shape: bf16[32,32], index: 6, kind: input, shape index: {}]
  %s7 = inlined_call_operand.hbm [shape: bf16[32,32], index: 7, kind: input, shape index: {}]
  %s8 = inlined_call_operand.hbm [shape: bf16[32,32], index: 8, kind: input, shape index: {}]
  %s9 = inlined_call_operand.hbm [shape: bf16[32,32], index: 9, kind: input, shape index: {}]
  %s10 = inlined_call_operand.hbm [shape: bf16[32,32], index: 10, kind: input, shape index: {}]
  %s11 = inlined_call_operand.hbm [shape: bf16[32,32], index: 11, kind: input, shape index: {}]
  %s12 = inlined_call_operand.hbm [shape: bf16[32,64], index: 12, kind: input, shape index: {}]
  %s13 = inlined_call_operand.vmem [shape: f32[1,64], index: 13, kind: input, shape index: {}]
  %s14 = inlined_call_operand.vmem [shape: bf16[64,32], index: 14, kind: input, shape index: {}]
  %s15 = inlined_call_operand.vmem [shape: f32[1,32], index: 15, kind: input, shape index: {}]
  %s16 = inlined_call_operand.vmem [shape: f32[1,32], index: 16, kind: input, shape index: {}]
  %s17 = inlined_call_operand.vmem [shape: f32[1,32], index: 17, kind: input, shape index: {}]
  %s18 = inlined_call_operand.vmem [shape: f32[1,32], index: 18, kind: input, shape index: {}]
  %s19 = inlined_call_operand.vmem [shape: f32[1,32], index: 19, kind: input, shape index: {}]
  %s20 = inlined_call_operand.vmem [shape: f32[1,32], index: 20, kind: input, shape index: {}]
  %s21 = inlined_call_operand.vmem [shape: f32[1,32], index: 21, kind: input, shape index: {}]
  %s22 = inlined_call_operand.hbm [shape: f32[16,32], index: 22, kind: output, shape index: {}]
  %s23 = sld [smem:[#allocation0]]
  $region134: #{tpu_custom_call.1} parent=0
    _
  %s25 = ssub.s32 1, %s23
  %s26 = scalar_select 0, %s25, %s23
  $region1: #{tpu_custom_call.1} parent=0
    #allocation2 [shape = 'u8[2048]{0}', space=vmem, size = 0x800, scoped, tag = 'input window, operand 2, single buffered']
    #allocation3 [shape = 's32[1]{0}', space=sflag, size = 0x4, scoped, tag = 'scoped memory for tpu_custom_call.1']
    #allocation4 [shape = 's32[1]{0}', space=sflag, size = 0x4, scoped, tag = 'scoped memory for tpu_custom_call.1']
    #allocation5 [shape = 'u8[8192]{0}', space=vmem, size = 0x2000, scoped, tag = 'input window, operand 5, single buffered']
    #allocation6 [shape = 's32[1]{0}', space=sflag, size = 0x4, scoped, tag = 'scoped memory for tpu_custom_call.1']
    #allocation7 [shape = 'u8[8192]{0}', space=vmem, size = 0x2000, scoped, tag = 'input window, operand 6, single buffered']
    #allocation8 [shape = 'u8[8192]{0}', space=vmem, size = 0x2000, scoped, tag = 'input window, operand 7, single buffered']
    #allocation9 [shape = 's32[1]{0}', space=sflag, size = 0x4, scoped, tag = 'scoped memory for tpu_custom_call.1']
    #allocation10 [shape = 'u8[8192]{0}', space=vmem, size = 0x2000, scoped, tag = 'input window, operand 8, single buffered']
    #allocation11 [shape = 'u8[8192]{0}', space=vmem, size = 0x2000, scoped, tag = 'input window, operand 9, single buffered']
    #allocation12 [shape = 's32[1]{0}', space=sflag, size = 0x4, scoped, tag = 'scoped memory for tpu_custom_call.1']
    #allocation13 [shape = 'u8[8192]{0}', space=vmem, size = 0x2000, scoped, tag = 'input window, operand 10, single buffered']
    #allocation14 [shape = 'u8[8192]{0}', space=vmem, size = 0x2000, scoped, tag = 'input window, operand 11, single buffered']
    #allocation15 [shape = 's32[1]{0}', space=sflag, size = 0x4, scoped, tag = 'scoped memory for tpu_custom_call.1']
    #allocation16 [shape = 'u8[8192]{0}', space=vmem, size = 0x2000, scoped, tag = 'input window, operand 12, single buffered']
    #allocation17 [shape = 'u8[8192]{0}', space=vmem, size = 0x2000, scoped, tag = 'output window, operand 0, single buffered']
    %27 = vsyncpa [#allocation3], 0
    %28 = vsyncpa [#allocation6], 0
    %29 = vsyncpa [#allocation9], 0
    %30 = vsyncpa [#allocation12], 0
    %31 = vsyncpa [#allocation15], 0
    %32 = vsyncpa [#allocation4], 0
    // Predicated region
    $region2: #{tpu_custom_call.1} parent=1 // pred_check
      _
    $region3: #{tpu_custom_call.1} parent=1 // pred_check_branch
      %34 = sbr.rel (0) target = $region5
    $region4: #{tpu_custom_call.1} parent=1 // pred_region
      _
    $region5: #{tpu_custom_call.1} parent=1 // pred_fallthru
      _
    // Predicated region
    $region6: #{tpu_custom_call.1} parent=1 // pred_check
      _
    $region7: #{tpu_custom_call.1} parent=1 // pred_check_branch
      %36 = sbr.rel (0) target = $region9
    $region8: #{tpu_custom_call.1} parent=1 // pred_region
      _
    $region9: #{tpu_custom_call.1} parent=1 // pred_fallthru
      _
    // Predicated region
    $region10: #{tpu_custom_call.1} parent=1 // pred_check
      _
    $region11: #{tpu_custom_call.1} parent=1 // pred_check_branch
      %38 = sbr.rel (0) target = $region13
    $region12: #{tpu_custom_call.1} parent=1 // pred_region
      %s40 = ssub.s32 64, 64
      %41 = vsyncadd [#allocation3], %s40
      %s42 = sshll.u32 [#allocation2], 4
      %s43 = int_to_ptr.vmem [resolvable:$true] %s42
      %48 = dma.hbm_to_vmem [thread:$0]  %s2, 64, %s43, [#allocation3], 32, 32, 2
    $region13: #{tpu_custom_call.1} parent=1 // pred_fallthru
      _
    // Predicated region
    $region14: #{tpu_custom_call.1} parent=1 // pred_check
      _
    $region15: #{tpu_custom_call.1} parent=1 // pred_check_branch
      %50 = sbr.rel (0) target = $region17
    $region16: #{tpu_custom_call.1} parent=1 // pred_region
      _
    $region17: #{tpu_custom_call.1} parent=1 // pred_fallthru
      _
    // Predicated region
    $region18: #{tpu_custom_call.1} parent=1 // pred_check
      _
    $region19: #{tpu_custom_call.1} parent=1 // pred_check_branch
      %52 = sbr.rel (0) target = $region21
    $region20: #{tpu_custom_call.1} parent=1 // pred_region
      _
    $region21: #{tpu_custom_call.1} parent=1 // pred_fallthru
      _
    // Predicated region
    $region22: #{tpu_custom_call.1} parent=1 // pred_check
      _
    $region23: #{tpu_custom_call.1} parent=1 // pred_check_branch
      %54 = sbr.rel (0) target = $region25
    $region24: #{tpu_custom_call.1} parent=1 // pred_region
      %s56 = ssub.s32 256, 256
      %57 = vsyncadd [#allocation6], %s56
      %s58 = sshll.u32 [#allocation5], 4
      %s59 = int_to_ptr.vmem [resolvable:$true] %s58
      %64 = dma.hbm_to_vmem [thread:$0]  %s5, 256, %s59, [#allocation6], 64, 64, 4
    $region25: #{tpu_custom_call.1} parent=1 // pred_fallthru
      _
    // Predicated region
    $region26: #{tpu_custom_call.1} parent=1 // pred_check
      _
    $region27: #{tpu_custom_call.1} parent=1 // pred_check_branch
      %66 = sbr.rel (0) target = $region29
    $region28: #{tpu_custom_call.1} parent=1 // pred_region
      %s68 = ssub.s32 256, 256
      %69 = vsyncadd [#allocation6], %s68
      %s70 = sshll.u32 [#allocation7], 4
      %s71 = int_to_ptr.vmem [resolvable:$true] %s70
      %76 = dma.hbm_to_vmem [thread:$0]  %s6, 256, %s71, [#allocation6], 64, 64, 4
    $region29: #{tpu_custom_call.1} parent=1 // pred_fallthru
      _
    // Predicated region
    $region30: #{tpu_custom_call.1} parent=1 // pred_check
      _
    $region31: #{tpu_custom_call.1} parent=1 // pred_check_branch
      %78 = sbr.rel (0) target = $region33
    $region32: #{tpu_custom_call.1} parent=1 // pred_region
      %s80 = ssub.s32 256, 256
      %81 = vsyncadd [#allocation9], %s80
      %s82 = sshll.u32 [#allocation8], 4
      %s83 = int_to_ptr.vmem [resolvable:$true] %s82
      %88 = dma.hbm_to_vmem [thread:$0]  %s7, 256, %s83, [#allocation9], 64, 64, 4
    $region33: #{tpu_custom_call.1} parent=1 // pred_fallthru
      _
    // Predicated region
    $region34: #{tpu_custom_call.1} parent=1 // pred_check
      _
    $region35: #{tpu_custom_call.1} parent=1 // pred_check_branch
      %90 = sbr.rel (0) target = $region37
    $region36: #{tpu_custom_call.1} parent=1 // pred_region
      %s92 = ssub.s32 256, 256
      %93 = vsyncadd [#allocation9], %s92
      %s94 = sshll.u32 [#allocation10], 4
      %s95 = int_to_ptr.vmem [resolvable:$true] %s94
      %100 = dma.hbm_to_vmem [thread:$0]  %s8, 256, %s95, [#allocation9], 64, 64, 4
    $region37: #{tpu_custom_call.1} parent=1 // pred_fallthru
      _
    // Predicated region
    $region38: #{tpu_custom_call.1} parent=1 // pred_check
      _
    $region39: #{tpu_custom_call.1} parent=1 // pred_check_branch
      %102 = sbr.rel (0) target = $region41
    $region40: #{tpu_custom_call.1} parent=1 // pred_region
      %s104 = ssub.s32 256, 256
      %105 = vsyncadd [#allocation12], %s104
      %s106 = sshll.u32 [#allocation11], 4
      %s107 = int_to_ptr.vmem [resolvable:$true] %s106
      %112 = dma.hbm_to_vmem [thread:$0]  %s9, 256, %s107, [#allocation12], 64, 64, 4
    $region41: #{tpu_custom_call.1} parent=1 // pred_fallthru
      _
    // Predicated region
    $region42: #{tpu_custom_call.1} parent=1 // pred_check
      _
    $region43: #{tpu_custom_call.1} parent=1 // pred_check_branch
      %114 = sbr.rel (0) target = $region45
    $region44: #{tpu_custom_call.1} parent=1 // pred_region
      %s116 = ssub.s32 256, 256
      %117 = vsyncadd [#allocation12], %s116
      %s118 = sshll.u32 [#allocation13], 4
      %s119 = int_to_ptr.vmem [resolvable:$true] %s118
      %124 = dma.hbm_to_vmem [thread:$0]  %s10, 256, %s119, [#allocation12], 64, 64, 4
    $region45: #{tpu_custom_call.1} parent=1 // pred_fallthru
      _
    // Predicated region
    $region46: #{tpu_custom_call.1} parent=1 // pred_check
      _
    $region47: #{tpu_custom_call.1} parent=1 // pred_check_branch
      %126 = sbr.rel (0) target = $region49
    $region48: #{tpu_custom_call.1} parent=1 // pred_region
      %s128 = ssub.s32 256, 256
      %129 = vsyncadd [#allocation15], %s128
      %s130 = sshll.u32 [#allocation14], 4
      %s131 = int_to_ptr.vmem [resolvable:$true] %s130
      %136 = dma.hbm_to_vmem [thread:$0]  %s11, 256, %s131, [#allocation15], 64, 64, 4
    $region49: #{tpu_custom_call.1} parent=1 // pred_fallthru
      _
    // Predicated region
    $region50: #{tpu_custom_call.1} parent=1 // pred_check
      _
    $region51: #{tpu_custom_call.1} parent=1 // pred_check_branch
      %138 = sbr.rel (0) target = $region53
    $region52: #{tpu_custom_call.1} parent=1 // pred_region
      %s140 = ssub.s32 256, 256
      %141 = vsyncadd [#allocation15], %s140
      %s142 = sshll.u32 [#allocation16], 4
      %s143 = int_to_ptr.vmem [resolvable:$true] %s142
      %148 = dma.hbm_to_vmem [thread:$0]  %s12, 256, %s143, [#allocation15], 64, 64, 4
    $region53: #{tpu_custom_call.1} parent=1 // pred_fallthru
      _
    // Predicated region
    $region54: #{tpu_custom_call.1} parent=1 // pred_check
      _
    $region55: #{tpu_custom_call.1} parent=1 // pred_check_branch
      %150 = sbr.rel (0) target = $region57
    $region56: #{tpu_custom_call.1} parent=1 // pred_region
      _
    $region57: #{tpu_custom_call.1} parent=1 // pred_fallthru
      _
    // Predicated region
    $region58: #{tpu_custom_call.1} parent=1 // pred_check
      _
    $region59: #{tpu_custom_call.1} parent=1 // pred_check_branch
      %152 = sbr.rel (0) target = $region61
    $region60: #{tpu_custom_call.1} parent=1 // pred_region
      _
    $region61: #{tpu_custom_call.1} parent=1 // pred_fallthru
      _
    // Predicated region
    $region62: #{tpu_custom_call.1} parent=1 // pred_check
      _
    $region63: #{tpu_custom_call.1} parent=1 // pred_check_branch
      %154 = sbr.rel (0) target = $region65
    $region64: #{tpu_custom_call.1} parent=1 // pred_region
      _
    $region65: #{tpu_custom_call.1} parent=1 // pred_fallthru
      _
    // Predicated region
    $region66: #{tpu_custom_call.1} parent=1 // pred_check
      _
    $region67: #{tpu_custom_call.1} parent=1 // pred_check_branch
      %156 = sbr.rel (0) target = $region69
    $region68: #{tpu_custom_call.1} parent=1 // pred_region
      _
    $region69: #{tpu_custom_call.1} parent=1 // pred_fallthru
      _
    // Predicated region
    $region70: #{tpu_custom_call.1} parent=1 // pred_check
      _
    $region71: #{tpu_custom_call.1} parent=1 // pred_check_branch
      %158 = sbr.rel (0) target = $region73
    $region72: #{tpu_custom_call.1} parent=1 // pred_region
      _
    $region73: #{tpu_custom_call.1} parent=1 // pred_fallthru
      _
    // Predicated region
    $region74: #{tpu_custom_call.1} parent=1 // pred_check
      _
    $region75: #{tpu_custom_call.1} parent=1 // pred_check_branch
      %160 = sbr.rel (0) target = $region77
    $region76: #{tpu_custom_call.1} parent=1 // pred_region
      _
    $region77: #{tpu_custom_call.1} parent=1 // pred_fallthru
      _
    // Predicated region
    $region78: #{tpu_custom_call.1} parent=1 // pred_check
      _
    $region79: #{tpu_custom_call.1} parent=1 // pred_check_branch
      %162 = sbr.rel (0) target = $region81
    $region80: #{tpu_custom_call.1} parent=1 // pred_region
      _
    $region81: #{tpu_custom_call.1} parent=1 // pred_fallthru
      _
    // Predicated region
    $region82: #{tpu_custom_call.1} parent=1 // pred_check
      _
    $region83: #{tpu_custom_call.1} parent=1 // pred_check_branch
      %164 = sbr.rel (0) target = $region85
    $region84: #{tpu_custom_call.1} parent=1 // pred_region
      _
    $region85: #{tpu_custom_call.1} parent=1 // pred_fallthru
      _
    // Predicated region
    $region86: #{tpu_custom_call.1} parent=1 // pred_check
      _
    $region87: #{tpu_custom_call.1} parent=1 // pred_check_branch
      %166 = sbr.rel (0) target = $region89
    $region88: #{tpu_custom_call.1} parent=1 // pred_region
      _
    $region89: #{tpu_custom_call.1} parent=1 // pred_fallthru
      _
    // Predicated region
    $region90: #{tpu_custom_call.1} parent=1 // pred_check
      _
    $region91: #{tpu_custom_call.1} parent=1 // pred_check_branch
      %168 = sbr.rel (0) target = $region93
    $region92: #{tpu_custom_call.1} parent=1 // pred_region
      %169 = dma.done [#allocation3], 64
    $region93: #{tpu_custom_call.1} parent=1 // pred_fallthru
      _
    // Predicated region
    $region94: #{tpu_custom_call.1} parent=1 // pred_check
      _
    $region95: #{tpu_custom_call.1} parent=1 // pred_check_branch
      %171 = sbr.rel (0) target = $region97
    $region96: #{tpu_custom_call.1} parent=1 // pred_region
      %172 = dma.done [#allocation6], 256
    $region97: #{tpu_custom_call.1} parent=1 // pred_fallthru
      _
    // Predicated region
    $region98: #{tpu_custom_call.1} parent=1 // pred_check
      _
    $region99: #{tpu_custom_call.1} parent=1 // pred_check_branch
      %174 = sbr.rel (0) target = $region101
    $region100: #{tpu_custom_call.1} parent=1 // pred_region
      %175 = dma.done [#allocation6], 256
    $region101: #{tpu_custom_call.1} parent=1 // pred_fallthru
      _
    // Predicated region
    $region102: #{tpu_custom_call.1} parent=1 // pred_check
      _
    $region103: #{tpu_custom_call.1} parent=1 // pred_check_branch
      %177 = sbr.rel (0) target = $region105
    $region104: #{tpu_custom_call.1} parent=1 // pred_region
      %178 = dma.done [#allocation9], 256
    $region105: #{tpu_custom_call.1} parent=1 // pred_fallthru
      _
    // Predicated region
    $region106: #{tpu_custom_call.1} parent=1 // pred_check
      _
    $region107: #{tpu_custom_call.1} parent=1 // pred_check_branch
      %180 = sbr.rel (0) target = $region109
    $region108: #{tpu_custom_call.1} parent=1 // pred_region
      %181 = dma.done [#allocation9], 256
    $region109: #{tpu_custom_call.1} parent=1 // pred_fallthru
      _
    // Predicated region
    $region110: #{tpu_custom_call.1} parent=1 // pred_check
      _
    $region111: #{tpu_custom_call.1} parent=1 // pred_check_branch
      %183 = sbr.rel (0) target = $region113
    $region112: #{tpu_custom_call.1} parent=1 // pred_region
      %184 = dma.done [#allocation12], 256
    $region113: #{tpu_custom_call.1} parent=1 // pred_fallthru
      _
    // Predicated region
    $region114: #{tpu_custom_call.1} parent=1 // pred_check
      _
    $region115: #{tpu_custom_call.1} parent=1 // pred_check_branch
      %186 = sbr.rel (0) target = $region117
    $region116: #{tpu_custom_call.1} parent=1 // pred_region
      %187 = dma.done [#allocation12], 256
    $region117: #{tpu_custom_call.1} parent=1 // pred_fallthru
      _
    // Predicated region
    $region118: #{tpu_custom_call.1} parent=1 // pred_check
      _
    $region119: #{tpu_custom_call.1} parent=1 // pred_check_branch
      %189 = sbr.rel (0) target = $region121
    $region120: #{tpu_custom_call.1} parent=1 // pred_region
      %190 = dma.done [#allocation15], 256
    $region121: #{tpu_custom_call.1} parent=1 // pred_fallthru
      _
    // Predicated region
    $region122: #{tpu_custom_call.1} parent=1 // pred_check
      _
    $region123: #{tpu_custom_call.1} parent=1 // pred_check_branch
      %192 = sbr.rel (0) target = $region125
    $region124: #{tpu_custom_call.1} parent=1 // pred_region
      %193 = dma.done [#allocation15], 256
    $region125: #{tpu_custom_call.1} parent=1 // pred_fallthru
      _
    %v195 = vld [vmem:[%s0] sm:$0xff]
    %v196 = vld [vmem:[%s0 + $0x8] sm:$0xff]
    %v197 = vld [vmem:[%s1] sm:$0xff]
    %v198 = vld [vmem:[%s1 + $0x8] sm:$0xff]
    %v199 = vld [vmem:[#allocation2] sm:$0x3]
    %v200 = vld [vmem:[#allocation2 + $0x2] sm:$0x3]
    %v201 = vunpack.c.0.s8 %v199
    %v202 = vunpack.c.0.s8 %v200
    %v203 = vcvt.s32.f32 %v201
    %v204 = vcvt.s32.f32 %v202
    %v205 = vld [vmem:[%s3] sm:$0x3]
    %v206 = vld [vmem:[%s3 + $0x2] sm:$0x3]
    %v207 = vunpack.c.0.s8 %v205
    %v208 = vunpack.c.0.s8 %v206
    %v209 = vcvt.s32.f32 %v207
    %v210 = vcvt.s32.f32 %v208
    %vm211 = vcmask 261120
    %v212 = vsel %vm211, %v195, 0.0
    %213 = vadd.xlane.f32.xlu0 %v212
    %v214 = vpop.xlane.xlu0 %213
    %v215 = vsel %vm211, %v196, 0.0
    %216 = vadd.xlane.f32.xlu0 %v215
    %v217 = vpop.xlane.xlu0 %216
    %v218 = vrcp.pop 32.0
    %v219 = vmul.f32 %v214, %v218
    %v220 = vmul.f32 %v217, %v218
    %v221 = vsub.f32 %v195, %v219
    %v222 = vsub.f32 %v196, %v220
    %v223 = vmul.f32 %v221, %v221
    %v224 = vmul.f32 %v222, %v222
    %v225 = vsel %vm211, %v223, 0.0
    %226 = vadd.xlane.f32.xlu0 %v225
    %v227 = vpop.xlane.xlu0 %226
    %v228 = vsel %vm211, %v224, 0.0
    %229 = vadd.xlane.f32.xlu0 %v228
    %v230 = vpop.xlane.xlu0 %229
    %v231 = vmul.f32 %v227, 0.032258064
    %v232 = vmul.f32 %v230, 0.032258064
    %v233 = vrsqrt.pop %v231
    %v234 = vmul.f32 %v231, %v233
    %vm235 = vcmp.eq.f32.partialorder %v231, inf
    %v236 = vsel %vm235, %v231, %v234
    %vm237 = vcmp.eq.f32.partialorder %v231, 0.0
    %v238 = vand.u32 %v231, 2147483648
    %v239 = vsel %vm237, %v238, %v236
    %v240 = vrsqrt.pop %v232
    %v241 = vmul.f32 %v232, %v240
    %vm242 = vcmp.eq.f32.partialorder %v232, inf
    %v243 = vsel %vm242, %v232, %v241
    %vm244 = vcmp.eq.f32.partialorder %v232, 0.0
    %v245 = vand.u32 %v232, 2147483648
    %v246 = vsel %vm244, %v245, %v243
    %v247 = vld [vmem:[%s16] sm:$0x1]
    %v248 = vadd.f32 %v239, 1e-06
    %v249 = vadd.f32 %v246, 1e-06
    %v250 = vrcp.pop %v248
    %v251 = vmul.f32 %v221, %v250
    %v252 = vrcp.pop %v249
    %v253 = vmul.f32 %v222, %v252
    %v255 = vlaneseq
    %v256 = vshrl.u32 %v255, 7
    %v257 = vsub.s32 0, %v256
    %v258 = vrot.slane %v247, %v257
    %v260 = vmul.f32 %v258, %v251
    %v261 = vmul.f32 %v258, %v253
    %v262 = vld [vmem:[%s17] sm:$0x1]
    %v264 = vlaneseq
    %v265 = vshrl.u32 %v264, 7
    %v266 = vsub.s32 0, %v265
    %v267 = vrot.slane %v262, %v266
    %v269 = vadd.f32 %v260, %v267
    %v270 = vadd.f32 %v261, %v267
    %v271 = vpack.c.bf16 %v270, %v269
    %v272 = vld [vmem:[%s4] sm:$0xf]
    %v273 = vld [vmem:[%s4 + $0x4] sm:$0xf]
    %v274 = vld [vmem:[%s4 + $0x8] sm:$0xf]
    %v275 = vld [vmem:[%s4 + $0xc] sm:$0xf]
    %v280 = vunpack.c.l.b16 %v272
    %v281 = vunpack.c.l.b16 %v273
    %v282 = vunpack.c.l.b16 %v274
    %v283 = vunpack.c.l.b16 %v275
    %v284 = vpack.c.b16 %v281, %v280
    %v285 = vpack.c.b16 %v283, %v282
    %v289 = vsel %vm211, %v271, 0
    %291 = vmatprep.subr.bf16.mxu0 0
    %292 = vmatpush1.bf16.msra.mxu0 0
    %293 = vmatprep.subr.bf16.mxu0 0
    %294 = vmatpush1.bf16.msra.mxu0 0
    %295 = vmatprep.subr.bf16.mxu0 0
    %296 = vmatpush1.bf16.msra.mxu0 0
    %297 = vmatprep.subr.bf16.mxu0 0
    %298 = vmatpush1.bf16.msra.mxu0 0
    %299 = vmatprep.subr.bf16.mxu0 0
    %300 = vmatpush1.bf16.msra.mxu0 0
    %301 = vmatprep.subr.bf16.mxu0 0
    %302 = vmatpush1.bf16.msra.mxu0 0
    %303 = vmatprep.subr.bf16.mxu0 0
    %304 = vmatpush1.bf16.msra.mxu0 %v285
    %305 = vmatprep.subr.bf16.mxu0 0
    %306 = vmatpush1.bf16.msra.mxu0 %v284
    %307 = vmatprep.subr.bf16.mxu0 0
    %308 = vmatpush2.bf16.msra.mxu0 0
    %309 = vmatprep.subr.bf16.mxu0 0
    %310 = vmatpush2.bf16.msra.mxu0 0
    %311 = vmatprep.subr.bf16.mxu0 0
    %312 = vmatpush2.bf16.msra.mxu0 0
    %313 = vmatprep.subr.bf16.mxu0 0
    %314 = vmatpush2.bf16.msra.mxu0 0
    %315 = vmatprep.subr.bf16.mxu0 0
    %316 = vmatpush2.bf16.msra.mxu0 0
    %317 = vmatprep.subr.bf16.mxu0 0
    %318 = vmatpush2.bf16.msra.mxu0 0
    %319 = vmatprep.subr.bf16.mxu0 0
    %320 = vmatpush2.bf16.msra.mxu0 0
    %321 = vmatprep.subr.bf16.mxu0 0
    %322 = vmatpush2.bf16.msra.mxu0 0
    %323 = vmatprep.mubr.bf16.mxu0 0
    %324 = vmatmul.mubr.bf16.gmra.mxu0 %v289
    %v325 = vpop.f32.mrf.mxu0
    %v326 = vadd.f32 0.0, %v325
    %v327 = vpop.f32.mrf.mxu0
    %v328 = vpop.f32.mrf.mxu0
    %v329 = vadd.f32 0.0, %v328
    %v330 = vpop.f32.mrf.mxu0
    %331 = vdwg.mxu0
    %v332 = vld [vmem:[#allocation5] sm:$0xf]
    %v333 = vld [vmem:[#allocation5 + $0x4] sm:$0xf]
    %v334 = vld [vmem:[#allocation5 + $0x8] sm:$0xf]
    %v335 = vld [vmem:[#allocation5 + $0xc] sm:$0xf]
    %v340 = vunpack.c.l.b16 %v332
    %v341 = vunpack.c.l.b16 %v333
    %v342 = vunpack.c.l.b16 %v334
    %v343 = vunpack.c.l.b16 %v335
    %v344 = vpack.c.b16 %v341, %v340
    %v345 = vpack.c.b16 %v343, %v342
    %348 = vmatprep.subr.bf16.mxu0 0
    %349 = vmatpush1.bf16.msra.mxu0 0
    %350 = vmatprep.subr.bf16.mxu0 0
    %351 = vmatpush1.bf16.msra.mxu0 0
    %352 = vmatprep.subr.bf16.mxu0 0
    %353 = vmatpush1.bf16.msra.mxu0 0
    %354 = vmatprep.subr.bf16.mxu0 0
    %355 = vmatpush1.bf16.msra.mxu0 0
    %356 = vmatprep.subr.bf16.mxu0 0
    %357 = vmatpush1.bf16.msra.mxu0 0
    %358 = vmatprep.subr.bf16.mxu0 0
    %359 = vmatpush1.bf16.msra.mxu0 0
    %360 = vmatprep.subr.bf16.mxu0 0
    %361 = vmatpush1.bf16.msra.mxu0 %v345
    %362 = vmatprep.subr.bf16.mxu0 0
    %363 = vmatpush1.bf16.msra.mxu0 %v344
    %364 = vmatprep.subr.bf16.mxu0 0
    %365 = vmatpush2.bf16.msra.mxu0 0
    %366 = vmatprep.subr.bf16.mxu0 0
    %367 = vmatpush2.bf16.msra.mxu0 0
    %368 = vmatprep.subr.bf16.mxu0 0
    %369 = vmatpush2.bf16.msra.mxu0 0
    %370 = vmatprep.subr.bf16.mxu0 0
    %371 = vmatpush2.bf16.msra.mxu0 0
    %372 = vmatprep.subr.bf16.mxu0 0
    %373 = vmatpush2.bf16.msra.mxu0 0
    %374 = vmatprep.subr.bf16.mxu0 0
    %375 = vmatpush2.bf16.msra.mxu0 0
    %376 = vmatprep.subr.bf16.mxu0 0
    %377 = vmatpush2.bf16.msra.mxu0 0
    %378 = vmatprep.subr.bf16.mxu0 0
    %379 = vmatpush2.bf16.msra.mxu0 0
    %380 = vmatprep.mubr.bf16.mxu0 0
    %381 = vmatmul.mubr.bf16.gmra.mxu0 %v289
    %v382 = vpop.f32.mrf.mxu0
    %v383 = vadd.f32 0.0, %v382
    %v384 = vpop.f32.mrf.mxu0
    %v385 = vpop.f32.mrf.mxu0
    %v386 = vadd.f32 0.0, %v385
    %v387 = vpop.f32.mrf.mxu0
    %388 = vdwg.mxu0
    %v389 = vld [vmem:[#allocation7] sm:$0xf]
    %v390 = vld [vmem:[#allocation7 + $0x4] sm:$0xf]
    %v391 = vld [vmem:[#allocation7 + $0x8] sm:$0xf]
    %v392 = vld [vmem:[#allocation7 + $0xc] sm:$0xf]
    %v397 = vunpack.c.l.b16 %v389
    %v398 = vunpack.c.l.b16 %v390
    %v399 = vunpack.c.l.b16 %v391
    %v400 = vunpack.c.l.b16 %v392
    %v401 = vpack.c.b16 %v398, %v397
    %v402 = vpack.c.b16 %v400, %v399
    %405 = vmatprep.subr.bf16.mxu0 0
    %406 = vmatpush1.bf16.msra.mxu0 0
    %407 = vmatprep.subr.bf16.mxu0 0
    %408 = vmatpush1.bf16.msra.mxu0 0
    %409 = vmatprep.subr.bf16.mxu0 0
    %410 = vmatpush1.bf16.msra.mxu0 0
    %411 = vmatprep.subr.bf16.mxu0 0
    %412 = vmatpush1.bf16.msra.mxu0 0
    %413 = vmatprep.subr.bf16.mxu0 0
    %414 = vmatpush1.bf16.msra.mxu0 0
    %415 = vmatprep.subr.bf16.mxu0 0
    %416 = vmatpush1.bf16.msra.mxu0 0
    %417 = vmatprep.subr.bf16.mxu0 0
    %418 = vmatpush1.bf16.msra.mxu0 %v402
    %419 = vmatprep.subr.bf16.mxu0 0
    %420 = vmatpush1.bf16.msra.mxu0 %v401
    %421 = vmatprep.subr.bf16.mxu0 0
    %422 = vmatpush2.bf16.msra.mxu0 0
    %423 = vmatprep.subr.bf16.mxu0 0
    %424 = vmatpush2.bf16.msra.mxu0 0
    %425 = vmatprep.subr.bf16.mxu0 0
    %426 = vmatpush2.bf16.msra.mxu0 0
    %427 = vmatprep.subr.bf16.mxu0 0
    %428 = vmatpush2.bf16.msra.mxu0 0
    %429 = vmatprep.subr.bf16.mxu0 0
    %430 = vmatpush2.bf16.msra.mxu0 0
    %431 = vmatprep.subr.bf16.mxu0 0
    %432 = vmatpush2.bf16.msra.mxu0 0
    %433 = vmatprep.subr.bf16.mxu0 0
    %434 = vmatpush2.bf16.msra.mxu0 0
    %435 = vmatprep.subr.bf16.mxu0 0
    %436 = vmatpush2.bf16.msra.mxu0 0
    %437 = vmatprep.mubr.bf16.mxu0 0
    %438 = vmatmul.mubr.bf16.gmra.mxu0 %v289
    %v439 = vpop.f32.mrf.mxu0
    %v440 = vadd.f32 0.0, %v439
    %v441 = vpop.f32.mrf.mxu0
    %v442 = vpop.f32.mrf.mxu0
    %v443 = vadd.f32 0.0, %v442
    %v444 = vpop.f32.mrf.mxu0
    %445 = vdwg.mxu0
    %vm446 = vcmp.ne.f32.partialorder %v203, 0.0
    %v447 = vpack.c.bf16 %v326, %v326
    %v448 = vpack.c.bf16 %v383, %v383
    %v449 = vpack.c.bf16 %v440, %v440
    %vm450 = vcmask 64512
    %v452 = vsel %vm450, %v447, 0
    %v455 = vsel %vm450, %v448, 0
    %457 = vmatprep.subr.bf16.mxu0 0
    %458 = vmatpush1.bf16.xpose.msra.mxu0 0
    %459 = vmatprep.subr.bf16.mxu0 0
    %460 = vmatpush1.bf16.xpose.msra.mxu0 0
    %461 = vmatprep.subr.bf16.mxu0 0
    %462 = vmatpush1.bf16.xpose.msra.mxu0 0
    %463 = vmatprep.subr.bf16.mxu0 0
    %464 = vmatpush1.bf16.xpose.msra.mxu0 0
    %465 = vmatprep.subr.bf16.mxu0 0
    %466 = vmatpush1.bf16.xpose.msra.mxu0 0
    %467 = vmatprep.subr.bf16.mxu0 0
    %468 = vmatpush1.bf16.xpose.msra.mxu0 0
    %469 = vmatprep.subr.bf16.mxu0 0
    %470 = vmatpush1.bf16.xpose.msra.mxu0 0
    %471 = vmatprep.subr.bf16.mxu0 0
    %472 = vmatpush1.bf16.xpose.msra.mxu0 %v455
    %473 = vmatprep.subr.bf16.mxu0 0
    %474 = vmatpush2.bf16.xpose.msra.mxu0 0
    %475 = vmatprep.subr.bf16.mxu0 0
    %476 = vmatpush2.bf16.xpose.msra.mxu0 0
    %477 = vmatprep.subr.bf16.mxu0 0
    %478 = vmatpush2.bf16.xpose.msra.mxu0 0
    %479 = vmatprep.subr.bf16.mxu0 0
    %480 = vmatpush2.bf16.xpose.msra.mxu0 0
    %481 = vmatprep.subr.bf16.mxu0 0
    %482 = vmatpush2.bf16.xpose.msra.mxu0 0
    %483 = vmatprep.subr.bf16.mxu0 0
    %484 = vmatpush2.bf16.xpose.msra.mxu0 0
    %485 = vmatprep.subr.bf16.mxu0 0
    %486 = vmatpush2.bf16.xpose.msra.mxu0 0
    %487 = vmatprep.subr.bf16.mxu0 0
    %488 = vmatpush2.bf16.xpose.msra.mxu0 0
    %489 = vmatprep.mubr.bf16.mxu0 0
    %490 = vmatmul.mubr.bf16.gmra.mxu0 %v452
    %v491 = vpop.f32.mrf.mxu0
    %v492 = vadd.f32 0.0, %v491
    %v493 = vpop.f32.mrf.mxu0
    %v494 = vpop.f32.mrf.mxu0
    %v495 = vpop.f32.mrf.mxu0
    %496 = vdwg.mxu0
    %v497 = vsel %vm446, %v492, -1e+09
    %v498 = vsel %vm450, %v497, -inf
    %499 = vmax.xlane.f32.xlu0 %v498
    %v500 = vpop.xlane.xlu0 %499
    %v501 = vsub.f32 %v497, %v500
    %v502 = vmul.f32 %v501, 1.442695
    %v503 = vpow.pop %v502
    %v504 = vsel %vm450, %v503, 0.0
    %505 = vadd.xlane.f32.xlu0 %v504
    %v506 = vpop.xlane.xlu0 %505
    %v507 = vrcp.pop %v506
    %v508 = vmul.f32 %v503, %v507
    %v509 = vpack.c.bf16 %v508, %v508
    %v511 = vsel %vm450, %v509, 0
    %vm513 = vcmask 1043456
    %v515 = vsel %vm513, %v449, 0
    %517 = vmatprep.subr.bf16.mxu0 0
    %518 = vmatpush1.bf16.msra.mxu0 0
    %519 = vmatprep.subr.bf16.mxu0 0
    %520 = vmatpush1.bf16.msra.mxu0 0
    %521 = vmatprep.subr.bf16.mxu0 0
    %522 = vmatpush1.bf16.msra.mxu0 0
    %523 = vmatprep.subr.bf16.mxu0 0
    %524 = vmatpush1.bf16.msra.mxu0 0
    %525 = vmatprep.subr.bf16.mxu0 0
    %526 = vmatpush1.bf16.msra.mxu0 0
    %527 = vmatprep.subr.bf16.mxu0 0
    %528 = vmatpush1.bf16.msra.mxu0 0
    %529 = vmatprep.subr.bf16.mxu0 0
    %530 = vmatpush1.bf16.msra.mxu0 0
    %531 = vmatprep.subr.bf16.mxu0 0
    %532 = vmatpush1.bf16.msra.mxu0 %v515
    %533 = vmatprep.subr.bf16.mxu0 0
    %534 = vmatpush2.bf16.msra.mxu0 0
    %535 = vmatprep.subr.bf16.mxu0 0
    %536 = vmatpush2.bf16.msra.mxu0 0
    %537 = vmatprep.subr.bf16.mxu0 0
    %538 = vmatpush2.bf16.msra.mxu0 0
    %539 = vmatprep.subr.bf16.mxu0 0
    %540 = vmatpush2.bf16.msra.mxu0 0
    %541 = vmatprep.subr.bf16.mxu0 0
    %542 = vmatpush2.bf16.msra.mxu0 0
    %543 = vmatprep.subr.bf16.mxu0 0
    %544 = vmatpush2.bf16.msra.mxu0 0
    %545 = vmatprep.subr.bf16.mxu0 0
    %546 = vmatpush2.bf16.msra.mxu0 0
    %547 = vmatprep.subr.bf16.mxu0 0
    %548 = vmatpush2.bf16.msra.mxu0 0
    %549 = vmatprep.mubr.bf16.mxu0 0
    %550 = vmatmul.mubr.bf16.gmra.mxu0 %v511
    %v551 = vpop.f32.mrf.mxu0
    %v552 = vadd.f32 0.0, %v551
    %v553 = vpop.f32.mrf.mxu0
    %v554 = vpop.f32.mrf.mxu0
    %v555 = vpop.f32.mrf.mxu0
    %556 = vdwg.mxu0
    %558 = vrot.lane.b32.xlu0 %v447, 120
    %v559 = vpop.permute.xlu0 %558
    %561 = vrot.lane.b32.xlu0 %v448, 120
    %v562 = vpop.permute.xlu0 %561
    %v564 = vsel %vm450, %v559, 0
    %v567 = vsel %vm450, %v562, 0
    %569 = vmatprep.subr.bf16.mxu0 0
    %570 = vmatpush1.bf16.xpose.msra.mxu0 0
    %571 = vmatprep.subr.bf16.mxu0 0
    %572 = vmatpush1.bf16.xpose.msra.mxu0 0
    %573 = vmatprep.subr.bf16.mxu0 0
    %574 = vmatpush1.bf16.xpose.msra.mxu0 0
    %575 = vmatprep.subr.bf16.mxu0 0
    %576 = vmatpush1.bf16.xpose.msra.mxu0 0
    %577 = vmatprep.subr.bf16.mxu0 0
    %578 = vmatpush1.bf16.xpose.msra.mxu0 0
    %579 = vmatprep.subr.bf16.mxu0 0
    %580 = vmatpush1.bf16.xpose.msra.mxu0 0
    %581 = vmatprep.subr.bf16.mxu0 0
    %582 = vmatpush1.bf16.xpose.msra.mxu0 0
    %583 = vmatprep.subr.bf16.mxu0 0
    %584 = vmatpush1.bf16.xpose.msra.mxu0 %v567
    %585 = vmatprep.subr.bf16.mxu0 0
    %586 = vmatpush2.bf16.xpose.msra.mxu0 0
    %587 = vmatprep.subr.bf16.mxu0 0
    %588 = vmatpush2.bf16.xpose.msra.mxu0 0
    %589 = vmatprep.subr.bf16.mxu0 0
    %590 = vmatpush2.bf16.xpose.msra.mxu0 0
    %591 = vmatprep.subr.bf16.mxu0 0
    %592 = vmatpush2.bf16.xpose.msra.mxu0 0
    %593 = vmatprep.subr.bf16.mxu0 0
    %594 = vmatpush2.bf16.xpose.msra.mxu0 0
    %595 = vmatprep.subr.bf16.mxu0 0
    %596 = vmatpush2.bf16.xpose.msra.mxu0 0
    %597 = vmatprep.subr.bf16.mxu0 0
    %598 = vmatpush2.bf16.xpose.msra.mxu0 0
    %599 = vmatprep.subr.bf16.mxu0 0
    %600 = vmatpush2.bf16.xpose.msra.mxu0 0
    %601 = vmatprep.mubr.bf16.mxu0 0
    %602 = vmatmul.mubr.bf16.gmra.mxu0 %v564
    %v603 = vpop.f32.mrf.mxu0
    %v604 = vadd.f32 0.0, %v603
    %v605 = vpop.f32.mrf.mxu0
    %v606 = vpop.f32.mrf.mxu0
    %v607 = vpop.f32.mrf.mxu0
    %608 = vdwg.mxu0
    %v609 = vsel %vm446, %v604, -1e+09
    %v610 = vsel %vm450, %v609, -inf
    %611 = vmax.xlane.f32.xlu0 %v610
    %v612 = vpop.xlane.xlu0 %611
    %v613 = vsub.f32 %v609, %v612
    %v614 = vmul.f32 %v613, 1.442695
    %v615 = vpow.pop %v614
    %v616 = vsel %vm450, %v615, 0.0
    %617 = vadd.xlane.f32.xlu0 %v616
    %v618 = vpop.xlane.xlu0 %617
    %v619 = vrcp.pop %v618
    %v620 = vmul.f32 %v615, %v619
    %v621 = vpack.c.bf16 %v620, %v620
    %623 = vrot.lane.b32.xlu0 %v449, 120
    %v624 = vpop.permute.xlu0 %623
    %v626 = vsel %vm450, %v621, 0
    %v629 = vsel %vm513, %v624, 0
    %631 = vmatprep.subr.bf16.mxu0 0
    %632 = vmatpush1.bf16.msra.mxu0 0
    %633 = vmatprep.subr.bf16.mxu0 0
    %634 = vmatpush1.bf16.msra.mxu0 0
    %635 = vmatprep.subr.bf16.mxu0 0
    %636 = vmatpush1.bf16.msra.mxu0 0
    %637 = vmatprep.subr.bf16.mxu0 0
    %638 = vmatpush1.bf16.msra.mxu0 0
    %639 = vmatprep.subr.bf16.mxu0 0
    %640 = vmatpush1.bf16.msra.mxu0 0
    %641 = vmatprep.subr.bf16.mxu0 0
    %642 = vmatpush1.bf16.msra.mxu0 0
    %643 = vmatprep.subr.bf16.mxu0 0
    %644 = vmatpush1.bf16.msra.mxu0 0
    %645 = vmatprep.subr.bf16.mxu0 0
    %646 = vmatpush1.bf16.msra.mxu0 %v629
    %647 = vmatprep.subr.bf16.mxu0 0
    %648 = vmatpush2.bf16.msra.mxu0 0
    %649 = vmatprep.subr.bf16.mxu0 0
    %650 = vmatpush2.bf16.msra.mxu0 0
    %651 = vmatprep.subr.bf16.mxu0 0
    %652 = vmatpush2.bf16.msra.mxu0 0
    %653 = vmatprep.subr.bf16.mxu0 0
    %654 = vmatpush2.bf16.msra.mxu0 0
    %655 = vmatprep.subr.bf16.mxu0 0
    %656 = vmatpush2.bf16.msra.mxu0 0
    %657 = vmatprep.subr.bf16.mxu0 0
    %658 = vmatpush2.bf16.msra.mxu0 0
    %659 = vmatprep.subr.bf16.mxu0 0
    %660 = vmatpush2.bf16.msra.mxu0 0
    %661 = vmatprep.subr.bf16.mxu0 0
    %662 = vmatpush2.bf16.msra.mxu0 0
    %663 = vmatprep.mubr.bf16.mxu0 0
    %664 = vmatmul.mubr.bf16.gmra.mxu0 %v626
    %v665 = vpop.f32.mrf.mxu0
    %v666 = vadd.f32 0.0, %v665
    %v667 = vpop.f32.mrf.mxu0
    %v668 = vpop.f32.mrf.mxu0
    %v669 = vpop.f32.mrf.mxu0
    %670 = vdwg.mxu0
    %671 = vrot.lane.b32.xlu0 %v447, 112
    %v672 = vpop.permute.xlu0 %671
    %673 = vrot.lane.b32.xlu0 %v448, 112
    %v674 = vpop.permute.xlu0 %673
    %v676 = vsel %vm450, %v672, 0
    %v679 = vsel %vm450, %v674, 0
    %681 = vmatprep.subr.bf16.mxu0 0
    %682 = vmatpush1.bf16.xpose.msra.mxu0 0
    %683 = vmatprep.subr.bf16.mxu0 0
    %684 = vmatpush1.bf16.xpose.msra.mxu0 0
    %685 = vmatprep.subr.bf16.mxu0 0
    %686 = vmatpush1.bf16.xpose.msra.mxu0 0
    %687 = vmatprep.subr.bf16.mxu0 0
    %688 = vmatpush1.bf16.xpose.msra.mxu0 0
    %689 = vmatprep.subr.bf16.mxu0 0
    %690 = vmatpush1.bf16.xpose.msra.mxu0 0
    %691 = vmatprep.subr.bf16.mxu0 0
    %692 = vmatpush1.bf16.xpose.msra.mxu0 0
    %693 = vmatprep.subr.bf16.mxu0 0
    %694 = vmatpush1.bf16.xpose.msra.mxu0 0
    %695 = vmatprep.subr.bf16.mxu0 0
    %696 = vmatpush1.bf16.xpose.msra.mxu0 %v679
    %697 = vmatprep.subr.bf16.mxu0 0
    %698 = vmatpush2.bf16.xpose.msra.mxu0 0
    %699 = vmatprep.subr.bf16.mxu0 0
    %700 = vmatpush2.bf16.xpose.msra.mxu0 0
    %701 = vmatprep.subr.bf16.mxu0 0
    %702 = vmatpush2.bf16.xpose.msra.mxu0 0
    %703 = vmatprep.subr.bf16.mxu0 0
    %704 = vmatpush2.bf16.xpose.msra.mxu0 0
    %705 = vmatprep.subr.bf16.mxu0 0
    %706 = vmatpush2.bf16.xpose.msra.mxu0 0
    %707 = vmatprep.subr.bf16.mxu0 0
    %708 = vmatpush2.bf16.xpose.msra.mxu0 0
    %709 = vmatprep.subr.bf16.mxu0 0
    %710 = vmatpush2.bf16.xpose.msra.mxu0 0
    %711 = vmatprep.subr.bf16.mxu0 0
    %712 = vmatpush2.bf16.xpose.msra.mxu0 0
    %713 = vmatprep.mubr.bf16.mxu0 0
    %714 = vmatmul.mubr.bf16.gmra.mxu0 %v676
    %v715 = vpop.f32.mrf.mxu0
    %v716 = vadd.f32 0.0, %v715
    %v717 = vpop.f32.mrf.mxu0
    %v718 = vpop.f32.mrf.mxu0
    %v719 = vpop.f32.mrf.mxu0
    %720 = vdwg.mxu0
    %v721 = vsel %vm446, %v716, -1e+09
    %v722 = vsel %vm450, %v721, -inf
    %723 = vmax.xlane.f32.xlu0 %v722
    %v724 = vpop.xlane.xlu0 %723
    %v725 = vsub.f32 %v721, %v724
    %v726 = vmul.f32 %v725, 1.442695
    %v727 = vpow.pop %v726
    %v728 = vsel %vm450, %v727, 0.0
    %729 = vadd.xlane.f32.xlu0 %v728
    %v730 = vpop.xlane.xlu0 %729
    %v731 = vrcp.pop %v730
    %v732 = vmul.f32 %v727, %v731
    %v733 = vpack.c.bf16 %v732, %v732
    %734 = vrot.lane.b32.xlu0 %v449, 112
    %v735 = vpop.permute.xlu0 %734
    %v737 = vsel %vm450, %v733, 0
    %v740 = vsel %vm513, %v735, 0
    %742 = vmatprep.subr.bf16.mxu0 0
    %743 = vmatpush1.bf16.msra.mxu0 0
    %744 = vmatprep.subr.bf16.mxu0 0
    %745 = vmatpush1.bf16.msra.mxu0 0
    %746 = vmatprep.subr.bf16.mxu0 0
    %747 = vmatpush1.bf16.msra.mxu0 0
    %748 = vmatprep.subr.bf16.mxu0 0
    %749 = vmatpush1.bf16.msra.mxu0 0
    %750 = vmatprep.subr.bf16.mxu0 0
    %751 = vmatpush1.bf16.msra.mxu0 0
    %752 = vmatprep.subr.bf16.mxu0 0
    %753 = vmatpush1.bf16.msra.mxu0 0
    %754 = vmatprep.subr.bf16.mxu0 0
    %755 = vmatpush1.bf16.msra.mxu0 0
    %756 = vmatprep.subr.bf16.mxu0 0
    %757 = vmatpush1.bf16.msra.mxu0 %v740
    %758 = vmatprep.subr.bf16.mxu0 0
    %759 = vmatpush2.bf16.msra.mxu0 0
    %760 = vmatprep.subr.bf16.mxu0 0
    %761 = vmatpush2.bf16.msra.mxu0 0
    %762 = vmatprep.subr.bf16.mxu0 0
    %763 = vmatpush2.bf16.msra.mxu0 0
    %764 = vmatprep.subr.bf16.mxu0 0
    %765 = vmatpush2.bf16.msra.mxu0 0
    %766 = vmatprep.subr.bf16.mxu0 0
    %767 = vmatpush2.bf16.msra.mxu0 0
    %768 = vmatprep.subr.bf16.mxu0 0
    %769 = vmatpush2.bf16.msra.mxu0 0
    %770 = vmatprep.subr.bf16.mxu0 0
    %771 = vmatpush2.bf16.msra.mxu0 0
    %772 = vmatprep.subr.bf16.mxu0 0
    %773 = vmatpush2.bf16.msra.mxu0 0
    %774 = vmatprep.mubr.bf16.mxu0 0
    %775 = vmatmul.mubr.bf16.gmra.mxu0 %v737
    %v776 = vpop.f32.mrf.mxu0
    %v777 = vadd.f32 0.0, %v776
    %v778 = vpop.f32.mrf.mxu0
    %v779 = vpop.f32.mrf.mxu0
    %v780 = vpop.f32.mrf.mxu0
    %781 = vdwg.mxu0
    %782 = vrot.lane.b32.xlu0 %v447, 104
    %v783 = vpop.permute.xlu0 %782
    %784 = vrot.lane.b32.xlu0 %v448, 104
    %v785 = vpop.permute.xlu0 %784
    %v787 = vsel %vm450, %v783, 0
    %v790 = vsel %vm450, %v785, 0
    %792 = vmatprep.subr.bf16.mxu0 0
    %793 = vmatpush1.bf16.xpose.msra.mxu0 0
    %794 = vmatprep.subr.bf16.mxu0 0
    %795 = vmatpush1.bf16.xpose.msra.mxu0 0
    %796 = vmatprep.subr.bf16.mxu0 0
    %797 = vmatpush1.bf16.xpose.msra.mxu0 0
    %798 = vmatprep.subr.bf16.mxu0 0
    %799 = vmatpush1.bf16.xpose.msra.mxu0 0
    %800 = vmatprep.subr.bf16.mxu0 0
    %801 = vmatpush1.bf16.xpose.msra.mxu0 0
    %802 = vmatprep.subr.bf16.mxu0 0
    %803 = vmatpush1.bf16.xpose.msra.mxu0 0
    %804 = vmatprep.subr.bf16.mxu0 0
    %805 = vmatpush1.bf16.xpose.msra.mxu0 0
    %806 = vmatprep.subr.bf16.mxu0 0
    %807 = vmatpush1.bf16.xpose.msra.mxu0 %v790
    %808 = vmatprep.subr.bf16.mxu0 0
    %809 = vmatpush2.bf16.xpose.msra.mxu0 0
    %810 = vmatprep.subr.bf16.mxu0 0
    %811 = vmatpush2.bf16.xpose.msra.mxu0 0
    %812 = vmatprep.subr.bf16.mxu0 0
    %813 = vmatpush2.bf16.xpose.msra.mxu0 0
    %814 = vmatprep.subr.bf16.mxu0 0
    %815 = vmatpush2.bf16.xpose.msra.mxu0 0
    %816 = vmatprep.subr.bf16.mxu0 0
    %817 = vmatpush2.bf16.xpose.msra.mxu0 0
    %818 = vmatprep.subr.bf16.mxu0 0
    %819 = vmatpush2.bf16.xpose.msra.mxu0 0
    %820 = vmatprep.subr.bf16.mxu0 0
    %821 = vmatpush2.bf16.xpose.msra.mxu0 0
    %822 = vmatprep.subr.bf16.mxu0 0
    %823 = vmatpush2.bf16.xpose.msra.mxu0 0
    %824 = vmatprep.mubr.bf16.mxu0 0
    %825 = vmatmul.mubr.bf16.gmra.mxu0 %v787
    %v826 = vpop.f32.mrf.mxu0
    %v827 = vadd.f32 0.0, %v826
    %v828 = vpop.f32.mrf.mxu0
    %v829 = vpop.f32.mrf.mxu0
    %v830 = vpop.f32.mrf.mxu0
    %831 = vdwg.mxu0
    %v832 = vsel %vm446, %v827, -1e+09
    %v833 = vsel %vm450, %v832, -inf
    %834 = vmax.xlane.f32.xlu0 %v833
    %v835 = vpop.xlane.xlu0 %834
    %v836 = vsub.f32 %v832, %v835
    %v837 = vmul.f32 %v836, 1.442695
    %v838 = vpow.pop %v837
    %v839 = vsel %vm450, %v838, 0.0
    %840 = vadd.xlane.f32.xlu0 %v839
    %v841 = vpop.xlane.xlu0 %840
    %v842 = vrcp.pop %v841
    %v843 = vmul.f32 %v838, %v842
    %v844 = vpack.c.bf16 %v843, %v843
    %845 = vrot.lane.b32.xlu0 %v449, 104
    %v846 = vpop.permute.xlu0 %845
    %v848 = vsel %vm450, %v844, 0
    %v851 = vsel %vm513, %v846, 0
    %853 = vmatprep.subr.bf16.mxu0 0
    %854 = vmatpush1.bf16.msra.mxu0 0
    %855 = vmatprep.subr.bf16.mxu0 0
    %856 = vmatpush1.bf16.msra.mxu0 0
    %857 = vmatprep.subr.bf16.mxu0 0
    %858 = vmatpush1.bf16.msra.mxu0 0
    %859 = vmatprep.subr.bf16.mxu0 0
    %860 = vmatpush1.bf16.msra.mxu0 0
    %861 = vmatprep.subr.bf16.mxu0 0
    %862 = vmatpush1.bf16.msra.mxu0 0
    %863 = vmatprep.subr.bf16.mxu0 0
    %864 = vmatpush1.bf16.msra.mxu0 0
    %865 = vmatprep.subr.bf16.mxu0 0
    %866 = vmatpush1.bf16.msra.mxu0 0
    %867 = vmatprep.subr.bf16.mxu0 0
    %868 = vmatpush1.bf16.msra.mxu0 %v851
    %869 = vmatprep.subr.bf16.mxu0 0
    %870 = vmatpush2.bf16.msra.mxu0 0
    %871 = vmatprep.subr.bf16.mxu0 0
    %872 = vmatpush2.bf16.msra.mxu0 0
    %873 = vmatprep.subr.bf16.mxu0 0
    %874 = vmatpush2.bf16.msra.mxu0 0
    %875 = vmatprep.subr.bf16.mxu0 0
    %876 = vmatpush2.bf16.msra.mxu0 0
    %877 = vmatprep.subr.bf16.mxu0 0
    %878 = vmatpush2.bf16.msra.mxu0 0
    %879 = vmatprep.subr.bf16.mxu0 0
    %880 = vmatpush2.bf16.msra.mxu0 0
    %881 = vmatprep.subr.bf16.mxu0 0
    %882 = vmatpush2.bf16.msra.mxu0 0
    %883 = vmatprep.subr.bf16.mxu0 0
    %884 = vmatpush2.bf16.msra.mxu0 0
    %885 = vmatprep.mubr.bf16.mxu0 0
    %886 = vmatmul.mubr.bf16.gmra.mxu0 %v848
    %v887 = vpop.f32.mrf.mxu0
    %v888 = vadd.f32 0.0, %v887
    %v889 = vpop.f32.mrf.mxu0
    %v890 = vpop.f32.mrf.mxu0
    %v891 = vpop.f32.mrf.mxu0
    %892 = vdwg.mxu0
    %894 = vrot.lane.b32.xlu0 %v666, 8
    %v895 = vpop.permute.xlu0 %894
    %898 = vrot.lane.b32.xlu0 %v777, 16
    %v899 = vpop.permute.xlu0 %898
    %902 = vrot.lane.b32.xlu0 %v888, 24
    %v903 = vpop.permute.xlu0 %902
    %v905 = vsel %vm450, %v552, %v895
    %vm906 = vcmask 130048
    %v907 = vsel %vm906, %v905, %v899
    %vm908 = vcmask 195584
    %v909 = vsel %vm908, %v907, %v903
    %vm910 = vcmp.ne.f32.partialorder %v204, 0.0
    %v911 = vpack.c.bf16 %v329, %v329
    %v912 = vpack.c.bf16 %v386, %v386
    %v913 = vpack.c.bf16 %v443, %v443
    %v915 = vsel %vm450, %v911, 0
    %v918 = vsel %vm450, %v912, 0
    %920 = vmatprep.subr.bf16.mxu0 0
    %921 = vmatpush1.bf16.xpose.msra.mxu0 0
    %922 = vmatprep.subr.bf16.mxu0 0
    %923 = vmatpush1.bf16.xpose.msra.mxu0 0
    %924 = vmatprep.subr.bf16.mxu0 0
    %925 = vmatpush1.bf16.xpose.msra.mxu0 0
    %926 = vmatprep.subr.bf16.mxu0 0
    %927 = vmatpush1.bf16.xpose.msra.mxu0 0
    %928 = vmatprep.subr.bf16.mxu0 0
    %929 = vmatpush1.bf16.xpose.msra.mxu0 0
    %930 = vmatprep.subr.bf16.mxu0 0
    %931 = vmatpush1.bf16.xpose.msra.mxu0 0
    %932 = vmatprep.subr.bf16.mxu0 0
    %933 = vmatpush1.bf16.xpose.msra.mxu0 0
    %934 = vmatprep.subr.bf16.mxu0 0
    %935 = vmatpush1.bf16.xpose.msra.mxu0 %v918
    %936 = vmatprep.subr.bf16.mxu0 0
    %937 = vmatpush2.bf16.xpose.msra.mxu0 0
    %938 = vmatprep.subr.bf16.mxu0 0
    %939 = vmatpush2.bf16.xpose.msra.mxu0 0
    %940 = vmatprep.subr.bf16.mxu0 0
    %941 = vmatpush2.bf16.xpose.msra.mxu0 0
    %942 = vmatprep.subr.bf16.mxu0 0
    %943 = vmatpush2.bf16.xpose.msra.mxu0 0
    %944 = vmatprep.subr.bf16.mxu0 0
    %945 = vmatpush2.bf16.xpose.msra.mxu0 0
    %946 = vmatprep.subr.bf16.mxu0 0
    %947 = vmatpush2.bf16.xpose.msra.mxu0 0
    %948 = vmatprep.subr.bf16.mxu0 0
    %949 = vmatpush2.bf16.xpose.msra.mxu0 0
    %950 = vmatprep.subr.bf16.mxu0 0
    %951 = vmatpush2.bf16.xpose.msra.mxu0 0
    %952 = vmatprep.mubr.bf16.mxu0 0
    %953 = vmatmul.mubr.bf16.gmra.mxu0 %v915
    %v954 = vpop.f32.mrf.mxu0
    %v955 = vadd.f32 0.0, %v954
    %v956 = vpop.f32.mrf.mxu0
    %v957 = vpop.f32.mrf.mxu0
    %v958 = vpop.f32.mrf.mxu0
    %959 = vdwg.mxu0
    %v960 = vsel %vm910, %v955, -1e+09
    %v961 = vsel %vm450, %v960, -inf
    %962 = vmax.xlane.f32.xlu0 %v961
    %v963 = vpop.xlane.xlu0 %962
    %v964 = vsub.f32 %v960, %v963
    %v965 = vmul.f32 %v964, 1.442695
    %v966 = vpow.pop %v965
    %v967 = vsel %vm450, %v966, 0.0
    %968 = vadd.xlane.f32.xlu0 %v967
    %v969 = vpop.xlane.xlu0 %968
    %v970 = vrcp.pop %v969
    %v971 = vmul.f32 %v966, %v970
    %v972 = vpack.c.bf16 %v971, %v971
    %v974 = vsel %vm450, %v972, 0
    %v977 = vsel %vm513, %v913, 0
    %979 = vmatprep.subr.bf16.mxu0 0
    %980 = vmatpush1.bf16.msra.mxu0 0
    %981 = vmatprep.subr.bf16.mxu0 0
    %982 = vmatpush1.bf16.msra.mxu0 0
    %983 = vmatprep.subr.bf16.mxu0 0
    %984 = vmatpush1.bf16.msra.mxu0 0
    %985 = vmatprep.subr.bf16.mxu0 0
    %986 = vmatpush1.bf16.msra.mxu0 0
    %987 = vmatprep.subr.bf16.mxu0 0
    %988 = vmatpush1.bf16.msra.mxu0 0
    %989 = vmatprep.subr.bf16.mxu0 0
    %990 = vmatpush1.bf16.msra.mxu0 0
    %991 = vmatprep.subr.bf16.mxu0 0
    %992 = vmatpush1.bf16.msra.mxu0 0
    %993 = vmatprep.subr.bf16.mxu0 0
    %994 = vmatpush1.bf16.msra.mxu0 %v977
    %995 = vmatprep.subr.bf16.mxu0 0
    %996 = vmatpush2.bf16.msra.mxu0 0
    %997 = vmatprep.subr.bf16.mxu0 0
    %998 = vmatpush2.bf16.msra.mxu0 0
    %999 = vmatprep.subr.bf16.mxu0 0
    %1000 = vmatpush2.bf16.msra.mxu0 0
    %1001 = vmatprep.subr.bf16.mxu0 0
    %1002 = vmatpush2.bf16.msra.mxu0 0
    %1003 = vmatprep.subr.bf16.mxu0 0
    %1004 = vmatpush2.bf16.msra.mxu0 0
    %1005 = vmatprep.subr.bf16.mxu0 0
    %1006 = vmatpush2.bf16.msra.mxu0 0
    %1007 = vmatprep.subr.bf16.mxu0 0
    %1008 = vmatpush2.bf16.msra.mxu0 0
    %1009 = vmatprep.subr.bf16.mxu0 0
    %1010 = vmatpush2.bf16.msra.mxu0 0
    %1011 = vmatprep.mubr.bf16.mxu0 0
    %1012 = vmatmul.mubr.bf16.gmra.mxu0 %v974
    %v1013 = vpop.f32.mrf.mxu0
    %v1014 = vadd.f32 0.0, %v1013
    %v1015 = vpop.f32.mrf.mxu0
    %v1016 = vpop.f32.mrf.mxu0
    %v1017 = vpop.f32.mrf.mxu0
    %1018 = vdwg.mxu0
    %1020 = vrot.lane.b32.xlu0 %v911, 120
    %v1021 = vpop.permute.xlu0 %1020
    %1023 = vrot.lane.b32.xlu0 %v912, 120
    %v1024 = vpop.permute.xlu0 %1023
    %v1026 = vsel %vm450, %v1021, 0
    %v1029 = vsel %vm450, %v1024, 0
    %1031 = vmatprep.subr.bf16.mxu0 0
    %1032 = vmatpush1.bf16.xpose.msra.mxu0 0
    %1033 = vmatprep.subr.bf16.mxu0 0
    %1034 = vmatpush1.bf16.xpose.msra.mxu0 0
    %1035 = vmatprep.subr.bf16.mxu0 0
    %1036 = vmatpush1.bf16.xpose.msra.mxu0 0
    %1037 = vmatprep.subr.bf16.mxu0 0
    %1038 = vmatpush1.bf16.xpose.msra.mxu0 0
    %1039 = vmatprep.subr.bf16.mxu0 0
    %1040 = vmatpush1.bf16.xpose.msra.mxu0 0
    %1041 = vmatprep.subr.bf16.mxu0 0
    %1042 = vmatpush1.bf16.xpose.msra.mxu0 0
    %1043 = vmatprep.subr.bf16.mxu0 0
    %1044 = vmatpush1.bf16.xpose.msra.mxu0 0
    %1045 = vmatprep.subr.bf16.mxu0 0
    %1046 = vmatpush1.bf16.xpose.msra.mxu0 %v1029
    %1047 = vmatprep.subr.bf16.mxu0 0
    %1048 = vmatpush2.bf16.xpose.msra.mxu0 0
    %1049 = vmatprep.subr.bf16.mxu0 0
    %1050 = vmatpush2.bf16.xpose.msra.mxu0 0
    %1051 = vmatprep.subr.bf16.mxu0 0
    %1052 = vmatpush2.bf16.xpose.msra.mxu0 0
    %1053 = vmatprep.subr.bf16.mxu0 0
    %1054 = vmatpush2.bf16.xpose.msra.mxu0 0
    %1055 = vmatprep.subr.bf16.mxu0 0
    %1056 = vmatpush2.bf16.xpose.msra.mxu0 0
    %1057 = vmatprep.subr.bf16.mxu0 0
    %1058 = vmatpush2.bf16.xpose.msra.mxu0 0
    %1059 = vmatprep.subr.bf16.mxu0 0
    %1060 = vmatpush2.bf16.xpose.msra.mxu0 0
    %1061 = vmatprep.subr.bf16.mxu0 0
    %1062 = vmatpush2.bf16.xpose.msra.mxu0 0
    %1063 = vmatprep.mubr.bf16.mxu0 0
    %1064 = vmatmul.mubr.bf16.gmra.mxu0 %v1026
    %v1065 = vpop.f32.mrf.mxu0
    %v1066 = vadd.f32 0.0, %v1065
    %v1067 = vpop.f32.mrf.mxu0
    %v1068 = vpop.f32.mrf.mxu0
    %v1069 = vpop.f32.mrf.mxu0
    %1070 = vdwg.mxu0
    %v1071 = vsel %vm910, %v1066, -1e+09
    %v1072 = vsel %vm450, %v1071, -inf
    %1073 = vmax.xlane.f32.xlu0 %v1072
    %v1074 = vpop.xlane.xlu0 %1073
    %v1075 = vsub.f32 %v1071, %v1074
    %v1076 = vmul.f32 %v1075, 1.442695
    %v1077 = vpow.pop %v1076
    %v1078 = vsel %vm450, %v1077, 0.0
    %1079 = vadd.xlane.f32.xlu0 %v1078
    %v1080 = vpop.xlane.xlu0 %1079
    %v1081 = vrcp.pop %v1080
    %v1082 = vmul.f32 %v1077, %v1081
    %v1083 = vpack.c.bf16 %v1082, %v1082
    %1085 = vrot.lane.b32.xlu0 %v913, 120
    %v1086 = vpop.permute.xlu0 %1085
    %v1088 = vsel %vm450, %v1083, 0
    %v1091 = vsel %vm513, %v1086, 0
    %1093 = vmatprep.subr.bf16.mxu0 0
    %1094 = vmatpush1.bf16.msra.mxu0 0
    %1095 = vmatprep.subr.bf16.mxu0 0
    %1096 = vmatpush1.bf16.msra.mxu0 0
    %1097 = vmatprep.subr.bf16.mxu0 0
    %1098 = vmatpush1.bf16.msra.mxu0 0
    %1099 = vmatprep.subr.bf16.mxu0 0
    %1100 = vmatpush1.bf16.msra.mxu0 0
    %1101 = vmatprep.subr.bf16.mxu0 0
    %1102 = vmatpush1.bf16.msra.mxu0 0
    %1103 = vmatprep.subr.bf16.mxu0 0
    %1104 = vmatpush1.bf16.msra.mxu0 0
    %1105 = vmatprep.subr.bf16.mxu0 0
    %1106 = vmatpush1.bf16.msra.mxu0 0
    %1107 = vmatprep.subr.bf16.mxu0 0
    %1108 = vmatpush1.bf16.msra.mxu0 %v1091
    %1109 = vmatprep.subr.bf16.mxu0 0
    %1110 = vmatpush2.bf16.msra.mxu0 0
    %1111 = vmatprep.subr.bf16.mxu0 0
    %1112 = vmatpush2.bf16.msra.mxu0 0
    %1113 = vmatprep.subr.bf16.mxu0 0
    %1114 = vmatpush2.bf16.msra.mxu0 0
    %1115 = vmatprep.subr.bf16.mxu0 0
    %1116 = vmatpush2.bf16.msra.mxu0 0
    %1117 = vmatprep.subr.bf16.mxu0 0
    %1118 = vmatpush2.bf16.msra.mxu0 0
    %1119 = vmatprep.subr.bf16.mxu0 0
    %1120 = vmatpush2.bf16.msra.mxu0 0
    %1121 = vmatprep.subr.bf16.mxu0 0
    %1122 = vmatpush2.bf16.msra.mxu0 0
    %1123 = vmatprep.subr.bf16.mxu0 0
    %1124 = vmatpush2.bf16.msra.mxu0 0
    %1125 = vmatprep.mubr.bf16.mxu0 0
    %1126 = vmatmul.mubr.bf16.gmra.mxu0 %v1088
    %v1127 = vpop.f32.mrf.mxu0
    %v1128 = vadd.f32 0.0, %v1127
    %v1129 = vpop.f32.mrf.mxu0
    %v1130 = vpop.f32.mrf.mxu0
    %v1131 = vpop.f32.mrf.mxu0
    %1132 = vdwg.mxu0
    %1133 = vrot.lane.b32.xlu0 %v911, 112
    %v1134 = vpop.permute.xlu0 %1133
    %1135 = vrot.lane.b32.xlu0 %v912, 112
    %v1136 = vpop.permute.xlu0 %1135
    %v1138 = vsel %vm450, %v1134, 0
    %v1141 = vsel %vm450, %v1136, 0
    %1143 = vmatprep.subr.bf16.mxu0 0
    %1144 = vmatpush1.bf16.xpose.msra.mxu0 0
    %1145 = vmatprep.subr.bf16.mxu0 0
    %1146 = vmatpush1.bf16.xpose.msra.mxu0 0
    %1147 = vmatprep.subr.bf16.mxu0 0
    %1148 = vmatpush1.bf16.xpose.msra.mxu0 0
    %1149 = vmatprep.subr.bf16.mxu0 0
    %1150 = vmatpush1.bf16.xpose.msra.mxu0 0
    %1151 = vmatprep.subr.bf16.mxu0 0
    %1152 = vmatpush1.bf16.xpose.msra.mxu0 0
    %1153 = vmatprep.subr.bf16.mxu0 0
    %1154 = vmatpush1.bf16.xpose.msra.mxu0 0
    %1155 = vmatprep.subr.bf16.mxu0 0
    %1156 = vmatpush1.bf16.xpose.msra.mxu0 0
    %1157 = vmatprep.subr.bf16.mxu0 0
    %1158 = vmatpush1.bf16.xpose.msra.mxu0 %v1141
    %1159 = vmatprep.subr.bf16.mxu0 0
    %1160 = vmatpush2.bf16.xpose.msra.mxu0 0
    %1161 = vmatprep.subr.bf16.mxu0 0
    %1162 = vmatpush2.bf16.xpose.msra.mxu0 0
    %1163 = vmatprep.subr.bf16.mxu0 0
    %1164 = vmatpush2.bf16.xpose.msra.mxu0 0
    %1165 = vmatprep.subr.bf16.mxu0 0
    %1166 = vmatpush2.bf16.xpose.msra.mxu0 0
    %1167 = vmatprep.subr.bf16.mxu0 0
    %1168 = vmatpush2.bf16.xpose.msra.mxu0 0
    %1169 = vmatprep.subr.bf16.mxu0 0
    %1170 = vmatpush2.bf16.xpose.msra.mxu0 0
    %1171 = vmatprep.subr.bf16.mxu0 0
    %1172 = vmatpush2.bf16.xpose.msra.mxu0 0
    %1173 = vmatprep.subr.bf16.mxu0 0
    %1174 = vmatpush2.bf16.xpose.msra.mxu0 0
    %1175 = vmatprep.mubr.bf16.mxu0 0
    %1176 = vmatmul.mubr.bf16.gmra.mxu0 %v1138
    %v1177 = vpop.f32.mrf.mxu0
    %v1178 = vadd.f32 0.0, %v1177
    %v1179 = vpop.f32.mrf.mxu0
    %v1180 = vpop.f32.mrf.mxu0
    %v1181 = vpop.f32.mrf.mxu0
    %1182 = vdwg.mxu0
    %v1183 = vsel %vm910, %v1178, -1e+09
    %v1184 = vsel %vm450, %v1183, -inf
    %1185 = vmax.xlane.f32.xlu0 %v1184
    %v1186 = vpop.xlane.xlu0 %1185
    %v1187 = vsub.f32 %v1183, %v1186
    %v1188 = vmul.f32 %v1187, 1.442695
    %v1189 = vpow.pop %v1188
    %v1190 = vsel %vm450, %v1189, 0.0
    %1191 = vadd.xlane.f32.xlu0 %v1190
    %v1192 = vpop.xlane.xlu0 %1191
    %v1193 = vrcp.pop %v1192
    %v1194 = vmul.f32 %v1189, %v1193
    %v1195 = vpack.c.bf16 %v1194, %v1194
    %1196 = vrot.lane.b32.xlu0 %v913, 112
    %v1197 = vpop.permute.xlu0 %1196
    %v1199 = vsel %vm450, %v1195, 0
    %v1202 = vsel %vm513, %v1197, 0
    %1204 = vmatprep.subr.bf16.mxu0 0
    %1205 = vmatpush1.bf16.msra.mxu0 0
    %1206 = vmatprep.subr.bf16.mxu0 0
    %1207 = vmatpush1.bf16.msra.mxu0 0
    %1208 = vmatprep.subr.bf16.mxu0 0
    %1209 = vmatpush1.bf16.msra.mxu0 0
    %1210 = vmatprep.subr.bf16.mxu0 0
    %1211 = vmatpush1.bf16.msra.mxu0 0
    %1212 = vmatprep.subr.bf16.mxu0 0
    %1213 = vmatpush1.bf16.msra.mxu0 0
    %1214 = vmatprep.subr.bf16.mxu0 0
    %1215 = vmatpush1.bf16.msra.mxu0 0
    %1216 = vmatprep.subr.bf16.mxu0 0
    %1217 = vmatpush1.bf16.msra.mxu0 0
    %1218 = vmatprep.subr.bf16.mxu0 0
    %1219 = vmatpush1.bf16.msra.mxu0 %v1202
    %1220 = vmatprep.subr.bf16.mxu0 0
    %1221 = vmatpush2.bf16.msra.mxu0 0
    %1222 = vmatprep.subr.bf16.mxu0 0
    %1223 = vmatpush2.bf16.msra.mxu0 0
    %1224 = vmatprep.subr.bf16.mxu0 0
    %1225 = vmatpush2.bf16.msra.mxu0 0
    %1226 = vmatprep.subr.bf16.mxu0 0
    %1227 = vmatpush2.bf16.msra.mxu0 0
    %1228 = vmatprep.subr.bf16.mxu0 0
    %1229 = vmatpush2.bf16.msra.mxu0 0
    %1230 = vmatprep.subr.bf16.mxu0 0
    %1231 = vmatpush2.bf16.msra.mxu0 0
    %1232 = vmatprep.subr.bf16.mxu0 0
    %1233 = vmatpush2.bf16.msra.mxu0 0
    %1234 = vmatprep.subr.bf16.mxu0 0
    %1235 = vmatpush2.bf16.msra.mxu0 0
    %1236 = vmatprep.mubr.bf16.mxu0 0
    %1237 = vmatmul.mubr.bf16.gmra.mxu0 %v1199
    %v1238 = vpop.f32.mrf.mxu0
    %v1239 = vadd.f32 0.0, %v1238
    %v1240 = vpop.f32.mrf.mxu0
    %v1241 = vpop.f32.mrf.mxu0
    %v1242 = vpop.f32.mrf.mxu0
    %1243 = vdwg.mxu0
    %1244 = vrot.lane.b32.xlu0 %v911, 104
    %v1245 = vpop.permute.xlu0 %1244
    %1246 = vrot.lane.b32.xlu0 %v912, 104
    %v1247 = vpop.permute.xlu0 %1246
    %v1249 = vsel %vm450, %v1245, 0
    %v1252 = vsel %vm450, %v1247, 0
    %1254 = vmatprep.subr.bf16.mxu0 0
    %1255 = vmatpush1.bf16.xpose.msra.mxu0 0
    %1256 = vmatprep.subr.bf16.mxu0 0
    %1257 = vmatpush1.bf16.xpose.msra.mxu0 0
    %1258 = vmatprep.subr.bf16.mxu0 0
    %1259 = vmatpush1.bf16.xpose.msra.mxu0 0
    %1260 = vmatprep.subr.bf16.mxu0 0
    %1261 = vmatpush1.bf16.xpose.msra.mxu0 0
    %1262 = vmatprep.subr.bf16.mxu0 0
    %1263 = vmatpush1.bf16.xpose.msra.mxu0 0
    %1264 = vmatprep.subr.bf16.mxu0 0
    %1265 = vmatpush1.bf16.xpose.msra.mxu0 0
    %1266 = vmatprep.subr.bf16.mxu0 0
    %1267 = vmatpush1.bf16.xpose.msra.mxu0 0
    %1268 = vmatprep.subr.bf16.mxu0 0
    %1269 = vmatpush1.bf16.xpose.msra.mxu0 %v1252
    %1270 = vmatprep.subr.bf16.mxu0 0
    %1271 = vmatpush2.bf16.xpose.msra.mxu0 0
    %1272 = vmatprep.subr.bf16.mxu0 0
    %1273 = vmatpush2.bf16.xpose.msra.mxu0 0
    %1274 = vmatprep.subr.bf16.mxu0 0
    %1275 = vmatpush2.bf16.xpose.msra.mxu0 0
    %1276 = vmatprep.subr.bf16.mxu0 0
    %1277 = vmatpush2.bf16.xpose.msra.mxu0 0
    %1278 = vmatprep.subr.bf16.mxu0 0
    %1279 = vmatpush2.bf16.xpose.msra.mxu0 0
    %1280 = vmatprep.subr.bf16.mxu0 0
    %1281 = vmatpush2.bf16.xpose.msra.mxu0 0
    %1282 = vmatprep.subr.bf16.mxu0 0
    %1283 = vmatpush2.bf16.xpose.msra.mxu0 0
    %1284 = vmatprep.subr.bf16.mxu0 0
    %1285 = vmatpush2.bf16.xpose.msra.mxu0 0
    %1286 = vmatprep.mubr.bf16.mxu0 0
    %1287 = vmatmul.mubr.bf16.gmra.mxu0 %v1249
    %v1288 = vpop.f32.mrf.mxu0
    %v1289 = vadd.f32 0.0, %v1288
    %v1290 = vpop.f32.mrf.mxu0
    %v1291 = vpop.f32.mrf.mxu0
    %v1292 = vpop.f32.mrf.mxu0
    %1293 = vdwg.mxu0
    %v1294 = vsel %vm910, %v1289, -1e+09
    %v1295 = vsel %vm450, %v1294, -inf
    %1296 = vmax.xlane.f32.xlu0 %v1295
    %v1297 = vpop.xlane.xlu0 %1296
    %v1298 = vsub.f32 %v1294, %v1297
    %v1299 = vmul.f32 %v1298, 1.442695
    %v1300 = vpow.pop %v1299
    %v1301 = vsel %vm450, %v1300, 0.0
    %1302 = vadd.xlane.f32.xlu0 %v1301
    %v1303 = vpop.xlane.xlu0 %1302
    %v1304 = vrcp.pop %v1303
    %v1305 = vmul.f32 %v1300, %v1304
    %v1306 = vpack.c.bf16 %v1305, %v1305
    %1307 = vrot.lane.b32.xlu0 %v913, 104
    %v1308 = vpop.permute.xlu0 %1307
    %v1310 = vsel %vm450, %v1306, 0
    %v1313 = vsel %vm513, %v1308, 0
    %1315 = vmatprep.subr.bf16.mxu0 0
    %1316 = vmatpush1.bf16.msra.mxu0 0
    %1317 = vmatprep.subr.bf16.mxu0 0
    %1318 = vmatpush1.bf16.msra.mxu0 0
    %1319 = vmatprep.subr.bf16.mxu0 0
    %1320 = vmatpush1.bf16.msra.mxu0 0
    %1321 = vmatprep.subr.bf16.mxu0 0
    %1322 = vmatpush1.bf16.msra.mxu0 0
    %1323 = vmatprep.subr.bf16.mxu0 0
    %1324 = vmatpush1.bf16.msra.mxu0 0
    %1325 = vmatprep.subr.bf16.mxu0 0
    %1326 = vmatpush1.bf16.msra.mxu0 0
    %1327 = vmatprep.subr.bf16.mxu0 0
    %1328 = vmatpush1.bf16.msra.mxu0 0
    %1329 = vmatprep.subr.bf16.mxu0 0
    %1330 = vmatpush1.bf16.msra.mxu0 %v1313
    %1331 = vmatprep.subr.bf16.mxu0 0
    %1332 = vmatpush2.bf16.msra.mxu0 0
    %1333 = vmatprep.subr.bf16.mxu0 0
    %1334 = vmatpush2.bf16.msra.mxu0 0
    %1335 = vmatprep.subr.bf16.mxu0 0
    %1336 = vmatpush2.bf16.msra.mxu0 0
    %1337 = vmatprep.subr.bf16.mxu0 0
    %1338 = vmatpush2.bf16.msra.mxu0 0
    %1339 = vmatprep.subr.bf16.mxu0 0
    %1340 = vmatpush2.bf16.msra.mxu0 0
    %1341 = vmatprep.subr.bf16.mxu0 0
    %1342 = vmatpush2.bf16.msra.mxu0 0
    %1343 = vmatprep.subr.bf16.mxu0 0
    %1344 = vmatpush2.bf16.msra.mxu0 0
    %1345 = vmatprep.subr.bf16.mxu0 0
    %1346 = vmatpush2.bf16.msra.mxu0 0
    %1347 = vmatprep.mubr.bf16.mxu0 0
    %1348 = vmatmul.mubr.bf16.gmra.mxu0 %v1310
    %v1349 = vpop.f32.mrf.mxu0
    %v1350 = vadd.f32 0.0, %v1349
    %v1351 = vpop.f32.mrf.mxu0
    %v1352 = vpop.f32.mrf.mxu0
    %v1353 = vpop.f32.mrf.mxu0
    %1354 = vdwg.mxu0
    %1356 = vrot.lane.b32.xlu0 %v1128, 8
    %v1357 = vpop.permute.xlu0 %1356
    %1360 = vrot.lane.b32.xlu0 %v1239, 16
    %v1361 = vpop.permute.xlu0 %1360
    %1364 = vrot.lane.b32.xlu0 %v1350, 24
    %v1365 = vpop.permute.xlu0 %1364
    %v1367 = vsel %vm450, %v1014, %v1357
    %v1368 = vsel %vm906, %v1367, %v1361
    %v1369 = vsel %vm908, %v1368, %v1365
    %v1370 = vpack.c.bf16 %v1369, %v909
    %v1371 = vld [vmem:[#allocation8] sm:$0xf]
    %v1372 = vld [vmem:[#allocation8 + $0x4] sm:$0xf]
    %v1373 = vld [vmem:[#allocation8 + $0x8] sm:$0xf]
    %v1374 = vld [vmem:[#allocation8 + $0xc] sm:$0xf]
    %v1379 = vunpack.c.l.b16 %v1371
    %v1380 = vunpack.c.l.b16 %v1372
    %v1381 = vunpack.c.l.b16 %v1373
    %v1382 = vunpack.c.l.b16 %v1374
    %v1383 = vpack.c.b16 %v1380, %v1379
    %v1384 = vpack.c.b16 %v1382, %v1381
    %v1388 = vsel %vm211, %v1370, 0
    %1390 = vmatprep.subr.bf16.mxu0 0
    %1391 = vmatpush1.bf16.msra.mxu0 0
    %1392 = vmatprep.subr.bf16.mxu0 0
    %1393 = vmatpush1.bf16.msra.mxu0 0
    %1394 = vmatprep.subr.bf16.mxu0 0
    %1395 = vmatpush1.bf16.msra.mxu0 0
    %1396 = vmatprep.subr.bf16.mxu0 0
    %1397 = vmatpush1.bf16.msra.mxu0 0
    %1398 = vmatprep.subr.bf16.mxu0 0
    %1399 = vmatpush1.bf16.msra.mxu0 0
    %1400 = vmatprep.subr.bf16.mxu0 0
    %1401 = vmatpush1.bf16.msra.mxu0 0
    %1402 = vmatprep.subr.bf16.mxu0 0
    %1403 = vmatpush1.bf16.msra.mxu0 %v1384
    %1404 = vmatprep.subr.bf16.mxu0 0
    %1405 = vmatpush1.bf16.msra.mxu0 %v1383
    %1406 = vmatprep.subr.bf16.mxu0 0
    %1407 = vmatpush2.bf16.msra.mxu0 0
    %1408 = vmatprep.subr.bf16.mxu0 0
    %1409 = vmatpush2.bf16.msra.mxu0 0
    %1410 = vmatprep.subr.bf16.mxu0 0
    %1411 = vmatpush2.bf16.msra.mxu0 0
    %1412 = vmatprep.subr.bf16.mxu0 0
    %1413 = vmatpush2.bf16.msra.mxu0 0
    %1414 = vmatprep.subr.bf16.mxu0 0
    %1415 = vmatpush2.bf16.msra.mxu0 0
    %1416 = vmatprep.subr.bf16.mxu0 0
    %1417 = vmatpush2.bf16.msra.mxu0 0
    %1418 = vmatprep.subr.bf16.mxu0 0
    %1419 = vmatpush2.bf16.msra.mxu0 0
    %1420 = vmatprep.subr.bf16.mxu0 0
    %1421 = vmatpush2.bf16.msra.mxu0 0
    %1422 = vmatprep.mubr.bf16.mxu0 0
    %1423 = vmatmul.mubr.bf16.gmra.mxu0 %v1388
    %v1424 = vpop.f32.mrf.mxu0
    %v1425 = vadd.f32 0.0, %v1424
    %v1426 = vpop.f32.mrf.mxu0
    %v1427 = vpop.f32.mrf.mxu0
    %v1428 = vadd.f32 0.0, %v1427
    %v1429 = vpop.f32.mrf.mxu0
    %1430 = vdwg.mxu0
    %v1431 = vadd.f32 %v195, %v1425
    %v1432 = vadd.f32 %v196, %v1428
    %v1433 = vsel %vm211, %v1431, 0.0
    %1434 = vadd.xlane.f32.xlu0 %v1433
    %v1435 = vpop.xlane.xlu0 %1434
    %v1436 = vsel %vm211, %v1432, 0.0
    %1437 = vadd.xlane.f32.xlu0 %v1436
    %v1438 = vpop.xlane.xlu0 %1437
    %v1439 = vmul.f32 %v1435, %v218
    %v1440 = vmul.f32 %v1438, %v218
    %v1441 = vsub.f32 %v1431, %v1439
    %v1442 = vsub.f32 %v1432, %v1440
    %v1443 = vmul.f32 %v1441, %v1441
    %v1444 = vmul.f32 %v1442, %v1442
    %v1445 = vsel %vm211, %v1443, 0.0
    %1446 = vadd.xlane.f32.xlu0 %v1445
    %v1447 = vpop.xlane.xlu0 %1446
    %v1448 = vsel %vm211, %v1444, 0.0
    %1449 = vadd.xlane.f32.xlu0 %v1448
    %v1450 = vpop.xlane.xlu0 %1449
    %v1451 = vmul.f32 %v1447, 0.032258064
    %v1452 = vmul.f32 %v1450, 0.032258064
    %v1453 = vrsqrt.pop %v1451
    %v1454 = vmul.f32 %v1451, %v1453
    %vm1455 = vcmp.eq.f32.partialorder %v1451, inf
    %v1456 = vsel %vm1455, %v1451, %v1454
    %vm1457 = vcmp.eq.f32.partialorder %v1451, 0.0
    %v1458 = vand.u32 %v1451, 2147483648
    %v1459 = vsel %vm1457, %v1458, %v1456
    %v1460 = vrsqrt.pop %v1452
    %v1461 = vmul.f32 %v1452, %v1460
    %vm1462 = vcmp.eq.f32.partialorder %v1452, inf
    %v1463 = vsel %vm1462, %v1452, %v1461
    %vm1464 = vcmp.eq.f32.partialorder %v1452, 0.0
    %v1465 = vand.u32 %v1452, 2147483648
    %v1466 = vsel %vm1464, %v1465, %v1463
    %v1467 = vld [vmem:[%s18] sm:$0x1]
    %v1468 = vadd.f32 %v1459, 1e-06
    %v1469 = vadd.f32 %v1466, 1e-06
    %v1470 = vrcp.pop %v1468
    %v1471 = vmul.f32 %v1441, %v1470
    %v1472 = vrcp.pop %v1469
    %v1473 = vmul.f32 %v1442, %v1472
    %v1475 = vlaneseq
    %v1476 = vshrl.u32 %v1475, 7
    %v1477 = vsub.s32 0, %v1476
    %v1478 = vrot.slane %v1467, %v1477
    %v1480 = vmul.f32 %v1478, %v1471
    %v1481 = vmul.f32 %v1478, %v1473
    %v1482 = vld [vmem:[%s19] sm:$0x1]
    %v1484 = vlaneseq
    %v1485 = vshrl.u32 %v1484, 7
    %v1486 = vsub.s32 0, %v1485
    %v1487 = vrot.slane %v1482, %v1486
    %v1489 = vadd.f32 %v1480, %v1487
    %v1490 = vadd.f32 %v1481, %v1487
    %v1491 = vpack.c.bf16 %v1490, %v1489
    %v1492 = vpack.c.bf16 %v198, %v197
    %v1493 = vld [vmem:[#allocation10] sm:$0xf]
    %v1494 = vld [vmem:[#allocation10 + $0x4] sm:$0xf]
    %v1495 = vld [vmem:[#allocation10 + $0x8] sm:$0xf]
    %v1496 = vld [vmem:[#allocation10 + $0xc] sm:$0xf]
    %v1501 = vunpack.c.l.b16 %v1493
    %v1502 = vunpack.c.l.b16 %v1494
    %v1503 = vunpack.c.l.b16 %v1495
    %v1504 = vunpack.c.l.b16 %v1496
    %v1505 = vpack.c.b16 %v1502, %v1501
    %v1506 = vpack.c.b16 %v1504, %v1503
    %v1510 = vsel %vm211, %v1491, 0
    %1512 = vmatprep.subr.bf16.mxu0 0
    %1513 = vmatpush1.bf16.msra.mxu0 0
    %1514 = vmatprep.subr.bf16.mxu0 0
    %1515 = vmatpush1.bf16.msra.mxu0 0
    %1516 = vmatprep.subr.bf16.mxu0 0
    %1517 = vmatpush1.bf16.msra.mxu0 0
    %1518 = vmatprep.subr.bf16.mxu0 0
    %1519 = vmatpush1.bf16.msra.mxu0 0
    %1520 = vmatprep.subr.bf16.mxu0 0
    %1521 = vmatpush1.bf16.msra.mxu0 0
    %1522 = vmatprep.subr.bf16.mxu0 0
    %1523 = vmatpush1.bf16.msra.mxu0 0
    %1524 = vmatprep.subr.bf16.mxu0 0
    %1525 = vmatpush1.bf16.msra.mxu0 %v1506
    %1526 = vmatprep.subr.bf16.mxu0 0
    %1527 = vmatpush1.bf16.msra.mxu0 %v1505
    %1528 = vmatprep.subr.bf16.mxu0 0
    %1529 = vmatpush2.bf16.msra.mxu0 0
    %1530 = vmatprep.subr.bf16.mxu0 0
    %1531 = vmatpush2.bf16.msra.mxu0 0
    %1532 = vmatprep.subr.bf16.mxu0 0
    %1533 = vmatpush2.bf16.msra.mxu0 0
    %1534 = vmatprep.subr.bf16.mxu0 0
    %1535 = vmatpush2.bf16.msra.mxu0 0
    %1536 = vmatprep.subr.bf16.mxu0 0
    %1537 = vmatpush2.bf16.msra.mxu0 0
    %1538 = vmatprep.subr.bf16.mxu0 0
    %1539 = vmatpush2.bf16.msra.mxu0 0
    %1540 = vmatprep.subr.bf16.mxu0 0
    %1541 = vmatpush2.bf16.msra.mxu0 0
    %1542 = vmatprep.subr.bf16.mxu0 0
    %1543 = vmatpush2.bf16.msra.mxu0 0
    %1544 = vmatprep.mubr.bf16.mxu0 0
    %1545 = vmatmul.mubr.bf16.gmra.mxu0 %v1510
    %v1546 = vpop.f32.mrf.mxu0
    %v1547 = vadd.f32 0.0, %v1546
    %v1548 = vpop.f32.mrf.mxu0
    %v1549 = vpop.f32.mrf.mxu0
    %v1550 = vadd.f32 0.0, %v1549
    %v1551 = vpop.f32.mrf.mxu0
    %1552 = vdwg.mxu0
    %v1553 = vld [vmem:[#allocation11] sm:$0xf]
    %v1554 = vld [vmem:[#allocation11 + $0x4] sm:$0xf]
    %v1555 = vld [vmem:[#allocation11 + $0x8] sm:$0xf]
    %v1556 = vld [vmem:[#allocation11 + $0xc] sm:$0xf]
    %v1561 = vunpack.c.l.b16 %v1553
    %v1562 = vunpack.c.l.b16 %v1554
    %v1563 = vunpack.c.l.b16 %v1555
    %v1564 = vunpack.c.l.b16 %v1556
    %v1565 = vpack.c.b16 %v1562, %v1561
    %v1566 = vpack.c.b16 %v1564, %v1563
    %v1570 = vsel %vm211, %v1492, 0
    %1572 = vmatprep.subr.bf16.mxu0 0
    %1573 = vmatpush1.bf16.msra.mxu0 0
    %1574 = vmatprep.subr.bf16.mxu0 0
    %1575 = vmatpush1.bf16.msra.mxu0 0
    %1576 = vmatprep.subr.bf16.mxu0 0
    %1577 = vmatpush1.bf16.msra.mxu0 0
    %1578 = vmatprep.subr.bf16.mxu0 0
    %1579 = vmatpush1.bf16.msra.mxu0 0
    %1580 = vmatprep.subr.bf16.mxu0 0
    %1581 = vmatpush1.bf16.msra.mxu0 0
    %1582 = vmatprep.subr.bf16.mxu0 0
    %1583 = vmatpush1.bf16.msra.mxu0 0
    %1584 = vmatprep.subr.bf16.mxu0 0
    %1585 = vmatpush1.bf16.msra.mxu0 %v1566
    %1586 = vmatprep.subr.bf16.mxu0 0
    %1587 = vmatpush1.bf16.msra.mxu0 %v1565
    %1588 = vmatprep.subr.bf16.mxu0 0
    %1589 = vmatpush2.bf16.msra.mxu0 0
    %1590 = vmatprep.subr.bf16.mxu0 0
    %1591 = vmatpush2.bf16.msra.mxu0 0
    %1592 = vmatprep.subr.bf16.mxu0 0
    %1593 = vmatpush2.bf16.msra.mxu0 0
    %1594 = vmatprep.subr.bf16.mxu0 0
    %1595 = vmatpush2.bf16.msra.mxu0 0
    %1596 = vmatprep.subr.bf16.mxu0 0
    %1597 = vmatpush2.bf16.msra.mxu0 0
    %1598 = vmatprep.subr.bf16.mxu0 0
    %1599 = vmatpush2.bf16.msra.mxu0 0
    %1600 = vmatprep.subr.bf16.mxu0 0
    %1601 = vmatpush2.bf16.msra.mxu0 0
    %1602 = vmatprep.subr.bf16.mxu0 0
    %1603 = vmatpush2.bf16.msra.mxu0 0
    %1604 = vmatprep.mubr.bf16.mxu0 0
    %1605 = vmatmul.mubr.bf16.gmra.mxu0 %v1570
    %v1606 = vpop.f32.mrf.mxu0
    %v1607 = vadd.f32 0.0, %v1606
    %v1608 = vpop.f32.mrf.mxu0
    %v1609 = vpop.f32.mrf.mxu0
    %v1610 = vadd.f32 0.0, %v1609
    %v1611 = vpop.f32.mrf.mxu0
    %1612 = vdwg.mxu0
    %v1613 = vld [vmem:[#allocation13] sm:$0xf]
    %v1614 = vld [vmem:[#allocation13 + $0x4] sm:$0xf]
    %v1615 = vld [vmem:[#allocation13 + $0x8] sm:$0xf]
    %v1616 = vld [vmem:[#allocation13 + $0xc] sm:$0xf]
    %v1621 = vunpack.c.l.b16 %v1613
    %v1622 = vunpack.c.l.b16 %v1614
    %v1623 = vunpack.c.l.b16 %v1615
    %v1624 = vunpack.c.l.b16 %v1616
    %v1625 = vpack.c.b16 %v1622, %v1621
    %v1626 = vpack.c.b16 %v1624, %v1623
    %1629 = vmatprep.subr.bf16.mxu0 0
    %1630 = vmatpush1.bf16.msra.mxu0 0
    %1631 = vmatprep.subr.bf16.mxu0 0
    %1632 = vmatpush1.bf16.msra.mxu0 0
    %1633 = vmatprep.subr.bf16.mxu0 0
    %1634 = vmatpush1.bf16.msra.mxu0 0
    %1635 = vmatprep.subr.bf16.mxu0 0
    %1636 = vmatpush1.bf16.msra.mxu0 0
    %1637 = vmatprep.subr.bf16.mxu0 0
    %1638 = vmatpush1.bf16.msra.mxu0 0
    %1639 = vmatprep.subr.bf16.mxu0 0
    %1640 = vmatpush1.bf16.msra.mxu0 0
    %1641 = vmatprep.subr.bf16.mxu0 0
    %1642 = vmatpush1.bf16.msra.mxu0 %v1626
    %1643 = vmatprep.subr.bf16.mxu0 0
    %1644 = vmatpush1.bf16.msra.mxu0 %v1625
    %1645 = vmatprep.subr.bf16.mxu0 0
    %1646 = vmatpush2.bf16.msra.mxu0 0
    %1647 = vmatprep.subr.bf16.mxu0 0
    %1648 = vmatpush2.bf16.msra.mxu0 0
    %1649 = vmatprep.subr.bf16.mxu0 0
    %1650 = vmatpush2.bf16.msra.mxu0 0
    %1651 = vmatprep.subr.bf16.mxu0 0
    %1652 = vmatpush2.bf16.msra.mxu0 0
    %1653 = vmatprep.subr.bf16.mxu0 0
    %1654 = vmatpush2.bf16.msra.mxu0 0
    %1655 = vmatprep.subr.bf16.mxu0 0
    %1656 = vmatpush2.bf16.msra.mxu0 0
    %1657 = vmatprep.subr.bf16.mxu0 0
    %1658 = vmatpush2.bf16.msra.mxu0 0
    %1659 = vmatprep.subr.bf16.mxu0 0
    %1660 = vmatpush2.bf16.msra.mxu0 0
    %1661 = vmatprep.mubr.bf16.mxu0 0
    %1662 = vmatmul.mubr.bf16.gmra.mxu0 %v1570
    %v1663 = vpop.f32.mrf.mxu0
    %v1664 = vadd.f32 0.0, %v1663
    %v1665 = vpop.f32.mrf.mxu0
    %v1666 = vpop.f32.mrf.mxu0
    %v1667 = vadd.f32 0.0, %v1666
    %v1668 = vpop.f32.mrf.mxu0
    %1669 = vdwg.mxu0
    %vm1670 = vcmp.ne.f32.partialorder %v209, 0.0
    %v1671 = vpack.c.bf16 %v1547, %v1547
    %v1672 = vpack.c.bf16 %v1607, %v1607
    %v1673 = vpack.c.bf16 %v1664, %v1664
    %v1675 = vsel %vm450, %v1671, 0
    %v1678 = vsel %vm450, %v1672, 0
    %1680 = vmatprep.subr.bf16.mxu0 0
    %1681 = vmatpush1.bf16.xpose.msra.mxu0 0
    %1682 = vmatprep.subr.bf16.mxu0 0
    %1683 = vmatpush1.bf16.xpose.msra.mxu0 0
    %1684 = vmatprep.subr.bf16.mxu0 0
    %1685 = vmatpush1.bf16.xpose.msra.mxu0 0
    %1686 = vmatprep.subr.bf16.mxu0 0
    %1687 = vmatpush1.bf16.xpose.msra.mxu0 0
    %1688 = vmatprep.subr.bf16.mxu0 0
    %1689 = vmatpush1.bf16.xpose.msra.mxu0 0
    %1690 = vmatprep.subr.bf16.mxu0 0
    %1691 = vmatpush1.bf16.xpose.msra.mxu0 0
    %1692 = vmatprep.subr.bf16.mxu0 0
    %1693 = vmatpush1.bf16.xpose.msra.mxu0 0
    %1694 = vmatprep.subr.bf16.mxu0 0
    %1695 = vmatpush1.bf16.xpose.msra.mxu0 %v1678
    %1696 = vmatprep.subr.bf16.mxu0 0
    %1697 = vmatpush2.bf16.xpose.msra.mxu0 0
    %1698 = vmatprep.subr.bf16.mxu0 0
    %1699 = vmatpush2.bf16.xpose.msra.mxu0 0
    %1700 = vmatprep.subr.bf16.mxu0 0
    %1701 = vmatpush2.bf16.xpose.msra.mxu0 0
    %1702 = vmatprep.subr.bf16.mxu0 0
    %1703 = vmatpush2.bf16.xpose.msra.mxu0 0
    %1704 = vmatprep.subr.bf16.mxu0 0
    %1705 = vmatpush2.bf16.xpose.msra.mxu0 0
    %1706 = vmatprep.subr.bf16.mxu0 0
    %1707 = vmatpush2.bf16.xpose.msra.mxu0 0
    %1708 = vmatprep.subr.bf16.mxu0 0
    %1709 = vmatpush2.bf16.xpose.msra.mxu0 0
    %1710 = vmatprep.subr.bf16.mxu0 0
    %1711 = vmatpush2.bf16.xpose.msra.mxu0 0
    %1712 = vmatprep.mubr.bf16.mxu0 0
    %1713 = vmatmul.mubr.bf16.gmra.mxu0 %v1675
    %v1714 = vpop.f32.mrf.mxu0
    %v1715 = vadd.f32 0.0, %v1714
    %v1716 = vpop.f32.mrf.mxu0
    %v1717 = vpop.f32.mrf.mxu0
    %v1718 = vpop.f32.mrf.mxu0
    %1719 = vdwg.mxu0
    %v1720 = vsel %vm1670, %v1715, -1e+09
    %v1721 = vsel %vm450, %v1720, -inf
    %1722 = vmax.xlane.f32.xlu0 %v1721
    %v1723 = vpop.xlane.xlu0 %1722
    %v1724 = vsub.f32 %v1720, %v1723
    %v1725 = vmul.f32 %v1724, 1.442695
    %v1726 = vpow.pop %v1725
    %v1727 = vsel %vm450, %v1726, 0.0
    %1728 = vadd.xlane.f32.xlu0 %v1727
    %v1729 = vpop.xlane.xlu0 %1728
    %v1730 = vrcp.pop %v1729
    %v1731 = vmul.f32 %v1726, %v1730
    %v1732 = vpack.c.bf16 %v1731, %v1731
    %v1734 = vsel %vm450, %v1732, 0
    %v1737 = vsel %vm513, %v1673, 0
    %1739 = vmatprep.subr.bf16.mxu0 0
    %1740 = vmatpush1.bf16.msra.mxu0 0
    %1741 = vmatprep.subr.bf16.mxu0 0
    %1742 = vmatpush1.bf16.msra.mxu0 0
    %1743 = vmatprep.subr.bf16.mxu0 0
    %1744 = vmatpush1.bf16.msra.mxu0 0
    %1745 = vmatprep.subr.bf16.mxu0 0
    %1746 = vmatpush1.bf16.msra.mxu0 0
    %1747 = vmatprep.subr.bf16.mxu0 0
    %1748 = vmatpush1.bf16.msra.mxu0 0
    %1749 = vmatprep.subr.bf16.mxu0 0
    %1750 = vmatpush1.bf16.msra.mxu0 0
    %1751 = vmatprep.subr.bf16.mxu0 0
    %1752 = vmatpush1.bf16.msra.mxu0 0
    %1753 = vmatprep.subr.bf16.mxu0 0
    %1754 = vmatpush1.bf16.msra.mxu0 %v1737
    %1755 = vmatprep.subr.bf16.mxu0 0
    %1756 = vmatpush2.bf16.msra.mxu0 0
    %1757 = vmatprep.subr.bf16.mxu0 0
    %1758 = vmatpush2.bf16.msra.mxu0 0
    %1759 = vmatprep.subr.bf16.mxu0 0
    %1760 = vmatpush2.bf16.msra.mxu0 0
    %1761 = vmatprep.subr.bf16.mxu0 0
    %1762 = vmatpush2.bf16.msra.mxu0 0
    %1763 = vmatprep.subr.bf16.mxu0 0
    %1764 = vmatpush2.bf16.msra.mxu0 0
    %1765 = vmatprep.subr.bf16.mxu0 0
    %1766 = vmatpush2.bf16.msra.mxu0 0
    %1767 = vmatprep.subr.bf16.mxu0 0
    %1768 = vmatpush2.bf16.msra.mxu0 0
    %1769 = vmatprep.subr.bf16.mxu0 0
    %1770 = vmatpush2.bf16.msra.mxu0 0
    %1771 = vmatprep.mubr.bf16.mxu0 0
    %1772 = vmatmul.mubr.bf16.gmra.mxu0 %v1734
    %v1773 = vpop.f32.mrf.mxu0
    %v1774 = vadd.f32 0.0, %v1773
    %v1775 = vpop.f32.mrf.mxu0
    %v1776 = vpop.f32.mrf.mxu0
    %v1777 = vpop.f32.mrf.mxu0
    %1778 = vdwg.mxu0
    %1780 = vrot.lane.b32.xlu0 %v1671, 120
    %v1781 = vpop.permute.xlu0 %1780
    %1783 = vrot.lane.b32.xlu0 %v1672, 120
    %v1784 = vpop.permute.xlu0 %1783
    %v1786 = vsel %vm450, %v1781, 0
    %v1789 = vsel %vm450, %v1784, 0
    %1791 = vmatprep.subr.bf16.mxu0 0
    %1792 = vmatpush1.bf16.xpose.msra.mxu0 0
    %1793 = vmatprep.subr.bf16.mxu0 0
    %1794 = vmatpush1.bf16.xpose.msra.mxu0 0
    %1795 = vmatprep.subr.bf16.mxu0 0
    %1796 = vmatpush1.bf16.xpose.msra.mxu0 0
    %1797 = vmatprep.subr.bf16.mxu0 0
    %1798 = vmatpush1.bf16.xpose.msra.mxu0 0
    %1799 = vmatprep.subr.bf16.mxu0 0
    %1800 = vmatpush1.bf16.xpose.msra.mxu0 0
    %1801 = vmatprep.subr.bf16.mxu0 0
    %1802 = vmatpush1.bf16.xpose.msra.mxu0 0
    %1803 = vmatprep.subr.bf16.mxu0 0
    %1804 = vmatpush1.bf16.xpose.msra.mxu0 0
    %1805 = vmatprep.subr.bf16.mxu0 0
    %1806 = vmatpush1.bf16.xpose.msra.mxu0 %v1789
    %1807 = vmatprep.subr.bf16.mxu0 0
    %1808 = vmatpush2.bf16.xpose.msra.mxu0 0
    %1809 = vmatprep.subr.bf16.mxu0 0
    %1810 = vmatpush2.bf16.xpose.msra.mxu0 0
    %1811 = vmatprep.subr.bf16.mxu0 0
    %1812 = vmatpush2.bf16.xpose.msra.mxu0 0
    %1813 = vmatprep.subr.bf16.mxu0 0
    %1814 = vmatpush2.bf16.xpose.msra.mxu0 0
    %1815 = vmatprep.subr.bf16.mxu0 0
    %1816 = vmatpush2.bf16.xpose.msra.mxu0 0
    %1817 = vmatprep.subr.bf16.mxu0 0
    %1818 = vmatpush2.bf16.xpose.msra.mxu0 0
    %1819 = vmatprep.subr.bf16.mxu0 0
    %1820 = vmatpush2.bf16.xpose.msra.mxu0 0
    %1821 = vmatprep.subr.bf16.mxu0 0
    %1822 = vmatpush2.bf16.xpose.msra.mxu0 0
    %1823 = vmatprep.mubr.bf16.mxu0 0
    %1824 = vmatmul.mubr.bf16.gmra.mxu0 %v1786
    %v1825 = vpop.f32.mrf.mxu0
    %v1826 = vadd.f32 0.0, %v1825
    %v1827 = vpop.f32.mrf.mxu0
    %v1828 = vpop.f32.mrf.mxu0
    %v1829 = vpop.f32.mrf.mxu0
    %1830 = vdwg.mxu0
    %v1831 = vsel %vm1670, %v1826, -1e+09
    %v1832 = vsel %vm450, %v1831, -inf
    %1833 = vmax.xlane.f32.xlu0 %v1832
    %v1834 = vpop.xlane.xlu0 %1833
    %v1835 = vsub.f32 %v1831, %v1834
    %v1836 = vmul.f32 %v1835, 1.442695
    %v1837 = vpow.pop %v1836
    %v1838 = vsel %vm450, %v1837, 0.0
    %1839 = vadd.xlane.f32.xlu0 %v1838
    %v1840 = vpop.xlane.xlu0 %1839
    %v1841 = vrcp.pop %v1840
    %v1842 = vmul.f32 %v1837, %v1841
    %v1843 = vpack.c.bf16 %v1842, %v1842
    %1845 = vrot.lane.b32.xlu0 %v1673, 120
    %v1846 = vpop.permute.xlu0 %1845
    %v1848 = vsel %vm450, %v1843, 0
    %v1851 = vsel %vm513, %v1846, 0
    %1853 = vmatprep.subr.bf16.mxu0 0
    %1854 = vmatpush1.bf16.msra.mxu0 0
    %1855 = vmatprep.subr.bf16.mxu0 0
    %1856 = vmatpush1.bf16.msra.mxu0 0
    %1857 = vmatprep.subr.bf16.mxu0 0
    %1858 = vmatpush1.bf16.msra.mxu0 0
    %1859 = vmatprep.subr.bf16.mxu0 0
    %1860 = vmatpush1.bf16.msra.mxu0 0
    %1861 = vmatprep.subr.bf16.mxu0 0
    %1862 = vmatpush1.bf16.msra.mxu0 0
    %1863 = vmatprep.subr.bf16.mxu0 0
    %1864 = vmatpush1.bf16.msra.mxu0 0
    %1865 = vmatprep.subr.bf16.mxu0 0
    %1866 = vmatpush1.bf16.msra.mxu0 0
    %1867 = vmatprep.subr.bf16.mxu0 0
    %1868 = vmatpush1.bf16.msra.mxu0 %v1851
    %1869 = vmatprep.subr.bf16.mxu0 0
    %1870 = vmatpush2.bf16.msra.mxu0 0
    %1871 = vmatprep.subr.bf16.mxu0 0
    %1872 = vmatpush2.bf16.msra.mxu0 0
    %1873 = vmatprep.subr.bf16.mxu0 0
    %1874 = vmatpush2.bf16.msra.mxu0 0
    %1875 = vmatprep.subr.bf16.mxu0 0
    %1876 = vmatpush2.bf16.msra.mxu0 0
    %1877 = vmatprep.subr.bf16.mxu0 0
    %1878 = vmatpush2.bf16.msra.mxu0 0
    %1879 = vmatprep.subr.bf16.mxu0 0
    %1880 = vmatpush2.bf16.msra.mxu0 0
    %1881 = vmatprep.subr.bf16.mxu0 0
    %1882 = vmatpush2.bf16.msra.mxu0 0
    %1883 = vmatprep.subr.bf16.mxu0 0
    %1884 = vmatpush2.bf16.msra.mxu0 0
    %1885 = vmatprep.mubr.bf16.mxu0 0
    %1886 = vmatmul.mubr.bf16.gmra.mxu0 %v1848
    %v1887 = vpop.f32.mrf.mxu0
    %v1888 = vadd.f32 0.0, %v1887
    %v1889 = vpop.f32.mrf.mxu0
    %v1890 = vpop.f32.mrf.mxu0
    %v1891 = vpop.f32.mrf.mxu0
    %1892 = vdwg.mxu0
    %1893 = vrot.lane.b32.xlu0 %v1671, 112
    %v1894 = vpop.permute.xlu0 %1893
    %1895 = vrot.lane.b32.xlu0 %v1672, 112
    %v1896 = vpop.permute.xlu0 %1895
    %v1898 = vsel %vm450, %v1894, 0
    %v1901 = vsel %vm450, %v1896, 0
    %1903 = vmatprep.subr.bf16.mxu0 0
    %1904 = vmatpush1.bf16.xpose.msra.mxu0 0
    %1905 = vmatprep.subr.bf16.mxu0 0
    %1906 = vmatpush1.bf16.xpose.msra.mxu0 0
    %1907 = vmatprep.subr.bf16.mxu0 0
    %1908 = vmatpush1.bf16.xpose.msra.mxu0 0
    %1909 = vmatprep.subr.bf16.mxu0 0
    %1910 = vmatpush1.bf16.xpose.msra.mxu0 0
    %1911 = vmatprep.subr.bf16.mxu0 0
    %1912 = vmatpush1.bf16.xpose.msra.mxu0 0
    %1913 = vmatprep.subr.bf16.mxu0 0
    %1914 = vmatpush1.bf16.xpose.msra.mxu0 0
    %1915 = vmatprep.subr.bf16.mxu0 0
    %1916 = vmatpush1.bf16.xpose.msra.mxu0 0
    %1917 = vmatprep.subr.bf16.mxu0 0
    %1918 = vmatpush1.bf16.xpose.msra.mxu0 %v1901
    %1919 = vmatprep.subr.bf16.mxu0 0
    %1920 = vmatpush2.bf16.xpose.msra.mxu0 0
    %1921 = vmatprep.subr.bf16.mxu0 0
    %1922 = vmatpush2.bf16.xpose.msra.mxu0 0
    %1923 = vmatprep.subr.bf16.mxu0 0
    %1924 = vmatpush2.bf16.xpose.msra.mxu0 0
    %1925 = vmatprep.subr.bf16.mxu0 0
    %1926 = vmatpush2.bf16.xpose.msra.mxu0 0
    %1927 = vmatprep.subr.bf16.mxu0 0
    %1928 = vmatpush2.bf16.xpose.msra.mxu0 0
    %1929 = vmatprep.subr.bf16.mxu0 0
    %1930 = vmatpush2.bf16.xpose.msra.mxu0 0
    %1931 = vmatprep.subr.bf16.mxu0 0
    %1932 = vmatpush2.bf16.xpose.msra.mxu0 0
    %1933 = vmatprep.subr.bf16.mxu0 0
    %1934 = vmatpush2.bf16.xpose.msra.mxu0 0
    %1935 = vmatprep.mubr.bf16.mxu0 0
    %1936 = vmatmul.mubr.bf16.gmra.mxu0 %v1898
    %v1937 = vpop.f32.mrf.mxu0
    %v1938 = vadd.f32 0.0, %v1937
    %v1939 = vpop.f32.mrf.mxu0
    %v1940 = vpop.f32.mrf.mxu0
    %v1941 = vpop.f32.mrf.mxu0
    %1942 = vdwg.mxu0
    %v1943 = vsel %vm1670, %v1938, -1e+09
    %v1944 = vsel %vm450, %v1943, -inf
    %1945 = vmax.xlane.f32.xlu0 %v1944
    %v1946 = vpop.xlane.xlu0 %1945
    %v1947 = vsub.f32 %v1943, %v1946
    %v1948 = vmul.f32 %v1947, 1.442695
    %v1949 = vpow.pop %v1948
    %v1950 = vsel %vm450, %v1949, 0.0
    %1951 = vadd.xlane.f32.xlu0 %v1950
    %v1952 = vpop.xlane.xlu0 %1951
    %v1953 = vrcp.pop %v1952
    %v1954 = vmul.f32 %v1949, %v1953
    %v1955 = vpack.c.bf16 %v1954, %v1954
    %1956 = vrot.lane.b32.xlu0 %v1673, 112
    %v1957 = vpop.permute.xlu0 %1956
    %v1959 = vsel %vm450, %v1955, 0
    %v1962 = vsel %vm513, %v1957, 0
    %1964 = vmatprep.subr.bf16.mxu0 0
    %1965 = vmatpush1.bf16.msra.mxu0 0
    %1966 = vmatprep.subr.bf16.mxu0 0
    %1967 = vmatpush1.bf16.msra.mxu0 0
    %1968 = vmatprep.subr.bf16.mxu0 0
    %1969 = vmatpush1.bf16.msra.mxu0 0
    %1970 = vmatprep.subr.bf16.mxu0 0
    %1971 = vmatpush1.bf16.msra.mxu0 0
    %1972 = vmatprep.subr.bf16.mxu0 0
    %1973 = vmatpush1.bf16.msra.mxu0 0
    %1974 = vmatprep.subr.bf16.mxu0 0
    %1975 = vmatpush1.bf16.msra.mxu0 0
    %1976 = vmatprep.subr.bf16.mxu0 0
    %1977 = vmatpush1.bf16.msra.mxu0 0
    %1978 = vmatprep.subr.bf16.mxu0 0
    %1979 = vmatpush1.bf16.msra.mxu0 %v1962
    %1980 = vmatprep.subr.bf16.mxu0 0
    %1981 = vmatpush2.bf16.msra.mxu0 0
    %1982 = vmatprep.subr.bf16.mxu0 0
    %1983 = vmatpush2.bf16.msra.mxu0 0
    %1984 = vmatprep.subr.bf16.mxu0 0
    %1985 = vmatpush2.bf16.msra.mxu0 0
    %1986 = vmatprep.subr.bf16.mxu0 0
    %1987 = vmatpush2.bf16.msra.mxu0 0
    %1988 = vmatprep.subr.bf16.mxu0 0
    %1989 = vmatpush2.bf16.msra.mxu0 0
    %1990 = vmatprep.subr.bf16.mxu0 0
    %1991 = vmatpush2.bf16.msra.mxu0 0
    %1992 = vmatprep.subr.bf16.mxu0 0
    %1993 = vmatpush2.bf16.msra.mxu0 0
    %1994 = vmatprep.subr.bf16.mxu0 0
    %1995 = vmatpush2.bf16.msra.mxu0 0
    %1996 = vmatprep.mubr.bf16.mxu0 0
    %1997 = vmatmul.mubr.bf16.gmra.mxu0 %v1959
    %v1998 = vpop.f32.mrf.mxu0
    %v1999 = vadd.f32 0.0, %v1998
    %v2000 = vpop.f32.mrf.mxu0
    %v2001 = vpop.f32.mrf.mxu0
    %v2002 = vpop.f32.mrf.mxu0
    %2003 = vdwg.mxu0
    %2004 = vrot.lane.b32.xlu0 %v1671, 104
    %v2005 = vpop.permute.xlu0 %2004
    %2006 = vrot.lane.b32.xlu0 %v1672, 104
    %v2007 = vpop.permute.xlu0 %2006
    %v2009 = vsel %vm450, %v2005, 0
    %v2012 = vsel %vm450, %v2007, 0
    %2014 = vmatprep.subr.bf16.mxu0 0
    %2015 = vmatpush1.bf16.xpose.msra.mxu0 0
    %2016 = vmatprep.subr.bf16.mxu0 0
    %2017 = vmatpush1.bf16.xpose.msra.mxu0 0
    %2018 = vmatprep.subr.bf16.mxu0 0
    %2019 = vmatpush1.bf16.xpose.msra.mxu0 0
    %2020 = vmatprep.subr.bf16.mxu0 0
    %2021 = vmatpush1.bf16.xpose.msra.mxu0 0
    %2022 = vmatprep.subr.bf16.mxu0 0
    %2023 = vmatpush1.bf16.xpose.msra.mxu0 0
    %2024 = vmatprep.subr.bf16.mxu0 0
    %2025 = vmatpush1.bf16.xpose.msra.mxu0 0
    %2026 = vmatprep.subr.bf16.mxu0 0
    %2027 = vmatpush1.bf16.xpose.msra.mxu0 0
    %2028 = vmatprep.subr.bf16.mxu0 0
    %2029 = vmatpush1.bf16.xpose.msra.mxu0 %v2012
    %2030 = vmatprep.subr.bf16.mxu0 0
    %2031 = vmatpush2.bf16.xpose.msra.mxu0 0
    %2032 = vmatprep.subr.bf16.mxu0 0
    %2033 = vmatpush2.bf16.xpose.msra.mxu0 0
    %2034 = vmatprep.subr.bf16.mxu0 0
    %2035 = vmatpush2.bf16.xpose.msra.mxu0 0
    %2036 = vmatprep.subr.bf16.mxu0 0
    %2037 = vmatpush2.bf16.xpose.msra.mxu0 0
    %2038 = vmatprep.subr.bf16.mxu0 0
    %2039 = vmatpush2.bf16.xpose.msra.mxu0 0
    %2040 = vmatprep.subr.bf16.mxu0 0
    %2041 = vmatpush2.bf16.xpose.msra.mxu0 0
    %2042 = vmatprep.subr.bf16.mxu0 0
    %2043 = vmatpush2.bf16.xpose.msra.mxu0 0
    %2044 = vmatprep.subr.bf16.mxu0 0
    %2045 = vmatpush2.bf16.xpose.msra.mxu0 0
    %2046 = vmatprep.mubr.bf16.mxu0 0
    %2047 = vmatmul.mubr.bf16.gmra.mxu0 %v2009
    %v2048 = vpop.f32.mrf.mxu0
    %v2049 = vadd.f32 0.0, %v2048
    %v2050 = vpop.f32.mrf.mxu0
    %v2051 = vpop.f32.mrf.mxu0
    %v2052 = vpop.f32.mrf.mxu0
    %2053 = vdwg.mxu0
    %v2054 = vsel %vm1670, %v2049, -1e+09
    %v2055 = vsel %vm450, %v2054, -inf
    %2056 = vmax.xlane.f32.xlu0 %v2055
    %v2057 = vpop.xlane.xlu0 %2056
    %v2058 = vsub.f32 %v2054, %v2057
    %v2059 = vmul.f32 %v2058, 1.442695
    %v2060 = vpow.pop %v2059
    %v2061 = vsel %vm450, %v2060, 0.0
    %2062 = vadd.xlane.f32.xlu0 %v2061
    %v2063 = vpop.xlane.xlu0 %2062
    %v2064 = vrcp.pop %v2063
    %v2065 = vmul.f32 %v2060, %v2064
    %v2066 = vpack.c.bf16 %v2065, %v2065
    %2067 = vrot.lane.b32.xlu0 %v1673, 104
    %v2068 = vpop.permute.xlu0 %2067
    %v2070 = vsel %vm450, %v2066, 0
    %v2073 = vsel %vm513, %v2068, 0
    %2075 = vmatprep.subr.bf16.mxu0 0
    %2076 = vmatpush1.bf16.msra.mxu0 0
    %2077 = vmatprep.subr.bf16.mxu0 0
    %2078 = vmatpush1.bf16.msra.mxu0 0
    %2079 = vmatprep.subr.bf16.mxu0 0
    %2080 = vmatpush1.bf16.msra.mxu0 0
    %2081 = vmatprep.subr.bf16.mxu0 0
    %2082 = vmatpush1.bf16.msra.mxu0 0
    %2083 = vmatprep.subr.bf16.mxu0 0
    %2084 = vmatpush1.bf16.msra.mxu0 0
    %2085 = vmatprep.subr.bf16.mxu0 0
    %2086 = vmatpush1.bf16.msra.mxu0 0
    %2087 = vmatprep.subr.bf16.mxu0 0
    %2088 = vmatpush1.bf16.msra.mxu0 0
    %2089 = vmatprep.subr.bf16.mxu0 0
    %2090 = vmatpush1.bf16.msra.mxu0 %v2073
    %2091 = vmatprep.subr.bf16.mxu0 0
    %2092 = vmatpush2.bf16.msra.mxu0 0
    %2093 = vmatprep.subr.bf16.mxu0 0
    %2094 = vmatpush2.bf16.msra.mxu0 0
    %2095 = vmatprep.subr.bf16.mxu0 0
    %2096 = vmatpush2.bf16.msra.mxu0 0
    %2097 = vmatprep.subr.bf16.mxu0 0
    %2098 = vmatpush2.bf16.msra.mxu0 0
    %2099 = vmatprep.subr.bf16.mxu0 0
    %2100 = vmatpush2.bf16.msra.mxu0 0
    %2101 = vmatprep.subr.bf16.mxu0 0
    %2102 = vmatpush2.bf16.msra.mxu0 0
    %2103 = vmatprep.subr.bf16.mxu0 0
    %2104 = vmatpush2.bf16.msra.mxu0 0
    %2105 = vmatprep.subr.bf16.mxu0 0
    %2106 = vmatpush2.bf16.msra.mxu0 0
    %2107 = vmatprep.mubr.bf16.mxu0 0
    %2108 = vmatmul.mubr.bf16.gmra.mxu0 %v2070
    %v2109 = vpop.f32.mrf.mxu0
    %v2110 = vadd.f32 0.0, %v2109
    %v2111 = vpop.f32.mrf.mxu0
    %v2112 = vpop.f32.mrf.mxu0
    %v2113 = vpop.f32.mrf.mxu0
    %2114 = vdwg.mxu0
    %2116 = vrot.lane.b32.xlu0 %v1888, 8
    %v2117 = vpop.permute.xlu0 %2116
    %2120 = vrot.lane.b32.xlu0 %v1999, 16
    %v2121 = vpop.permute.xlu0 %2120
    %2124 = vrot.lane.b32.xlu0 %v2110, 24
    %v2125 = vpop.permute.xlu0 %2124
    %v2127 = vsel %vm450, %v1774, %v2117
    %v2128 = vsel %vm906, %v2127, %v2121
    %v2129 = vsel %vm908, %v2128, %v2125
    %vm2130 = vcmp.ne.f32.partialorder %v210, 0.0
    %v2131 = vpack.c.bf16 %v1550, %v1550
    %v2132 = vpack.c.bf16 %v1610, %v1610
    %v2133 = vpack.c.bf16 %v1667, %v1667
    %v2135 = vsel %vm450, %v2131, 0
    %v2138 = vsel %vm450, %v2132, 0
    %2140 = vmatprep.subr.bf16.mxu0 0
    %2141 = vmatpush1.bf16.xpose.msra.mxu0 0
    %2142 = vmatprep.subr.bf16.mxu0 0
    %2143 = vmatpush1.bf16.xpose.msra.mxu0 0
    %2144 = vmatprep.subr.bf16.mxu0 0
    %2145 = vmatpush1.bf16.xpose.msra.mxu0 0
    %2146 = vmatprep.subr.bf16.mxu0 0
    %2147 = vmatpush1.bf16.xpose.msra.mxu0 0
    %2148 = vmatprep.subr.bf16.mxu0 0
    %2149 = vmatpush1.bf16.xpose.msra.mxu0 0
    %2150 = vmatprep.subr.bf16.mxu0 0
    %2151 = vmatpush1.bf16.xpose.msra.mxu0 0
    %2152 = vmatprep.subr.bf16.mxu0 0
    %2153 = vmatpush1.bf16.xpose.msra.mxu0 0
    %2154 = vmatprep.subr.bf16.mxu0 0
    %2155 = vmatpush1.bf16.xpose.msra.mxu0 %v2138
    %2156 = vmatprep.subr.bf16.mxu0 0
    %2157 = vmatpush2.bf16.xpose.msra.mxu0 0
    %2158 = vmatprep.subr.bf16.mxu0 0
    %2159 = vmatpush2.bf16.xpose.msra.mxu0 0
    %2160 = vmatprep.subr.bf16.mxu0 0
    %2161 = vmatpush2.bf16.xpose.msra.mxu0 0
    %2162 = vmatprep.subr.bf16.mxu0 0
    %2163 = vmatpush2.bf16.xpose.msra.mxu0 0
    %2164 = vmatprep.subr.bf16.mxu0 0
    %2165 = vmatpush2.bf16.xpose.msra.mxu0 0
    %2166 = vmatprep.subr.bf16.mxu0 0
    %2167 = vmatpush2.bf16.xpose.msra.mxu0 0
    %2168 = vmatprep.subr.bf16.mxu0 0
    %2169 = vmatpush2.bf16.xpose.msra.mxu0 0
    %2170 = vmatprep.subr.bf16.mxu0 0
    %2171 = vmatpush2.bf16.xpose.msra.mxu0 0
    %2172 = vmatprep.mubr.bf16.mxu0 0
    %2173 = vmatmul.mubr.bf16.gmra.mxu0 %v2135
    %v2174 = vpop.f32.mrf.mxu0
    %v2175 = vadd.f32 0.0, %v2174
    %v2176 = vpop.f32.mrf.mxu0
    %v2177 = vpop.f32.mrf.mxu0
    %v2178 = vpop.f32.mrf.mxu0
    %2179 = vdwg.mxu0
    %v2180 = vsel %vm2130, %v2175, -1e+09
    %v2181 = vsel %vm450, %v2180, -inf
    %2182 = vmax.xlane.f32.xlu0 %v2181
    %v2183 = vpop.xlane.xlu0 %2182
    %v2184 = vsub.f32 %v2180, %v2183
    %v2185 = vmul.f32 %v2184, 1.442695
    %v2186 = vpow.pop %v2185
    %v2187 = vsel %vm450, %v2186, 0.0
    %2188 = vadd.xlane.f32.xlu0 %v2187
    %v2189 = vpop.xlane.xlu0 %2188
    %v2190 = vrcp.pop %v2189
    %v2191 = vmul.f32 %v2186, %v2190
    %v2192 = vpack.c.bf16 %v2191, %v2191
    %v2194 = vsel %vm450, %v2192, 0
    %v2197 = vsel %vm513, %v2133, 0
    %2199 = vmatprep.subr.bf16.mxu0 0
    %2200 = vmatpush1.bf16.msra.mxu0 0
    %2201 = vmatprep.subr.bf16.mxu0 0
    %2202 = vmatpush1.bf16.msra.mxu0 0
    %2203 = vmatprep.subr.bf16.mxu0 0
    %2204 = vmatpush1.bf16.msra.mxu0 0
    %2205 = vmatprep.subr.bf16.mxu0 0
    %2206 = vmatpush1.bf16.msra.mxu0 0
    %2207 = vmatprep.subr.bf16.mxu0 0
    %2208 = vmatpush1.bf16.msra.mxu0 0
    %2209 = vmatprep.subr.bf16.mxu0 0
    %2210 = vmatpush1.bf16.msra.mxu0 0
    %2211 = vmatprep.subr.bf16.mxu0 0
    %2212 = vmatpush1.bf16.msra.mxu0 0
    %2213 = vmatprep.subr.bf16.mxu0 0
    %2214 = vmatpush1.bf16.msra.mxu0 %v2197
    %2215 = vmatprep.subr.bf16.mxu0 0
    %2216 = vmatpush2.bf16.msra.mxu0 0
    %2217 = vmatprep.subr.bf16.mxu0 0
    %2218 = vmatpush2.bf16.msra.mxu0 0
    %2219 = vmatprep.subr.bf16.mxu0 0
    %2220 = vmatpush2.bf16.msra.mxu0 0
    %2221 = vmatprep.subr.bf16.mxu0 0
    %2222 = vmatpush2.bf16.msra.mxu0 0
    %2223 = vmatprep.subr.bf16.mxu0 0
    %2224 = vmatpush2.bf16.msra.mxu0 0
    %2225 = vmatprep.subr.bf16.mxu0 0
    %2226 = vmatpush2.bf16.msra.mxu0 0
    %2227 = vmatprep.subr.bf16.mxu0 0
    %2228 = vmatpush2.bf16.msra.mxu0 0
    %2229 = vmatprep.subr.bf16.mxu0 0
    %2230 = vmatpush2.bf16.msra.mxu0 0
    %2231 = vmatprep.mubr.bf16.mxu0 0
    %2232 = vmatmul.mubr.bf16.gmra.mxu0 %v2194
    %v2233 = vpop.f32.mrf.mxu0
    %v2234 = vadd.f32 0.0, %v2233
    %v2235 = vpop.f32.mrf.mxu0
    %v2236 = vpop.f32.mrf.mxu0
    %v2237 = vpop.f32.mrf.mxu0
    %2238 = vdwg.mxu0
    %2240 = vrot.lane.b32.xlu0 %v2131, 120
    %v2241 = vpop.permute.xlu0 %2240
    %2243 = vrot.lane.b32.xlu0 %v2132, 120
    %v2244 = vpop.permute.xlu0 %2243
    %v2246 = vsel %vm450, %v2241, 0
    %v2249 = vsel %vm450, %v2244, 0
    %2251 = vmatprep.subr.bf16.mxu0 0
    %2252 = vmatpush1.bf16.xpose.msra.mxu0 0
    %2253 = vmatprep.subr.bf16.mxu0 0
    %2254 = vmatpush1.bf16.xpose.msra.mxu0 0
    %2255 = vmatprep.subr.bf16.mxu0 0
    %2256 = vmatpush1.bf16.xpose.msra.mxu0 0
    %2257 = vmatprep.subr.bf16.mxu0 0
    %2258 = vmatpush1.bf16.xpose.msra.mxu0 0
    %2259 = vmatprep.subr.bf16.mxu0 0
    %2260 = vmatpush1.bf16.xpose.msra.mxu0 0
    %2261 = vmatprep.subr.bf16.mxu0 0
    %2262 = vmatpush1.bf16.xpose.msra.mxu0 0
    %2263 = vmatprep.subr.bf16.mxu0 0
    %2264 = vmatpush1.bf16.xpose.msra.mxu0 0
    %2265 = vmatprep.subr.bf16.mxu0 0
    %2266 = vmatpush1.bf16.xpose.msra.mxu0 %v2249
    %2267 = vmatprep.subr.bf16.mxu0 0
    %2268 = vmatpush2.bf16.xpose.msra.mxu0 0
    %2269 = vmatprep.subr.bf16.mxu0 0
    %2270 = vmatpush2.bf16.xpose.msra.mxu0 0
    %2271 = vmatprep.subr.bf16.mxu0 0
    %2272 = vmatpush2.bf16.xpose.msra.mxu0 0
    %2273 = vmatprep.subr.bf16.mxu0 0
    %2274 = vmatpush2.bf16.xpose.msra.mxu0 0
    %2275 = vmatprep.subr.bf16.mxu0 0
    %2276 = vmatpush2.bf16.xpose.msra.mxu0 0
    %2277 = vmatprep.subr.bf16.mxu0 0
    %2278 = vmatpush2.bf16.xpose.msra.mxu0 0
    %2279 = vmatprep.subr.bf16.mxu0 0
    %2280 = vmatpush2.bf16.xpose.msra.mxu0 0
    %2281 = vmatprep.subr.bf16.mxu0 0
    %2282 = vmatpush2.bf16.xpose.msra.mxu0 0
    %2283 = vmatprep.mubr.bf16.mxu0 0
    %2284 = vmatmul.mubr.bf16.gmra.mxu0 %v2246
    %v2285 = vpop.f32.mrf.mxu0
    %v2286 = vadd.f32 0.0, %v2285
    %v2287 = vpop.f32.mrf.mxu0
    %v2288 = vpop.f32.mrf.mxu0
    %v2289 = vpop.f32.mrf.mxu0
    %2290 = vdwg.mxu0
    %v2291 = vsel %vm2130, %v2286, -1e+09
    %v2292 = vsel %vm450, %v2291, -inf
    %2293 = vmax.xlane.f32.xlu0 %v2292
    %v2294 = vpop.xlane.xlu0 %2293
    %v2295 = vsub.f32 %v2291, %v2294
    %v2296 = vmul.f32 %v2295, 1.442695
    %v2297 = vpow.pop %v2296
    %v2298 = vsel %vm450, %v2297, 0.0
    %2299 = vadd.xlane.f32.xlu0 %v2298
    %v2300 = vpop.xlane.xlu0 %2299
    %v2301 = vrcp.pop %v2300
    %v2302 = vmul.f32 %v2297, %v2301
    %v2303 = vpack.c.bf16 %v2302, %v2302
    %2305 = vrot.lane.b32.xlu0 %v2133, 120
    %v2306 = vpop.permute.xlu0 %2305
    %v2308 = vsel %vm450, %v2303, 0
    %v2311 = vsel %vm513, %v2306, 0
    %2313 = vmatprep.subr.bf16.mxu0 0
    %2314 = vmatpush1.bf16.msra.mxu0 0
    %2315 = vmatprep.subr.bf16.mxu0 0
    %2316 = vmatpush1.bf16.msra.mxu0 0
    %2317 = vmatprep.subr.bf16.mxu0 0
    %2318 = vmatpush1.bf16.msra.mxu0 0
    %2319 = vmatprep.subr.bf16.mxu0 0
    %2320 = vmatpush1.bf16.msra.mxu0 0
    %2321 = vmatprep.subr.bf16.mxu0 0
    %2322 = vmatpush1.bf16.msra.mxu0 0
    %2323 = vmatprep.subr.bf16.mxu0 0
    %2324 = vmatpush1.bf16.msra.mxu0 0
    %2325 = vmatprep.subr.bf16.mxu0 0
    %2326 = vmatpush1.bf16.msra.mxu0 0
    %2327 = vmatprep.subr.bf16.mxu0 0
    %2328 = vmatpush1.bf16.msra.mxu0 %v2311
    %2329 = vmatprep.subr.bf16.mxu0 0
    %2330 = vmatpush2.bf16.msra.mxu0 0
    %2331 = vmatprep.subr.bf16.mxu0 0
    %2332 = vmatpush2.bf16.msra.mxu0 0
    %2333 = vmatprep.subr.bf16.mxu0 0
    %2334 = vmatpush2.bf16.msra.mxu0 0
    %2335 = vmatprep.subr.bf16.mxu0 0
    %2336 = vmatpush2.bf16.msra.mxu0 0
    %2337 = vmatprep.subr.bf16.mxu0 0
    %2338 = vmatpush2.bf16.msra.mxu0 0
    %2339 = vmatprep.subr.bf16.mxu0 0
    %2340 = vmatpush2.bf16.msra.mxu0 0
    %2341 = vmatprep.subr.bf16.mxu0 0
    %2342 = vmatpush2.bf16.msra.mxu0 0
    %2343 = vmatprep.subr.bf16.mxu0 0
    %2344 = vmatpush2.bf16.msra.mxu0 0
    %2345 = vmatprep.mubr.bf16.mxu0 0
    %2346 = vmatmul.mubr.bf16.gmra.mxu0 %v2308
    %v2347 = vpop.f32.mrf.mxu0
    %v2348 = vadd.f32 0.0, %v2347
    %v2349 = vpop.f32.mrf.mxu0
    %v2350 = vpop.f32.mrf.mxu0
    %v2351 = vpop.f32.mrf.mxu0
    %2352 = vdwg.mxu0
    %2353 = vrot.lane.b32.xlu0 %v2131, 112
    %v2354 = vpop.permute.xlu0 %2353
    %2355 = vrot.lane.b32.xlu0 %v2132, 112
    %v2356 = vpop.permute.xlu0 %2355
    %v2358 = vsel %vm450, %v2354, 0
    %v2361 = vsel %vm450, %v2356, 0
    %2363 = vmatprep.subr.bf16.mxu0 0
    %2364 = vmatpush1.bf16.xpose.msra.mxu0 0
    %2365 = vmatprep.subr.bf16.mxu0 0
    %2366 = vmatpush1.bf16.xpose.msra.mxu0 0
    %2367 = vmatprep.subr.bf16.mxu0 0
    %2368 = vmatpush1.bf16.xpose.msra.mxu0 0
    %2369 = vmatprep.subr.bf16.mxu0 0
    %2370 = vmatpush1.bf16.xpose.msra.mxu0 0
    %2371 = vmatprep.subr.bf16.mxu0 0
    %2372 = vmatpush1.bf16.xpose.msra.mxu0 0
    %2373 = vmatprep.subr.bf16.mxu0 0
    %2374 = vmatpush1.bf16.xpose.msra.mxu0 0
    %2375 = vmatprep.subr.bf16.mxu0 0
    %2376 = vmatpush1.bf16.xpose.msra.mxu0 0
    %2377 = vmatprep.subr.bf16.mxu0 0
    %2378 = vmatpush1.bf16.xpose.msra.mxu0 %v2361
    %2379 = vmatprep.subr.bf16.mxu0 0
    %2380 = vmatpush2.bf16.xpose.msra.mxu0 0
    %2381 = vmatprep.subr.bf16.mxu0 0
    %2382 = vmatpush2.bf16.xpose.msra.mxu0 0
    %2383 = vmatprep.subr.bf16.mxu0 0
    %2384 = vmatpush2.bf16.xpose.msra.mxu0 0
    %2385 = vmatprep.subr.bf16.mxu0 0
    %2386 = vmatpush2.bf16.xpose.msra.mxu0 0
    %2387 = vmatprep.subr.bf16.mxu0 0
    %2388 = vmatpush2.bf16.xpose.msra.mxu0 0
    %2389 = vmatprep.subr.bf16.mxu0 0
    %2390 = vmatpush2.bf16.xpose.msra.mxu0 0
    %2391 = vmatprep.subr.bf16.mxu0 0
    %2392 = vmatpush2.bf16.xpose.msra.mxu0 0
    %2393 = vmatprep.subr.bf16.mxu0 0
    %2394 = vmatpush2.bf16.xpose.msra.mxu0 0
    %2395 = vmatprep.mubr.bf16.mxu0 0
    %2396 = vmatmul.mubr.bf16.gmra.mxu0 %v2358
    %v2397 = vpop.f32.mrf.mxu0
    %v2398 = vadd.f32 0.0, %v2397
    %v2399 = vpop.f32.mrf.mxu0
    %v2400 = vpop.f32.mrf.mxu0
    %v2401 = vpop.f32.mrf.mxu0
    %2402 = vdwg.mxu0
    %v2403 = vsel %vm2130, %v2398, -1e+09
    %v2404 = vsel %vm450, %v2403, -inf
    %2405 = vmax.xlane.f32.xlu0 %v2404
    %v2406 = vpop.xlane.xlu0 %2405
    %v2407 = vsub.f32 %v2403, %v2406
    %v2408 = vmul.f32 %v2407, 1.442695
    %v2409 = vpow.pop %v2408
    %v2410 = vsel %vm450, %v2409, 0.0
    %2411 = vadd.xlane.f32.xlu0 %v2410
    %v2412 = vpop.xlane.xlu0 %2411
    %v2413 = vrcp.pop %v2412
    %v2414 = vmul.f32 %v2409, %v2413
    %v2415 = vpack.c.bf16 %v2414, %v2414
    %2416 = vrot.lane.b32.xlu0 %v2133, 112
    %v2417 = vpop.permute.xlu0 %2416
    %v2419 = vsel %vm450, %v2415, 0
    %v2422 = vsel %vm513, %v2417, 0
    %2424 = vmatprep.subr.bf16.mxu0 0
    %2425 = vmatpush1.bf16.msra.mxu0 0
    %2426 = vmatprep.subr.bf16.mxu0 0
    %2427 = vmatpush1.bf16.msra.mxu0 0
    %2428 = vmatprep.subr.bf16.mxu0 0
    %2429 = vmatpush1.bf16.msra.mxu0 0
    %2430 = vmatprep.subr.bf16.mxu0 0
    %2431 = vmatpush1.bf16.msra.mxu0 0
    %2432 = vmatprep.subr.bf16.mxu0 0
    %2433 = vmatpush1.bf16.msra.mxu0 0
    %2434 = vmatprep.subr.bf16.mxu0 0
    %2435 = vmatpush1.bf16.msra.mxu0 0
    %2436 = vmatprep.subr.bf16.mxu0 0
    %2437 = vmatpush1.bf16.msra.mxu0 0
    %2438 = vmatprep.subr.bf16.mxu0 0
    %2439 = vmatpush1.bf16.msra.mxu0 %v2422
    %2440 = vmatprep.subr.bf16.mxu0 0
    %2441 = vmatpush2.bf16.msra.mxu0 0
    %2442 = vmatprep.subr.bf16.mxu0 0
    %2443 = vmatpush2.bf16.msra.mxu0 0
    %2444 = vmatprep.subr.bf16.mxu0 0
    %2445 = vmatpush2.bf16.msra.mxu0 0
    %2446 = vmatprep.subr.bf16.mxu0 0
    %2447 = vmatpush2.bf16.msra.mxu0 0
    %2448 = vmatprep.subr.bf16.mxu0 0
    %2449 = vmatpush2.bf16.msra.mxu0 0
    %2450 = vmatprep.subr.bf16.mxu0 0
    %2451 = vmatpush2.bf16.msra.mxu0 0
    %2452 = vmatprep.subr.bf16.mxu0 0
    %2453 = vmatpush2.bf16.msra.mxu0 0
    %2454 = vmatprep.subr.bf16.mxu0 0
    %2455 = vmatpush2.bf16.msra.mxu0 0
    %2456 = vmatprep.mubr.bf16.mxu0 0
    %2457 = vmatmul.mubr.bf16.gmra.mxu0 %v2419
    %v2458 = vpop.f32.mrf.mxu0
    %v2459 = vadd.f32 0.0, %v2458
    %v2460 = vpop.f32.mrf.mxu0
    %v2461 = vpop.f32.mrf.mxu0
    %v2462 = vpop.f32.mrf.mxu0
    %2463 = vdwg.mxu0
    %2464 = vrot.lane.b32.xlu0 %v2131, 104
    %v2465 = vpop.permute.xlu0 %2464
    %2466 = vrot.lane.b32.xlu0 %v2132, 104
    %v2467 = vpop.permute.xlu0 %2466
    %v2469 = vsel %vm450, %v2465, 0
    %v2472 = vsel %vm450, %v2467, 0
    %2474 = vmatprep.subr.bf16.mxu0 0
    %2475 = vmatpush1.bf16.xpose.msra.mxu0 0
    %2476 = vmatprep.subr.bf16.mxu0 0
    %2477 = vmatpush1.bf16.xpose.msra.mxu0 0
    %2478 = vmatprep.subr.bf16.mxu0 0
    %2479 = vmatpush1.bf16.xpose.msra.mxu0 0
    %2480 = vmatprep.subr.bf16.mxu0 0
    %2481 = vmatpush1.bf16.xpose.msra.mxu0 0
    %2482 = vmatprep.subr.bf16.mxu0 0
    %2483 = vmatpush1.bf16.xpose.msra.mxu0 0
    %2484 = vmatprep.subr.bf16.mxu0 0
    %2485 = vmatpush1.bf16.xpose.msra.mxu0 0
    %2486 = vmatprep.subr.bf16.mxu0 0
    %2487 = vmatpush1.bf16.xpose.msra.mxu0 0
    %2488 = vmatprep.subr.bf16.mxu0 0
    %2489 = vmatpush1.bf16.xpose.msra.mxu0 %v2472
    %2490 = vmatprep.subr.bf16.mxu0 0
    %2491 = vmatpush2.bf16.xpose.msra.mxu0 0
    %2492 = vmatprep.subr.bf16.mxu0 0
    %2493 = vmatpush2.bf16.xpose.msra.mxu0 0
    %2494 = vmatprep.subr.bf16.mxu0 0
    %2495 = vmatpush2.bf16.xpose.msra.mxu0 0
    %2496 = vmatprep.subr.bf16.mxu0 0
    %2497 = vmatpush2.bf16.xpose.msra.mxu0 0
    %2498 = vmatprep.subr.bf16.mxu0 0
    %2499 = vmatpush2.bf16.xpose.msra.mxu0 0
    %2500 = vmatprep.subr.bf16.mxu0 0
    %2501 = vmatpush2.bf16.xpose.msra.mxu0 0
    %2502 = vmatprep.subr.bf16.mxu0 0
    %2503 = vmatpush2.bf16.xpose.msra.mxu0 0
    %2504 = vmatprep.subr.bf16.mxu0 0
    %2505 = vmatpush2.bf16.xpose.msra.mxu0 0
    %2506 = vmatprep.mubr.bf16.mxu0 0
    %2507 = vmatmul.mubr.bf16.gmra.mxu0 %v2469
    %v2508 = vpop.f32.mrf.mxu0
    %v2509 = vadd.f32 0.0, %v2508
    %v2510 = vpop.f32.mrf.mxu0
    %v2511 = vpop.f32.mrf.mxu0
    %v2512 = vpop.f32.mrf.mxu0
    %2513 = vdwg.mxu0
    %v2514 = vsel %vm2130, %v2509, -1e+09
    %v2515 = vsel %vm450, %v2514, -inf
    %2516 = vmax.xlane.f32.xlu0 %v2515
    %v2517 = vpop.xlane.xlu0 %2516
    %v2518 = vsub.f32 %v2514, %v2517
    %v2519 = vmul.f32 %v2518, 1.442695
    %v2520 = vpow.pop %v2519
    %v2521 = vsel %vm450, %v2520, 0.0
    %2522 = vadd.xlane.f32.xlu0 %v2521
    %v2523 = vpop.xlane.xlu0 %2522
    %v2524 = vrcp.pop %v2523
    %v2525 = vmul.f32 %v2520, %v2524
    %v2526 = vpack.c.bf16 %v2525, %v2525
    %2527 = vrot.lane.b32.xlu0 %v2133, 104
    %v2528 = vpop.permute.xlu0 %2527
    %v2530 = vsel %vm450, %v2526, 0
    %v2533 = vsel %vm513, %v2528, 0
    %2535 = vmatprep.subr.bf16.mxu0 0
    %2536 = vmatpush1.bf16.msra.mxu0 0
    %2537 = vmatprep.subr.bf16.mxu0 0
    %2538 = vmatpush1.bf16.msra.mxu0 0
    %2539 = vmatprep.subr.bf16.mxu0 0
    %2540 = vmatpush1.bf16.msra.mxu0 0
    %2541 = vmatprep.subr.bf16.mxu0 0
    %2542 = vmatpush1.bf16.msra.mxu0 0
    %2543 = vmatprep.subr.bf16.mxu0 0
    %2544 = vmatpush1.bf16.msra.mxu0 0
    %2545 = vmatprep.subr.bf16.mxu0 0
    %2546 = vmatpush1.bf16.msra.mxu0 0
    %2547 = vmatprep.subr.bf16.mxu0 0
    %2548 = vmatpush1.bf16.msra.mxu0 0
    %2549 = vmatprep.subr.bf16.mxu0 0
    %2550 = vmatpush1.bf16.msra.mxu0 %v2533
    %2551 = vmatprep.subr.bf16.mxu0 0
    %2552 = vmatpush2.bf16.msra.mxu0 0
    %2553 = vmatprep.subr.bf16.mxu0 0
    %2554 = vmatpush2.bf16.msra.mxu0 0
    %2555 = vmatprep.subr.bf16.mxu0 0
    %2556 = vmatpush2.bf16.msra.mxu0 0
    %2557 = vmatprep.subr.bf16.mxu0 0
    %2558 = vmatpush2.bf16.msra.mxu0 0
    %2559 = vmatprep.subr.bf16.mxu0 0
    %2560 = vmatpush2.bf16.msra.mxu0 0
    %2561 = vmatprep.subr.bf16.mxu0 0
    %2562 = vmatpush2.bf16.msra.mxu0 0
    %2563 = vmatprep.subr.bf16.mxu0 0
    %2564 = vmatpush2.bf16.msra.mxu0 0
    %2565 = vmatprep.subr.bf16.mxu0 0
    %2566 = vmatpush2.bf16.msra.mxu0 0
    %2567 = vmatprep.mubr.bf16.mxu0 0
    %2568 = vmatmul.mubr.bf16.gmra.mxu0 %v2530
    %v2569 = vpop.f32.mrf.mxu0
    %v2570 = vadd.f32 0.0, %v2569
    %v2571 = vpop.f32.mrf.mxu0
    %v2572 = vpop.f32.mrf.mxu0
    %v2573 = vpop.f32.mrf.mxu0
    %2574 = vdwg.mxu0
    %2576 = vrot.lane.b32.xlu0 %v2348, 8
    %v2577 = vpop.permute.xlu0 %2576
    %2580 = vrot.lane.b32.xlu0 %v2459, 16
    %v2581 = vpop.permute.xlu0 %2580
    %2584 = vrot.lane.b32.xlu0 %v2570, 24
    %v2585 = vpop.permute.xlu0 %2584
    %v2587 = vsel %vm450, %v2234, %v2577
    %v2588 = vsel %vm906, %v2587, %v2581
    %v2589 = vsel %vm908, %v2588, %v2585
    %v2590 = vpack.c.bf16 %v2589, %v2129
    %v2591 = vld [vmem:[#allocation14] sm:$0xf]
    %v2592 = vld [vmem:[#allocation14 + $0x4] sm:$0xf]
    %v2593 = vld [vmem:[#allocation14 + $0x8] sm:$0xf]
    %v2594 = vld [vmem:[#allocation14 + $0xc] sm:$0xf]
    %v2599 = vunpack.c.l.b16 %v2591
    %v2600 = vunpack.c.l.b16 %v2592
    %v2601 = vunpack.c.l.b16 %v2593
    %v2602 = vunpack.c.l.b16 %v2594
    %v2603 = vpack.c.b16 %v2600, %v2599
    %v2604 = vpack.c.b16 %v2602, %v2601
    %v2608 = vsel %vm211, %v2590, 0
    %2610 = vmatprep.subr.bf16.mxu0 0
    %2611 = vmatpush1.bf16.msra.mxu0 0
    %2612 = vmatprep.subr.bf16.mxu0 0
    %2613 = vmatpush1.bf16.msra.mxu0 0
    %2614 = vmatprep.subr.bf16.mxu0 0
    %2615 = vmatpush1.bf16.msra.mxu0 0
    %2616 = vmatprep.subr.bf16.mxu0 0
    %2617 = vmatpush1.bf16.msra.mxu0 0
    %2618 = vmatprep.subr.bf16.mxu0 0
    %2619 = vmatpush1.bf16.msra.mxu0 0
    %2620 = vmatprep.subr.bf16.mxu0 0
    %2621 = vmatpush1.bf16.msra.mxu0 0
    %2622 = vmatprep.subr.bf16.mxu0 0
    %2623 = vmatpush1.bf16.msra.mxu0 %v2604
    %2624 = vmatprep.subr.bf16.mxu0 0
    %2625 = vmatpush1.bf16.msra.mxu0 %v2603
    %2626 = vmatprep.subr.bf16.mxu0 0
    %2627 = vmatpush2.bf16.msra.mxu0 0
    %2628 = vmatprep.subr.bf16.mxu0 0
    %2629 = vmatpush2.bf16.msra.mxu0 0
    %2630 = vmatprep.subr.bf16.mxu0 0
    %2631 = vmatpush2.bf16.msra.mxu0 0
    %2632 = vmatprep.subr.bf16.mxu0 0
    %2633 = vmatpush2.bf16.msra.mxu0 0
    %2634 = vmatprep.subr.bf16.mxu0 0
    %2635 = vmatpush2.bf16.msra.mxu0 0
    %2636 = vmatprep.subr.bf16.mxu0 0
    %2637 = vmatpush2.bf16.msra.mxu0 0
    %2638 = vmatprep.subr.bf16.mxu0 0
    %2639 = vmatpush2.bf16.msra.mxu0 0
    %2640 = vmatprep.subr.bf16.mxu0 0
    %2641 = vmatpush2.bf16.msra.mxu0 0
    %2642 = vmatprep.mubr.bf16.mxu0 0
    %2643 = vmatmul.mubr.bf16.gmra.mxu0 %v2608
    %v2644 = vpop.f32.mrf.mxu0
    %v2645 = vadd.f32 0.0, %v2644
    %v2646 = vpop.f32.mrf.mxu0
    %v2647 = vpop.f32.mrf.mxu0
    %v2648 = vadd.f32 0.0, %v2647
    %v2649 = vpop.f32.mrf.mxu0
    %2650 = vdwg.mxu0
    %v2651 = vadd.f32 %v1431, %v2645
    %v2652 = vadd.f32 %v1432, %v2648
    %v2653 = vsel %vm211, %v2651, 0.0
    %2654 = vadd.xlane.f32.xlu0 %v2653
    %v2655 = vpop.xlane.xlu0 %2654
    %v2656 = vsel %vm211, %v2652, 0.0
    %2657 = vadd.xlane.f32.xlu0 %v2656
    %v2658 = vpop.xlane.xlu0 %2657
    %v2659 = vmul.f32 %v2655, %v218
    %v2660 = vmul.f32 %v2658, %v218
    %v2661 = vsub.f32 %v2651, %v2659
    %v2662 = vsub.f32 %v2652, %v2660
    %v2663 = vmul.f32 %v2661, %v2661
    %v2664 = vmul.f32 %v2662, %v2662
    %v2665 = vsel %vm211, %v2663, 0.0
    %2666 = vadd.xlane.f32.xlu0 %v2665
    %v2667 = vpop.xlane.xlu0 %2666
    %v2668 = vsel %vm211, %v2664, 0.0
    %2669 = vadd.xlane.f32.xlu0 %v2668
    %v2670 = vpop.xlane.xlu0 %2669
    %v2671 = vmul.f32 %v2667, 0.032258064
    %v2672 = vmul.f32 %v2670, 0.032258064
    %v2673 = vrsqrt.pop %v2671
    %v2674 = vmul.f32 %v2671, %v2673
    %vm2675 = vcmp.eq.f32.partialorder %v2671, inf
    %v2676 = vsel %vm2675, %v2671, %v2674
    %vm2677 = vcmp.eq.f32.partialorder %v2671, 0.0
    %v2678 = vand.u32 %v2671, 2147483648
    %v2679 = vsel %vm2677, %v2678, %v2676
    %v2680 = vrsqrt.pop %v2672
    %v2681 = vmul.f32 %v2672, %v2680
    %vm2682 = vcmp.eq.f32.partialorder %v2672, inf
    %v2683 = vsel %vm2682, %v2672, %v2681
    %vm2684 = vcmp.eq.f32.partialorder %v2672, 0.0
    %v2685 = vand.u32 %v2672, 2147483648
    %v2686 = vsel %vm2684, %v2685, %v2683
    %v2687 = vld [vmem:[%s20] sm:$0x1]
    %v2688 = vadd.f32 %v2679, 1e-06
    %v2689 = vadd.f32 %v2686, 1e-06
    %v2690 = vrcp.pop %v2688
    %v2691 = vmul.f32 %v2661, %v2690
    %v2692 = vrcp.pop %v2689
    %v2693 = vmul.f32 %v2662, %v2692
    %v2695 = vlaneseq
    %v2696 = vshrl.u32 %v2695, 7
    %v2697 = vsub.s32 0, %v2696
    %v2698 = vrot.slane %v2687, %v2697
    %v2700 = vmul.f32 %v2698, %v2691
    %v2701 = vmul.f32 %v2698, %v2693
    %v2702 = vld [vmem:[%s21] sm:$0x1]
    %v2704 = vlaneseq
    %v2705 = vshrl.u32 %v2704, 7
    %v2706 = vsub.s32 0, %v2705
    %v2707 = vrot.slane %v2702, %v2706
    %v2709 = vadd.f32 %v2700, %v2707
    %v2710 = vadd.f32 %v2701, %v2707
    %v2711 = vpack.c.bf16 %v2710, %v2709
    %v2712 = vld [vmem:[#allocation16] sm:$0xf]
    %v2713 = vld [vmem:[#allocation16 + $0x4] sm:$0xf]
    %v2714 = vld [vmem:[#allocation16 + $0x8] sm:$0xf]
    %v2715 = vld [vmem:[#allocation16 + $0xc] sm:$0xf]
    %v2716 = vld [vmem:[%s13] sm:$0x1]
    %v2718 = vlaneseq
    %v2719 = vshrl.u32 %v2718, 7
    %v2720 = vsub.s32 0, %v2719
    %v2721 = vrot.slane %v2716, %v2720
    %v2727 = vunpack.c.l.b16 %v2712
    %v2728 = vunpack.c.l.b16 %v2713
    %v2729 = vunpack.c.l.b16 %v2714
    %v2730 = vunpack.c.l.b16 %v2715
    %v2731 = vpack.c.b16 %v2728, %v2727
    %v2732 = vpack.c.b16 %v2730, %v2729
    %v2736 = vsel %vm211, %v2711, 0
    %2738 = vmatprep.subr.bf16.mxu0 0
    %2739 = vmatpush1.bf16.msra.mxu0 0
    %2740 = vmatprep.subr.bf16.mxu0 0
    %2741 = vmatpush1.bf16.msra.mxu0 0
    %2742 = vmatprep.subr.bf16.mxu0 0
    %2743 = vmatpush1.bf16.msra.mxu0 0
    %2744 = vmatprep.subr.bf16.mxu0 0
    %2745 = vmatpush1.bf16.msra.mxu0 0
    %2746 = vmatprep.subr.bf16.mxu0 0
    %2747 = vmatpush1.bf16.msra.mxu0 0
    %2748 = vmatprep.subr.bf16.mxu0 0
    %2749 = vmatpush1.bf16.msra.mxu0 0
    %2750 = vmatprep.subr.bf16.mxu0 0
    %2751 = vmatpush1.bf16.msra.mxu0 %v2732
    %2752 = vmatprep.subr.bf16.mxu0 0
    %2753 = vmatpush1.bf16.msra.mxu0 %v2731
    %2754 = vmatprep.subr.bf16.mxu0 0
    %2755 = vmatpush2.bf16.msra.mxu0 0
    %2756 = vmatprep.subr.bf16.mxu0 0
    %2757 = vmatpush2.bf16.msra.mxu0 0
    %2758 = vmatprep.subr.bf16.mxu0 0
    %2759 = vmatpush2.bf16.msra.mxu0 0
    %2760 = vmatprep.subr.bf16.mxu0 0
    %2761 = vmatpush2.bf16.msra.mxu0 0
    %2762 = vmatprep.subr.bf16.mxu0 0
    %2763 = vmatpush2.bf16.msra.mxu0 0
    %2764 = vmatprep.subr.bf16.mxu0 0
    %2765 = vmatpush2.bf16.msra.mxu0 0
    %2766 = vmatprep.subr.bf16.mxu0 0
    %2767 = vmatpush2.bf16.msra.mxu0 0
    %2768 = vmatprep.subr.bf16.mxu0 0
    %2769 = vmatpush2.bf16.msra.mxu0 0
    %2770 = vmatprep.mubr.bf16.mxu0 0
    %2771 = vmatmul.mubr.bf16.gmra.mxu0 %v2736
    %v2772 = vpop.f32.mrf.mxu0
    %v2773 = vadd.f32 %v2721, %v2772
    %v2774 = vpop.f32.mrf.mxu0
    %v2775 = vpop.f32.mrf.mxu0
    %v2776 = vadd.f32 %v2721, %v2775
    %v2777 = vpop.f32.mrf.mxu0
    %2778 = vdwg.mxu0
    %v2779 = vmax.f32 %v2773, 0.0
    %v2780 = vmax.f32 %v2776, 0.0
    %v2781 = vpack.c.bf16 %v2780, %v2779
    %v2782 = vld [vmem:[%s14] sm:$0xf]
    %v2783 = vld [vmem:[%s14 + $0x4] sm:$0xf]
    %v2784 = vld [vmem:[%s14 + $0x8] sm:$0xf]
    %v2785 = vld [vmem:[%s14 + $0xc] sm:$0xf]
    %v2786 = vld [vmem:[%s14 + $0x10] sm:$0xf]
    %v2787 = vld [vmem:[%s14 + $0x14] sm:$0xf]
    %v2788 = vld [vmem:[%s14 + $0x18] sm:$0xf]
    %v2789 = vld [vmem:[%s14 + $0x1c] sm:$0xf]
    %v2790 = vld [vmem:[%s15] sm:$0x1]
    %v2792 = vlaneseq
    %v2793 = vshrl.u32 %v2792, 7
    %v2794 = vsub.s32 0, %v2793
    %v2795 = vrot.slane %v2790, %v2794
    %v2805 = vunpack.c.l.b16 %v2782
    %v2806 = vunpack.c.l.b16 %v2783
    %v2807 = vunpack.c.l.b16 %v2784
    %v2808 = vunpack.c.l.b16 %v2785
    %v2809 = vunpack.c.l.b16 %v2786
    %v2810 = vunpack.c.l.b16 %v2787
    %v2811 = vunpack.c.l.b16 %v2788
    %v2812 = vunpack.c.l.b16 %v2789
    %v2813 = vpack.c.b16 %v2806, %v2805
    %v2814 = vpack.c.b16 %v2808, %v2807
    %v2815 = vpack.c.b16 %v2810, %v2809
    %v2816 = vpack.c.b16 %v2812, %v2811
    %vm2821 = vcmask 523264
    %v2823 = vsel %vm2821, %v2781, 0
    %2825 = vmatprep.subr.bf16.mxu0 0
    %2826 = vmatpush1.bf16.msra.mxu0 0
    %2827 = vmatprep.subr.bf16.mxu0 0
    %2828 = vmatpush1.bf16.msra.mxu0 0
    %2829 = vmatprep.subr.bf16.mxu0 0
    %2830 = vmatpush1.bf16.msra.mxu0 0
    %2831 = vmatprep.subr.bf16.mxu0 0
    %2832 = vmatpush1.bf16.msra.mxu0 0
    %2833 = vmatprep.subr.bf16.mxu0 0
    %2834 = vmatpush1.bf16.msra.mxu0 %v2816
    %2835 = vmatprep.subr.bf16.mxu0 0
    %2836 = vmatpush1.bf16.msra.mxu0 %v2815
    %2837 = vmatprep.subr.bf16.mxu0 0
    %2838 = vmatpush1.bf16.msra.mxu0 %v2814
    %2839 = vmatprep.subr.bf16.mxu0 0
    %2840 = vmatpush1.bf16.msra.mxu0 %v2813
    %2841 = vmatprep.subr.bf16.mxu0 0
    %2842 = vmatpush2.bf16.msra.mxu0 0
    %2843 = vmatprep.subr.bf16.mxu0 0
    %2844 = vmatpush2.bf16.msra.mxu0 0
    %2845 = vmatprep.subr.bf16.mxu0 0
    %2846 = vmatpush2.bf16.msra.mxu0 0
    %2847 = vmatprep.subr.bf16.mxu0 0
    %2848 = vmatpush2.bf16.msra.mxu0 0
    %2849 = vmatprep.subr.bf16.mxu0 0
    %2850 = vmatpush2.bf16.msra.mxu0 0
    %2851 = vmatprep.subr.bf16.mxu0 0
    %2852 = vmatpush2.bf16.msra.mxu0 0
    %2853 = vmatprep.subr.bf16.mxu0 0
    %2854 = vmatpush2.bf16.msra.mxu0 0
    %2855 = vmatprep.subr.bf16.mxu0 0
    %2856 = vmatpush2.bf16.msra.mxu0 0
    %2857 = vmatprep.mubr.bf16.mxu0 0
    %2858 = vmatmul.mubr.bf16.gmra.mxu0 %v2823
    %v2859 = vpop.f32.mrf.mxu0
    %v2860 = vadd.f32 %v2795, %v2859
    %v2861 = vpop.f32.mrf.mxu0
    %v2862 = vpop.f32.mrf.mxu0
    %v2863 = vadd.f32 %v2795, %v2862
    %v2864 = vpop.f32.mrf.mxu0
    %2865 = vdwg.mxu0
    %v2866 = vadd.f32 %v2651, %v2860
    %v2867 = vadd.f32 %v2652, %v2863
    %2868 = vst.msk [vmem:[#allocation17] sm:$0xff] %vm211, %v2866
    %2869 = vst.msk [vmem:[#allocation17 + $0x8] sm:$0xff] %vm211, %v2867
    // Predicated region
    $region126: #{tpu_custom_call.1} parent=1 // pred_check
      _
    $region127: #{tpu_custom_call.1} parent=1 // pred_check_branch
      %2871 = sbr.rel (0) target = $region129
    $region128: #{tpu_custom_call.1} parent=1 // pred_region
      %s2873 = ssub.s32 256, 256
      %2874 = vsyncadd [#allocation4], %s2873
      %s2875 = sshll.u32 [#allocation17], 4
      %s2876 = int_to_ptr.vmem [resolvable:$true] %s2875
      %2881 = dma.vmem_to_hbm [thread:$0]  %s2876, 256, %s22, [#allocation4], 128, 128, 8
    $region129: #{tpu_custom_call.1} parent=1 // pred_fallthru
      _
    // Predicated region
    $region130: #{tpu_custom_call.1} parent=1 // pred_check
      _
    $region131: #{tpu_custom_call.1} parent=1 // pred_check_branch
      %2883 = sbr.rel (0) target = $region133
    $region132: #{tpu_custom_call.1} parent=1 // pred_region
      %2884 = dma.done [#allocation4], 256
    $region133: #{tpu_custom_call.1} parent=1 // pred_fallthru
      _
    %2885 = vsyncpa [#allocation3], 1
    %2886 = vsyncpa [#allocation6], 1
    %2887 = vsyncpa [#allocation9], 1
    %2888 = vsyncpa [#allocation12], 1
    %2889 = vsyncpa [#allocation15], 1
    %2890 = vsyncpa [#allocation4], 1

</llo_original>
